<compile_context>
chip_gen: v5e
topology: v5e:2x2
jax: 0.10.0
libtpu: 0.0.40
codegen_flags: <defaults>
</compile_context>

<pallas_src>
import functools
import math

import numpy as np
import jax
import jax.numpy as jnp
from jax.experimental import pallas as pl
from jax.experimental.pallas import tpu as pltpu

# ----------------------------- model config -----------------------------
N_TGT_VOCAB = 8        # number of labels L
D_MODEL     = 32       # == d_word_vec
D_INNER     = 64
N_HEAD      = 4
D_K = D_V   = 8
N_LAYERS    = 2
IMG_C, IMG_H, IMG_W = 3, 16, 16
BATCH       = 2

C1          = 16                    # conv1 output channels
H1, W1      = IMG_H // 2, IMG_W // 2   # conv1 spatial (8, 8)
ENC_H, ENC_W = H1 // 2, W1 // 2        # conv2 spatial (4, 4)
S_ENC       = ENC_H * ENC_W            # encoder tokens per image (16)

_VMEM = pl.BlockSpec(memory_space=pltpu.MemorySpace.VMEM)


# ----------------------------- fused Pallas kernel -----------------------------
def _lamp_fused_kernel(
    # encoder
    patches1_ref, conv1_w_ref, conv1_b_ref, g2_ref, conv2_w_ref, conv2_b_ref,
    # decoder (per-layer tensors stacked on a leading N_LAYERS dim)
    emb_ref,
    sa_wqkv_ref, sa_wo_ref, sa_bo_ref,
    ca_wq_ref, ca_wkv_ref, ca_wo_ref, ca_bo_ref,
    ffn_w1_ref, ffn_b1_ref, ffn_w2_ref, ffn_b2_ref,
    ln_g_ref, ln_b_ref,
    # outputs
    enc_ref, logit_ref,
):
  f32 = jnp.float32
  scale = 1.0 / math.sqrt(D_K)
  hk = N_HEAD * D_K

  def layer_norm(x, g, b):
    mu = jnp.mean(x, axis=-1, keepdims=True)
    var = jnp.mean((x - mu) ** 2, axis=-1, keepdims=True)
    return (x - mu) * jax.lax.rsqrt(var + 1e-5) * g + b

  def attend(q_all, k_all, v_all, lq, lk, wo, bo):
    # q_all: (B*lq, H*dk), k_all/v_all: (B*lk, H*dk) -- heads live on the lane
    # axis; the concat-of-heads + output projection is folded into a per-head
    # accumulation so no transposes / concatenations are needed.
    out = jnp.zeros((BATCH * lq, D_MODEL), f32)
    for h in range(N_HEAD):
      q = q_all[:, h * D_K:(h + 1) * D_K].reshape(BATCH, lq, D_K)
      k = k_all[:, h * D_K:(h + 1) * D_K].reshape(BATCH, lk, D_K)
      v = v_all[:, h * D_V:(h + 1) * D_V].reshape(BATCH, lk, D_V)
      s = jnp.einsum("bqd,bkd->bqk", q, k,
                     preferred_element_type=f32) * scale
      s = s - jnp.max(s, axis=-1, keepdims=True)
      p = jnp.exp(s)
      p = p / jnp.sum(p, axis=-1, keepdims=True)
      o = jnp.einsum("bqk,bkd->bqd", p, v, preferred_element_type=f32)
      out = out + jnp.dot(o.reshape(BATCH * lq, D_V),
                          wo[h * D_V:(h + 1) * D_V, :],
                          preferred_element_type=f32)
    return out + bo

  # ---------------- encoder: conv1 GEMM (+ReLU) ----------------
  h1 = jnp.dot(patches1_ref[...], conv1_w_ref[...],
               preferred_element_type=f32) + conv1_b_ref[...]
  h1 = jnp.maximum(h1, 0.0)                               # (B*H1*W1, C1)

  # ---------------- encoder: conv2 via in-VMEM gather-matmul im2col ----------------
  conv2_w = conv2_w_ref[...]                              # (9*C1, D_MODEL)
  acc = jnp.zeros((BATCH * S_ENC, D_MODEL), f32)
  for t in range(9):                                      # 3x3 kernel taps
    gathered = jnp.dot(g2_ref[t], h1, preferred_element_type=f32)   # (B*S, C1)
    acc = acc + jnp.dot(gathered, conv2_w[t * C1:(t + 1) * C1, :],
                        preferred_element_type=f32)
  enc = jnp.maximum(acc + conv2_b_ref[...], 0.0)          # (B*S, D_MODEL)
  enc_ref[...] = enc

  # ---------------- decoder ----------------
  emb = emb_ref[...]                                      # (L, D_MODEL)
  x = jnp.concatenate([emb] * BATCH, axis=0)              # (B*L, D_MODEL)

  for l in range(N_LAYERS):
    ln_g = ln_g_ref[l]                                    # (3, D_MODEL)
    ln_b = ln_b_ref[l]

    # --- label self-attention (fused QKV GEMM) ---
    qkv = jnp.dot(x, sa_wqkv_ref[l], preferred_element_type=f32)   # (B*L, 3*H*dk)
    sa = attend(qkv[:, 0 * hk:1 * hk], qkv[:, 1 * hk:2 * hk],
                qkv[:, 2 * hk:3 * hk],
                N_TGT_VOCAB, N_TGT_VOCAB, sa_wo_ref[l], sa_bo_ref[l])
    x = layer_norm(sa + x, ln_g[0:1, :], ln_b[0:1, :])

    # --- cross-attention over encoder output (fused KV GEMM) ---
    q_all = jnp.dot(x, ca_wq_ref[l], preferred_element_type=f32)   # (B*L, H*dk)
    kv_all = jnp.dot(enc, ca_wkv_ref[l], preferred_element_type=f32)  # (B*S, 2*H*dk)
    ca = attend(q_all, kv_all[:, 0 * hk:1 * hk], kv_all[:, 1 * hk:2 * hk],
                N_TGT_VOCAB, S_ENC, ca_wo_ref[l], ca_bo_ref[l])
    x = layer_norm(ca + x, ln_g[1:2, :], ln_b[1:2, :])

    # --- position-wise FFN ---
    hdn = jnp.maximum(
        jnp.dot(x, ffn_w1_ref[l], preferred_element_type=f32) + ffn_b1_ref[l],
        0.0)
    ffn = jnp.dot(hdn, ffn_w2_ref[l],
                  preferred_element_type=f32) + ffn_b2_ref[l]
    x = layer_norm(ffn + x, ln_g[2:3, :], ln_b[2:3, :])

  # --- shared-weight projection fused with torch.diagonal(., 0, 1, 2) ---
  logits = jnp.sum(x.reshape(BATCH, N_TGT_VOCAB, D_MODEL) * emb[None, :, :],
                   axis=-1)                               # (B, L)
  logit_ref[...] = logits


def lamp_pallas(patches1, g2, p):
  """Single pallas_call for the whole LAMP forward."""
  out_shape = (
      jax.ShapeDtypeStruct((BATCH * S_ENC, D_MODEL), jnp.float32),
      jax.ShapeDtypeStruct((BATCH, N_TGT_VOCAB), jnp.float32),
  )
  enc_flat, seq_logit = pl.pallas_call(
      _lamp_fused_kernel,
      out_shape=out_shape,
      in_specs=[_VMEM] * 20,
      out_specs=(_VMEM, _VMEM),
  )(patches1, p["conv1_w"], p["conv1_b"], g2, p["conv2_w"], p["conv2_b"],
    p["emb"],
    p["sa_wqkv"], p["sa_wo"], p["sa_bo"],
    p["ca_wq"], p["ca_wkv"], p["ca_wo"], p["ca_bo"],
    p["ffn_w1"], p["ffn_b1"], p["ffn_w2"], p["ffn_b2"],
    p["ln_g"], p["ln_b"])
  return enc_flat, seq_logit


# ----------------------------- glue: im2col (input only, XLA under jit) --------
def _im2col(x_nhwc, k, stride, pad):
  """x: (B, H, W, C) -> patches (B*Ho*Wo, k*k*C)."""
  x_p = jnp.pad(x_nhwc, ((0, 0), (pad, pad), (pad, pad), (0, 0)))
  b, hp, wp, _ = x_p.shape
  ho = (hp - k) // stride + 1
  wo = (wp - k) // stride + 1
  pieces = []
  for i in range(k):
    for j in range(k):
      pieces.append(
          x_p[:, i:i + stride * ho:stride, j:j + stride * wo:stride, :])
  patches = jnp.concatenate(pieces, axis=-1)              # (B, Ho, Wo, k*k*C)
  return patches.reshape(b * ho * wo, -1)


def _build_conv2_gather(batch, h_in, w_in, k=3, stride=2, pad=1):
  """Precomputed 0/1 gather matrices so the conv2 im2col can run in-VMEM as a
  matmul on the conv1 output (rows of h1)."""
  ho = (h_in + 2 * pad - k) // stride + 1
  wo = (w_in + 2 * pad - k) // stride + 1
  n_out = batch * ho * wo
  n_in = batch * h_in * w_in
  g = np.zeros((k * k, n_out, n_in), np.float32)
  for b in range(batch):
    for oy in range(ho):
      for ox in range(wo):
        p = (b * ho + oy) * wo + ox
        for i in range(k):
          for j in range(k):
            iy = oy * stride - pad + i
            ix = ox * stride - pad + j
            if 0 <= iy < h_in and 0 <= ix < w_in:
              r = (b * h_in + iy) * w_in + ix
              g[i * k + j, p, r] = 1.0
  return jnp.asarray(g)


# ----------------------------- parameter init -----------------------------
def _xavier(key, shape):
  fan_in, fan_out = shape[0], shape[-1]
  std = math.sqrt(2.0 / (fan_in + fan_out))
  return (jax.random.normal(key, shape, jnp.float32) * std).astype(jnp.float32)


def init_params(key):
  keys = jax.random.split(key, 4)
  params = {
      # encoder (reconstructed RESNET-style conv stem)
      "conv1_w": _xavier(keys[0], (3 * 3 * IMG_C, C1)),
      "conv1_b": jnp.zeros((1, C1), jnp.float32),
      "conv2_w": _xavier(keys[1], (3 * 3 * C1, D_MODEL)),
      "conv2_b": jnp.zeros((1, D_MODEL), jnp.float32),
      # shared target-label embedding == tgt_word_proj weight
      "emb": _xavier(keys[2], (N_TGT_VOCAB, D_MODEL)),
  }
  sa_wqkv, sa_wo, sa_bo = [], [], []
  ca_wq, ca_wkv, ca_wo, ca_bo = [], [], [], []
  ffn_w1, ffn_b1, ffn_w2, ffn_b2 = [], [], [], []
  ln_g, ln_b = [], []
  for lk in jax.random.split(keys[3], N_LAYERS):
    sk = jax.random.split(lk, 10)
    sa_wqkv.append(jnp.concatenate(
        [_xavier(sk[0], (D_MODEL, N_HEAD * D_K)),
         _xavier(sk[1], (D_MODEL, N_HEAD * D_K)),
         _xavier(sk[2], (D_MODEL, N_HEAD * D_V))], axis=-1))   # (D, 3*H*dk)
    sa_wo.append(_xavier(sk[3], (N_HEAD * D_V, D_MODEL)))
    sa_bo.append(jnp.zeros((1, D_MODEL), jnp.float32))
    ca_wq.append(_xavier(sk[4], (D_MODEL, N_HEAD * D_K)))
    ca_wkv.append(jnp.concatenate(
        [_xavier(sk[5], (D_MODEL, N_HEAD * D_K)),
         _xavier(sk[6], (D_MODEL, N_HEAD * D_V))], axis=-1))   # (D, 2*H*dk)
    ca_wo.append(_xavier(sk[7], (N_HEAD * D_V, D_MODEL)))
    ca_bo.append(jnp.zeros((1, D_MODEL), jnp.float32))
    ffn_w1.append(_xavier(sk[8], (D_MODEL, D_INNER)))
    ffn_b1.append(jnp.zeros((1, D_INNER), jnp.float32))
    ffn_w2.append(_xavier(sk[9], (D_INNER, D_MODEL)))
    ffn_b2.append(jnp.zeros((1, D_MODEL), jnp.float32))
    ln_g.append(jnp.ones((3, D_MODEL), jnp.float32))   # rows: ln1, ln2, ln3
    ln_b.append(jnp.zeros((3, D_MODEL), jnp.float32))
  params.update({
      "sa_wqkv": jnp.stack(sa_wqkv), "sa_wo": jnp.stack(sa_wo),
      "sa_bo": jnp.stack(sa_bo),
      "ca_wq": jnp.stack(ca_wq), "ca_wkv": jnp.stack(ca_wkv),
      "ca_wo": jnp.stack(ca_wo), "ca_bo": jnp.stack(ca_bo),
      "ffn_w1": jnp.stack(ffn_w1), "ffn_b1": jnp.stack(ffn_b1),
      "ffn_w2": jnp.stack(ffn_w2), "ffn_b2": jnp.stack(ffn_b2),
      "ln_g": jnp.stack(ln_g), "ln_b": jnp.stack(ln_b),
  })
  return params


# ----------------------------- model forward -----------------------------
@jax.jit
def lamp_forward(src, params, g2):
  """Returns (seq_logit.view(-1, n_tgt_vocab), enc_output, None)."""
  # layout: NCHW input -> NHWC, then im2col patches for conv1 (XLA glue).
  x = jnp.transpose(src, (0, 2, 3, 1))
  patches1 = _im2col(x, 3, 2, 1)                          # (B*H1*W1, 27)
  enc_flat, seq_logit = lamp_pallas(patches1, g2, params)
  enc_output = enc_flat.reshape(BATCH, S_ENC, D_MODEL)    # (B, S, d_model)
  return seq_logit.reshape(-1, N_TGT_VOCAB), enc_output, None


# ----------------------------- main -----------------------------
if __name__ == "__main__":
  key = jax.random.PRNGKey(0)
  k_inp, k_par = jax.random.split(key)
  src = jax.random.normal(k_inp, (BATCH, IMG_C, IMG_H, IMG_W), jnp.float32)
  params = init_params(k_par)
  g2 = _build_conv2_gather(BATCH, H1, W1)                 # (9, B*S, B*H1*W1)

  seq_logit, enc_output, _ = lamp_forward(src, params, g2)
  jax.block_until_ready((seq_logit, enc_output))

  assert seq_logit.shape == (BATCH, N_TGT_VOCAB)
  assert enc_output.shape == (BATCH, S_ENC, D_MODEL)
  assert bool(jnp.all(jnp.isfinite(seq_logit)))
  assert bool(jnp.all(jnp.isfinite(enc_output)))
  print("KERNEL_OK")
</pallas_src>

<mosaic_0001>
module attributes {stable_mosaic.version = 11 : i64} {
  func.func @_lamp_fused_kernel(%arg0: memref<128x27xf32, #tpu.memory_space<vmem>>, %arg1: memref<27x16xf32, #tpu.memory_space<vmem>>, %arg2: memref<1x16xf32, #tpu.memory_space<vmem>>, %arg3: memref<9x32x128xf32, #tpu.memory_space<vmem>>, %arg4: memref<144x32xf32, #tpu.memory_space<vmem>>, %arg5: memref<1x32xf32, #tpu.memory_space<vmem>>, %arg6: memref<8x32xf32, #tpu.memory_space<vmem>>, %arg7: memref<2x32x96xf32, #tpu.memory_space<vmem>>, %arg8: memref<2x32x32xf32, #tpu.memory_space<vmem>>, %arg9: memref<2x1x32xf32, #tpu.memory_space<vmem>>, %arg10: memref<2x32x32xf32, #tpu.memory_space<vmem>>, %arg11: memref<2x32x64xf32, #tpu.memory_space<vmem>>, %arg12: memref<2x32x32xf32, #tpu.memory_space<vmem>>, %arg13: memref<2x1x32xf32, #tpu.memory_space<vmem>>, %arg14: memref<2x32x64xf32, #tpu.memory_space<vmem>>, %arg15: memref<2x1x64xf32, #tpu.memory_space<vmem>>, %arg16: memref<2x64x32xf32, #tpu.memory_space<vmem>>, %arg17: memref<2x1x32xf32, #tpu.memory_space<vmem>>, %arg18: memref<2x3x32xf32, #tpu.memory_space<vmem>>, %arg19: memref<2x3x32xf32, #tpu.memory_space<vmem>>, %arg20: memref<32x32xf32, #tpu.memory_space<vmem>>, %arg21: memref<2x8xf32, #tpu.memory_space<vmem>>) attributes {dimension_semantics = [], scalar_prefetch = 0 : i64, scratch_operands = 0 : i64, tpu.core_type = #tpu.core_type<tc>} {
    %c0 = arith.constant 0 : index
    %c0_0 = arith.constant 0 : index
    %0 = vector.load %arg0[%c0, %c0_0] : memref<128x27xf32, #tpu.memory_space<vmem>>, vector<128x27xf32>
    %c0_1 = arith.constant 0 : index
    %c0_2 = arith.constant 0 : index
    %1 = vector.load %arg1[%c0_1, %c0_2] : memref<27x16xf32, #tpu.memory_space<vmem>>, vector<27x16xf32>
    %cst = arith.constant dense<0.000000e+00> : vector<128x16xf32>
    %2 = tpu.matmul %0, %1, %cst {dimension_numbers = #tpu.dot_dimension_numbers<[1], [0], [0], [1], [0, 0, 1, 1], [], []>} : vector<128x27xf32>, vector<27x16xf32>, vector<128x16xf32> -> vector<128x16xf32>
    %c0_3 = arith.constant 0 : index
    %c0_4 = arith.constant 0 : index
    %3 = vector.load %arg2[%c0_3, %c0_4] : memref<1x16xf32, #tpu.memory_space<vmem>>, vector<1x16xf32>
    %4 = vector.broadcast %3 : vector<1x16xf32> to vector<128x16xf32>
    %5 = arith.addf %2, %4 : vector<128x16xf32>
    %cst_5 = arith.constant 0.000000e+00 : f32
    %6 = vector.broadcast %cst_5 : f32 to vector<128x16xf32>
    %7 = arith.maximumf %5, %6 : vector<128x16xf32>
    %c0_6 = arith.constant 0 : index
    %c0_7 = arith.constant 0 : index
    %8 = vector.load %arg4[%c0_6, %c0_7] : memref<144x32xf32, #tpu.memory_space<vmem>>, vector<144x32xf32>
    %cst_8 = arith.constant 0.000000e+00 : f32
    %9 = vector.broadcast %cst_8 : f32 to vector<32x32xf32>
    %c0_9 = arith.constant 0 : index
    %c0_10 = arith.constant 0 : index
    %c0_11 = arith.constant 0 : index
    %10 = vector.load %arg3[%c0_9, %c0_10, %c0_11] : memref<9x32x128xf32, #tpu.memory_space<vmem>>, vector<1x32x128xf32>
    %11 = vector.shape_cast %10 : vector<1x32x128xf32> to vector<32x128xf32>
    %cst_12 = arith.constant dense<0.000000e+00> : vector<32x16xf32>
    %12 = tpu.matmul %11, %7, %cst_12 {dimension_numbers = #tpu.dot_dimension_numbers<[1], [0], [0], [1], [0, 0, 1, 1], [], []>} : vector<32x128xf32>, vector<128x16xf32>, vector<32x16xf32> -> vector<32x16xf32>
    %13 = vector.extract_strided_slice %8 {offsets = [0, 0], sizes = [16, 32], strides = [1, 1]} : vector<144x32xf32> to vector<16x32xf32>
    %cst_13 = arith.constant dense<0.000000e+00> : vector<32x32xf32>
    %14 = tpu.matmul %12, %13, %cst_13 {dimension_numbers = #tpu.dot_dimension_numbers<[1], [0], [0], [1], [0, 0, 1, 1], [], []>} : vector<32x16xf32>, vector<16x32xf32>, vector<32x32xf32> -> vector<32x32xf32>
    %15 = arith.addf %9, %14 : vector<32x32xf32>
    %c1 = arith.constant 1 : index
    %c0_14 = arith.constant 0 : index
    %c0_15 = arith.constant 0 : index
    %16 = vector.load %arg3[%c1, %c0_14, %c0_15] : memref<9x32x128xf32, #tpu.memory_space<vmem>>, vector<1x32x128xf32>
    %17 = vector.shape_cast %16 : vector<1x32x128xf32> to vector<32x128xf32>
    %cst_16 = arith.constant dense<0.000000e+00> : vector<32x16xf32>
    %18 = tpu.matmul %17, %7, %cst_16 {dimension_numbers = #tpu.dot_dimension_numbers<[1], [0], [0], [1], [0, 0, 1, 1], [], []>} : vector<32x128xf32>, vector<128x16xf32>, vector<32x16xf32> -> vector<32x16xf32>
    %19 = vector.extract_strided_slice %8 {offsets = [16, 0], sizes = [16, 32], strides = [1, 1]} : vector<144x32xf32> to vector<16x32xf32>
    %cst_17 = arith.constant dense<0.000000e+00> : vector<32x32xf32>
    %20 = tpu.matmul %18, %19, %cst_17 {dimension_numbers = #tpu.dot_dimension_numbers<[1], [0], [0], [1], [0, 0, 1, 1], [], []>} : vector<32x16xf32>, vector<16x32xf32>, vector<32x32xf32> -> vector<32x32xf32>
    %21 = arith.addf %15, %20 : vector<32x32xf32>
    %c2 = arith.constant 2 : index
    %c0_18 = arith.constant 0 : index
    %c0_19 = arith.constant 0 : index
    %22 = vector.load %arg3[%c2, %c0_18, %c0_19] : memref<9x32x128xf32, #tpu.memory_space<vmem>>, vector<1x32x128xf32>
    %23 = vector.shape_cast %22 : vector<1x32x128xf32> to vector<32x128xf32>
    %cst_20 = arith.constant dense<0.000000e+00> : vector<32x16xf32>
    %24 = tpu.matmul %23, %7, %cst_20 {dimension_numbers = #tpu.dot_dimension_numbers<[1], [0], [0], [1], [0, 0, 1, 1], [], []>} : vector<32x128xf32>, vector<128x16xf32>, vector<32x16xf32> -> vector<32x16xf32>
    %25 = vector.extract_strided_slice %8 {offsets = [32, 0], sizes = [16, 32], strides = [1, 1]} : vector<144x32xf32> to vector<16x32xf32>
    %cst_21 = arith.constant dense<0.000000e+00> : vector<32x32xf32>
    %26 = tpu.matmul %24, %25, %cst_21 {dimension_numbers = #tpu.dot_dimension_numbers<[1], [0], [0], [1], [0, 0, 1, 1], [], []>} : vector<32x16xf32>, vector<16x32xf32>, vector<32x32xf32> -> vector<32x32xf32>
    %27 = arith.addf %21, %26 : vector<32x32xf32>
    %c3 = arith.constant 3 : index
    %c0_22 = arith.constant 0 : index
    %c0_23 = arith.constant 0 : index
    %28 = vector.load %arg3[%c3, %c0_22, %c0_23] : memref<9x32x128xf32, #tpu.memory_space<vmem>>, vector<1x32x128xf32>
    %29 = vector.shape_cast %28 : vector<1x32x128xf32> to vector<32x128xf32>
    %cst_24 = arith.constant dense<0.000000e+00> : vector<32x16xf32>
    %30 = tpu.matmul %29, %7, %cst_24 {dimension_numbers = #tpu.dot_dimension_numbers<[1], [0], [0], [1], [0, 0, 1, 1], [], []>} : vector<32x128xf32>, vector<128x16xf32>, vector<32x16xf32> -> vector<32x16xf32>
    %31 = vector.extract_strided_slice %8 {offsets = [48, 0], sizes = [16, 32], strides = [1, 1]} : vector<144x32xf32> to vector<16x32xf32>
    %cst_25 = arith.constant dense<0.000000e+00> : vector<32x32xf32>
    %32 = tpu.matmul %30, %31, %cst_25 {dimension_numbers = #tpu.dot_dimension_numbers<[1], [0], [0], [1], [0, 0, 1, 1], [], []>} : vector<32x16xf32>, vector<16x32xf32>, vector<32x32xf32> -> vector<32x32xf32>
    %33 = arith.addf %27, %32 : vector<32x32xf32>
    %c4 = arith.constant 4 : index
    %c0_26 = arith.constant 0 : index
    %c0_27 = arith.constant 0 : index
    %34 = vector.load %arg3[%c4, %c0_26, %c0_27] : memref<9x32x128xf32, #tpu.memory_space<vmem>>, vector<1x32x128xf32>
    %35 = vector.shape_cast %34 : vector<1x32x128xf32> to vector<32x128xf32>
    %cst_28 = arith.constant dense<0.000000e+00> : vector<32x16xf32>
    %36 = tpu.matmul %35, %7, %cst_28 {dimension_numbers = #tpu.dot_dimension_numbers<[1], [0], [0], [1], [0, 0, 1, 1], [], []>} : vector<32x128xf32>, vector<128x16xf32>, vector<32x16xf32> -> vector<32x16xf32>
    %37 = vector.extract_strided_slice %8 {offsets = [64, 0], sizes = [16, 32], strides = [1, 1]} : vector<144x32xf32> to vector<16x32xf32>
    %cst_29 = arith.constant dense<0.000000e+00> : vector<32x32xf32>
    %38 = tpu.matmul %36, %37, %cst_29 {dimension_numbers = #tpu.dot_dimension_numbers<[1], [0], [0], [1], [0, 0, 1, 1], [], []>} : vector<32x16xf32>, vector<16x32xf32>, vector<32x32xf32> -> vector<32x32xf32>
    %39 = arith.addf %33, %38 : vector<32x32xf32>
    %c5 = arith.constant 5 : index
    %c0_30 = arith.constant 0 : index
    %c0_31 = arith.constant 0 : index
    %40 = vector.load %arg3[%c5, %c0_30, %c0_31] : memref<9x32x128xf32, #tpu.memory_space<vmem>>, vector<1x32x128xf32>
    %41 = vector.shape_cast %40 : vector<1x32x128xf32> to vector<32x128xf32>
    %cst_32 = arith.constant dense<0.000000e+00> : vector<32x16xf32>
    %42 = tpu.matmul %41, %7, %cst_32 {dimension_numbers = #tpu.dot_dimension_numbers<[1], [0], [0], [1], [0, 0, 1, 1], [], []>} : vector<32x128xf32>, vector<128x16xf32>, vector<32x16xf32> -> vector<32x16xf32>
    %43 = vector.extract_strided_slice %8 {offsets = [80, 0], sizes = [16, 32], strides = [1, 1]} : vector<144x32xf32> to vector<16x32xf32>
    %cst_33 = arith.constant dense<0.000000e+00> : vector<32x32xf32>
    %44 = tpu.matmul %42, %43, %cst_33 {dimension_numbers = #tpu.dot_dimension_numbers<[1], [0], [0], [1], [0, 0, 1, 1], [], []>} : vector<32x16xf32>, vector<16x32xf32>, vector<32x32xf32> -> vector<32x32xf32>
    %45 = arith.addf %39, %44 : vector<32x32xf32>
    %c6 = arith.constant 6 : index
    %c0_34 = arith.constant 0 : index
    %c0_35 = arith.constant 0 : index
    %46 = vector.load %arg3[%c6, %c0_34, %c0_35] : memref<9x32x128xf32, #tpu.memory_space<vmem>>, vector<1x32x128xf32>
    %47 = vector.shape_cast %46 : vector<1x32x128xf32> to vector<32x128xf32>
    %cst_36 = arith.constant dense<0.000000e+00> : vector<32x16xf32>
    %48 = tpu.matmul %47, %7, %cst_36 {dimension_numbers = #tpu.dot_dimension_numbers<[1], [0], [0], [1], [0, 0, 1, 1], [], []>} : vector<32x128xf32>, vector<128x16xf32>, vector<32x16xf32> -> vector<32x16xf32>
    %49 = vector.extract_strided_slice %8 {offsets = [96, 0], sizes = [16, 32], strides = [1, 1]} : vector<144x32xf32> to vector<16x32xf32>
    %cst_37 = arith.constant dense<0.000000e+00> : vector<32x32xf32>
    %50 = tpu.matmul %48, %49, %cst_37 {dimension_numbers = #tpu.dot_dimension_numbers<[1], [0], [0], [1], [0, 0, 1, 1], [], []>} : vector<32x16xf32>, vector<16x32xf32>, vector<32x32xf32> -> vector<32x32xf32>
    %51 = arith.addf %45, %50 : vector<32x32xf32>
    %c7 = arith.constant 7 : index
    %c0_38 = arith.constant 0 : index
    %c0_39 = arith.constant 0 : index
    %52 = vector.load %arg3[%c7, %c0_38, %c0_39] : memref<9x32x128xf32, #tpu.memory_space<vmem>>, vector<1x32x128xf32>
    %53 = vector.shape_cast %52 : vector<1x32x128xf32> to vector<32x128xf32>
    %cst_40 = arith.constant dense<0.000000e+00> : vector<32x16xf32>
    %54 = tpu.matmul %53, %7, %cst_40 {dimension_numbers = #tpu.dot_dimension_numbers<[1], [0], [0], [1], [0, 0, 1, 1], [], []>} : vector<32x128xf32>, vector<128x16xf32>, vector<32x16xf32> -> vector<32x16xf32>
    %55 = vector.extract_strided_slice %8 {offsets = [112, 0], sizes = [16, 32], strides = [1, 1]} : vector<144x32xf32> to vector<16x32xf32>
    %cst_41 = arith.constant dense<0.000000e+00> : vector<32x32xf32>
    %56 = tpu.matmul %54, %55, %cst_41 {dimension_numbers = #tpu.dot_dimension_numbers<[1], [0], [0], [1], [0, 0, 1, 1], [], []>} : vector<32x16xf32>, vector<16x32xf32>, vector<32x32xf32> -> vector<32x32xf32>
    %57 = arith.addf %51, %56 : vector<32x32xf32>
    %c8 = arith.constant 8 : index
    %c0_42 = arith.constant 0 : index
    %c0_43 = arith.constant 0 : index
    %58 = vector.load %arg3[%c8, %c0_42, %c0_43] : memref<9x32x128xf32, #tpu.memory_space<vmem>>, vector<1x32x128xf32>
    %59 = vector.shape_cast %58 : vector<1x32x128xf32> to vector<32x128xf32>
    %cst_44 = arith.constant dense<0.000000e+00> : vector<32x16xf32>
    %60 = tpu.matmul %59, %7, %cst_44 {dimension_numbers = #tpu.dot_dimension_numbers<[1], [0], [0], [1], [0, 0, 1, 1], [], []>} : vector<32x128xf32>, vector<128x16xf32>, vector<32x16xf32> -> vector<32x16xf32>
    %61 = vector.extract_strided_slice %8 {offsets = [128, 0], sizes = [16, 32], strides = [1, 1]} : vector<144x32xf32> to vector<16x32xf32>
    %cst_45 = arith.constant dense<0.000000e+00> : vector<32x32xf32>
    %62 = tpu.matmul %60, %61, %cst_45 {dimension_numbers = #tpu.dot_dimension_numbers<[1], [0], [0], [1], [0, 0, 1, 1], [], []>} : vector<32x16xf32>, vector<16x32xf32>, vector<32x32xf32> -> vector<32x32xf32>
    %63 = arith.addf %57, %62 : vector<32x32xf32>
    %c0_46 = arith.constant 0 : index
    %c0_47 = arith.constant 0 : index
    %64 = vector.load %arg5[%c0_46, %c0_47] : memref<1x32xf32, #tpu.memory_space<vmem>>, vector<1x32xf32>
    %65 = vector.broadcast %64 : vector<1x32xf32> to vector<32x32xf32>
    %66 = arith.addf %63, %65 : vector<32x32xf32>
    %cst_48 = arith.constant 0.000000e+00 : f32
    %67 = vector.broadcast %cst_48 : f32 to vector<32x32xf32>
    %68 = arith.maximumf %66, %67 : vector<32x32xf32>
    %c0_49 = arith.constant 0 : index
    %c0_50 = arith.constant 0 : index
    %69 = vector.load %arg20[%c0_49, %c0_50] : memref<32x32xf32, #tpu.memory_space<vmem>>, vector<32x32xf32>
    tpu.vector_store %arg20[%c0_49, %c0_50], %68 {strides = array<i32>} : memref<32x32xf32, #tpu.memory_space<vmem>>, vector<32x32xf32>,
    %c0_51 = arith.constant 0 : index
    %c0_52 = arith.constant 0 : index
    %70 = vector.load %arg6[%c0_51, %c0_52] : memref<8x32xf32, #tpu.memory_space<vmem>>, vector<8x32xf32>
    %71 = tpu.concatenate %70, %70 in 0 : vector<8x32xf32>, vector<8x32xf32> -> vector<16x32xf32>
    %c0_53 = arith.constant 0 : index
    %c0_54 = arith.constant 0 : index
    %c0_55 = arith.constant 0 : index
    %72 = vector.load %arg18[%c0_53, %c0_54, %c0_55] : memref<2x3x32xf32, #tpu.memory_space<vmem>>, vector<1x3x32xf32>
    %73 = vector.shape_cast %72 : vector<1x3x32xf32> to vector<3x32xf32>
    %c0_56 = arith.constant 0 : index
    %c0_57 = arith.constant 0 : index
    %c0_58 = arith.constant 0 : index
    %74 = vector.load %arg19[%c0_56, %c0_57, %c0_58] : memref<2x3x32xf32, #tpu.memory_space<vmem>>, vector<1x3x32xf32>
    %75 = vector.shape_cast %74 : vector<1x3x32xf32> to vector<3x32xf32>
    %c0_59 = arith.constant 0 : index
    %c0_60 = arith.constant 0 : index
    %c0_61 = arith.constant 0 : index
    %76 = vector.load %arg7[%c0_59, %c0_60, %c0_61] : memref<2x32x96xf32, #tpu.memory_space<vmem>>, vector<1x32x96xf32>
    %77 = vector.shape_cast %76 : vector<1x32x96xf32> to vector<32x96xf32>
    %cst_62 = arith.constant dense<0.000000e+00> : vector<16x96xf32>
    %78 = tpu.matmul %71, %77, %cst_62 {dimension_numbers = #tpu.dot_dimension_numbers<[1], [0], [0], [1], [0, 0, 1, 1], [], []>} : vector<16x32xf32>, vector<32x96xf32>, vector<16x96xf32> -> vector<16x96xf32>
    %79 = vector.extract_strided_slice %78 {offsets = [0, 0], sizes = [16, 32], strides = [1, 1]} : vector<16x96xf32> to vector<16x32xf32>
    %80 = vector.extract_strided_slice %78 {offsets = [0, 32], sizes = [16, 32], strides = [1, 1]} : vector<16x96xf32> to vector<16x32xf32>
    %81 = vector.extract_strided_slice %78 {offsets = [0, 64], sizes = [16, 32], strides = [1, 1]} : vector<16x96xf32> to vector<16x32xf32>
    %c0_63 = arith.constant 0 : index
    %c0_64 = arith.constant 0 : index
    %c0_65 = arith.constant 0 : index
    %82 = vector.load %arg8[%c0_63, %c0_64, %c0_65] : memref<2x32x32xf32, #tpu.memory_space<vmem>>, vector<1x32x32xf32>
    %83 = vector.shape_cast %82 : vector<1x32x32xf32> to vector<32x32xf32>
    %c0_66 = arith.constant 0 : index
    %c0_67 = arith.constant 0 : index
    %c0_68 = arith.constant 0 : index
    %84 = vector.load %arg9[%c0_66, %c0_67, %c0_68] : memref<2x1x32xf32, #tpu.memory_space<vmem>>, vector<1x1x32xf32>
    %85 = vector.shape_cast %84 : vector<1x1x32xf32> to vector<1x32xf32>
    %cst_69 = arith.constant 0.000000e+00 : f32
    %86 = vector.broadcast %cst_69 : f32 to vector<16x32xf32>
    %87 = vector.extract_strided_slice %79 {offsets = [0, 0], sizes = [16, 8], strides = [1, 1]} : vector<16x32xf32> to vector<16x8xf32>
    %88 = vector.shape_cast %87 : vector<16x8xf32> to vector<2x8x8xf32>
    %89 = vector.extract_strided_slice %80 {offsets = [0, 0], sizes = [16, 8], strides = [1, 1]} : vector<16x32xf32> to vector<16x8xf32>
    %90 = vector.shape_cast %89 : vector<16x8xf32> to vector<2x8x8xf32>
    %91 = vector.extract_strided_slice %81 {offsets = [0, 0], sizes = [16, 8], strides = [1, 1]} : vector<16x32xf32> to vector<16x8xf32>
    %92 = vector.shape_cast %91 : vector<16x8xf32> to vector<2x8x8xf32>
    "tpu.trace_start"() <{level = 10 : i32, message = "bqd,bkd->bqk"}> : () -> ()
    %cst_70 = arith.constant dense<0.000000e+00> : vector<2x8x8xf32>
    %93 = tpu.matmul %88, %90, %cst_70 {dimension_numbers = #tpu.dot_dimension_numbers<[2], [2], [1], [1], [0, 0, 0, 1, 1, 1], [0], [0]>} : vector<2x8x8xf32>, vector<2x8x8xf32>, vector<2x8x8xf32> -> vector<2x8x8xf32>
    "tpu.trace_stop"() : () -> ()
    %cst_71 = arith.constant 0.353553385 : f32
    %94 = vector.broadcast %cst_71 : f32 to vector<2x8x8xf32>
    %95 = arith.mulf %93, %94 : vector<2x8x8xf32>
    %cst_72 = arith.constant dense<0xFF800000> : vector<2x8xf32>
    %96 = vector.multi_reduction <maximumf>, %95, %cst_72 [2] : vector<2x8x8xf32> to vector<2x8xf32>
    %97 = vector.shape_cast %96 : vector<2x8xf32> to vector<2x8x1xf32>
    %98 = vector.broadcast %97 : vector<2x8x1xf32> to vector<2x8x8xf32>
    %99 = arith.subf %95, %98 : vector<2x8x8xf32>
    %100 = math.exp %99 : vector<2x8x8xf32>
    %cst_73 = arith.constant dense<0.000000e+00> : vector<2x8xf32>
    %101 = vector.multi_reduction <add>, %100, %cst_73 [2] : vector<2x8x8xf32> to vector<2x8xf32>
    %102 = vector.shape_cast %101 : vector<2x8xf32> to vector<2x8x1xf32>
    %103 = vector.broadcast %102 : vector<2x8x1xf32> to vector<2x8x8xf32>
    %104 = arith.divf %100, %103 : vector<2x8x8xf32>
    "tpu.trace_start"() <{level = 10 : i32, message = "bqk,bkd->bqd"}> : () -> ()
    %cst_74 = arith.constant dense<0.000000e+00> : vector<2x8x8xf32>
    %105 = tpu.matmul %104, %92, %cst_74 {dimension_numbers = #tpu.dot_dimension_numbers<[2], [1], [1], [2], [0, 0, 0, 1, 1, 2], [0], [0]>} : vector<2x8x8xf32>, vector<2x8x8xf32>, vector<2x8x8xf32> -> vector<2x8x8xf32>
    "tpu.trace_stop"() : () -> ()
    %106 = vector.shape_cast %105 : vector<2x8x8xf32> to vector<16x8xf32>
    %107 = vector.extract_strided_slice %83 {offsets = [0, 0], sizes = [8, 32], strides = [1, 1]} : vector<32x32xf32> to vector<8x32xf32>
    %cst_75 = arith.constant dense<0.000000e+00> : vector<16x32xf32>
    %108 = tpu.matmul %106, %107, %cst_75 {dimension_numbers = #tpu.dot_dimension_numbers<[1], [0], [0], [1], [0, 0, 1, 1], [], []>} : vector<16x8xf32>, vector<8x32xf32>, vector<16x32xf32> -> vector<16x32xf32>
    %109 = arith.addf %86, %108 : vector<16x32xf32>
    %110 = vector.extract_strided_slice %79 {offsets = [0, 8], sizes = [16, 8], strides = [1, 1]} : vector<16x32xf32> to vector<16x8xf32>
    %111 = vector.shape_cast %110 : vector<16x8xf32> to vector<2x8x8xf32>
    %112 = vector.extract_strided_slice %80 {offsets = [0, 8], sizes = [16, 8], strides = [1, 1]} : vector<16x32xf32> to vector<16x8xf32>
    %113 = vector.shape_cast %112 : vector<16x8xf32> to vector<2x8x8xf32>
    %114 = vector.extract_strided_slice %81 {offsets = [0, 8], sizes = [16, 8], strides = [1, 1]} : vector<16x32xf32> to vector<16x8xf32>
    %115 = vector.shape_cast %114 : vector<16x8xf32> to vector<2x8x8xf32>
    "tpu.trace_start"() <{level = 10 : i32, message = "bqd,bkd->bqk"}> : () -> ()
    %cst_76 = arith.constant dense<0.000000e+00> : vector<2x8x8xf32>
    %116 = tpu.matmul %111, %113, %cst_76 {dimension_numbers = #tpu.dot_dimension_numbers<[2], [2], [1], [1], [0, 0, 0, 1, 1, 1], [0], [0]>} : vector<2x8x8xf32>, vector<2x8x8xf32>, vector<2x8x8xf32> -> vector<2x8x8xf32>
    "tpu.trace_stop"() : () -> ()
    %cst_77 = arith.constant 0.353553385 : f32
    %117 = vector.broadcast %cst_77 : f32 to vector<2x8x8xf32>
    %118 = arith.mulf %116, %117 : vector<2x8x8xf32>
    %cst_78 = arith.constant dense<0xFF800000> : vector<2x8xf32>
    %119 = vector.multi_reduction <maximumf>, %118, %cst_78 [2] : vector<2x8x8xf32> to vector<2x8xf32>
    %120 = vector.shape_cast %119 : vector<2x8xf32> to vector<2x8x1xf32>
    %121 = vector.broadcast %120 : vector<2x8x1xf32> to vector<2x8x8xf32>
    %122 = arith.subf %118, %121 : vector<2x8x8xf32>
    %123 = math.exp %122 : vector<2x8x8xf32>
    %cst_79 = arith.constant dense<0.000000e+00> : vector<2x8xf32>
    %124 = vector.multi_reduction <add>, %123, %cst_79 [2] : vector<2x8x8xf32> to vector<2x8xf32>
    %125 = vector.shape_cast %124 : vector<2x8xf32> to vector<2x8x1xf32>
    %126 = vector.broadcast %125 : vector<2x8x1xf32> to vector<2x8x8xf32>
    %127 = arith.divf %123, %126 : vector<2x8x8xf32>
    "tpu.trace_start"() <{level = 10 : i32, message = "bqk,bkd->bqd"}> : () -> ()
    %cst_80 = arith.constant dense<0.000000e+00> : vector<2x8x8xf32>
    %128 = tpu.matmul %127, %115, %cst_80 {dimension_numbers = #tpu.dot_dimension_numbers<[2], [1], [1], [2], [0, 0, 0, 1, 1, 2], [0], [0]>} : vector<2x8x8xf32>, vector<2x8x8xf32>, vector<2x8x8xf32> -> vector<2x8x8xf32>
    "tpu.trace_stop"() : () -> ()
    %129 = vector.shape_cast %128 : vector<2x8x8xf32> to vector<16x8xf32>
    %130 = vector.extract_strided_slice %83 {offsets = [8, 0], sizes = [8, 32], strides = [1, 1]} : vector<32x32xf32> to vector<8x32xf32>
    %cst_81 = arith.constant dense<0.000000e+00> : vector<16x32xf32>
    %131 = tpu.matmul %129, %130, %cst_81 {dimension_numbers = #tpu.dot_dimension_numbers<[1], [0], [0], [1], [0, 0, 1, 1], [], []>} : vector<16x8xf32>, vector<8x32xf32>, vector<16x32xf32> -> vector<16x32xf32>
    %132 = arith.addf %109, %131 : vector<16x32xf32>
    %133 = vector.extract_strided_slice %79 {offsets = [0, 16], sizes = [16, 8], strides = [1, 1]} : vector<16x32xf32> to vector<16x8xf32>
    %134 = vector.shape_cast %133 : vector<16x8xf32> to vector<2x8x8xf32>
    %135 = vector.extract_strided_slice %80 {offsets = [0, 16], sizes = [16, 8], strides = [1, 1]} : vector<16x32xf32> to vector<16x8xf32>
    %136 = vector.shape_cast %135 : vector<16x8xf32> to vector<2x8x8xf32>
    %137 = vector.extract_strided_slice %81 {offsets = [0, 16], sizes = [16, 8], strides = [1, 1]} : vector<16x32xf32> to vector<16x8xf32>
    %138 = vector.shape_cast %137 : vector<16x8xf32> to vector<2x8x8xf32>
    "tpu.trace_start"() <{level = 10 : i32, message = "bqd,bkd->bqk"}> : () -> ()
    %cst_82 = arith.constant dense<0.000000e+00> : vector<2x8x8xf32>
    %139 = tpu.matmul %134, %136, %cst_82 {dimension_numbers = #tpu.dot_dimension_numbers<[2], [2], [1], [1], [0, 0, 0, 1, 1, 1], [0], [0]>} : vector<2x8x8xf32>, vector<2x8x8xf32>, vector<2x8x8xf32> -> vector<2x8x8xf32>
    "tpu.trace_stop"() : () -> ()
    %cst_83 = arith.constant 0.353553385 : f32
    %140 = vector.broadcast %cst_83 : f32 to vector<2x8x8xf32>
    %141 = arith.mulf %139, %140 : vector<2x8x8xf32>
    %cst_84 = arith.constant dense<0xFF800000> : vector<2x8xf32>
    %142 = vector.multi_reduction <maximumf>, %141, %cst_84 [2] : vector<2x8x8xf32> to vector<2x8xf32>
    %143 = vector.shape_cast %142 : vector<2x8xf32> to vector<2x8x1xf32>
    %144 = vector.broadcast %143 : vector<2x8x1xf32> to vector<2x8x8xf32>
    %145 = arith.subf %141, %144 : vector<2x8x8xf32>
    %146 = math.exp %145 : vector<2x8x8xf32>
    %cst_85 = arith.constant dense<0.000000e+00> : vector<2x8xf32>
    %147 = vector.multi_reduction <add>, %146, %cst_85 [2] : vector<2x8x8xf32> to vector<2x8xf32>
    %148 = vector.shape_cast %147 : vector<2x8xf32> to vector<2x8x1xf32>
    %149 = vector.broadcast %148 : vector<2x8x1xf32> to vector<2x8x8xf32>
    %150 = arith.divf %146, %149 : vector<2x8x8xf32>
    "tpu.trace_start"() <{level = 10 : i32, message = "bqk,bkd->bqd"}> : () -> ()
    %cst_86 = arith.constant dense<0.000000e+00> : vector<2x8x8xf32>
    %151 = tpu.matmul %150, %138, %cst_86 {dimension_numbers = #tpu.dot_dimension_numbers<[2], [1], [1], [2], [0, 0, 0, 1, 1, 2], [0], [0]>} : vector<2x8x8xf32>, vector<2x8x8xf32>, vector<2x8x8xf32> -> vector<2x8x8xf32>
    "tpu.trace_stop"() : () -> ()
    %152 = vector.shape_cast %151 : vector<2x8x8xf32> to vector<16x8xf32>
    %153 = vector.extract_strided_slice %83 {offsets = [16, 0], sizes = [8, 32], strides = [1, 1]} : vector<32x32xf32> to vector<8x32xf32>
    %cst_87 = arith.constant dense<0.000000e+00> : vector<16x32xf32>
    %154 = tpu.matmul %152, %153, %cst_87 {dimension_numbers = #tpu.dot_dimension_numbers<[1], [0], [0], [1], [0, 0, 1, 1], [], []>} : vector<16x8xf32>, vector<8x32xf32>, vector<16x32xf32> -> vector<16x32xf32>
    %155 = arith.addf %132, %154 : vector<16x32xf32>
    %156 = vector.extract_strided_slice %79 {offsets = [0, 24], sizes = [16, 8], strides = [1, 1]} : vector<16x32xf32> to vector<16x8xf32>
    %157 = vector.shape_cast %156 : vector<16x8xf32> to vector<2x8x8xf32>
    %158 = vector.extract_strided_slice %80 {offsets = [0, 24], sizes = [16, 8], strides = [1, 1]} : vector<16x32xf32> to vector<16x8xf32>
    %159 = vector.shape_cast %158 : vector<16x8xf32> to vector<2x8x8xf32>
    %160 = vector.extract_strided_slice %81 {offsets = [0, 24], sizes = [16, 8], strides = [1, 1]} : vector<16x32xf32> to vector<16x8xf32>
    %161 = vector.shape_cast %160 : vector<16x8xf32> to vector<2x8x8xf32>
    "tpu.trace_start"() <{level = 10 : i32, message = "bqd,bkd->bqk"}> : () -> ()
    %cst_88 = arith.constant dense<0.000000e+00> : vector<2x8x8xf32>
    %162 = tpu.matmul %157, %159, %cst_88 {dimension_numbers = #tpu.dot_dimension_numbers<[2], [2], [1], [1], [0, 0, 0, 1, 1, 1], [0], [0]>} : vector<2x8x8xf32>, vector<2x8x8xf32>, vector<2x8x8xf32> -> vector<2x8x8xf32>
    "tpu.trace_stop"() : () -> ()
    %cst_89 = arith.constant 0.353553385 : f32
    %163 = vector.broadcast %cst_89 : f32 to vector<2x8x8xf32>
    %164 = arith.mulf %162, %163 : vector<2x8x8xf32>
    %cst_90 = arith.constant dense<0xFF800000> : vector<2x8xf32>
    %165 = vector.multi_reduction <maximumf>, %164, %cst_90 [2] : vector<2x8x8xf32> to vector<2x8xf32>
    %166 = vector.shape_cast %165 : vector<2x8xf32> to vector<2x8x1xf32>
    %167 = vector.broadcast %166 : vector<2x8x1xf32> to vector<2x8x8xf32>
    %168 = arith.subf %164, %167 : vector<2x8x8xf32>
    %169 = math.exp %168 : vector<2x8x8xf32>
    %cst_91 = arith.constant dense<0.000000e+00> : vector<2x8xf32>
    %170 = vector.multi_reduction <add>, %169, %cst_91 [2] : vector<2x8x8xf32> to vector<2x8xf32>
    %171 = vector.shape_cast %170 : vector<2x8xf32> to vector<2x8x1xf32>
    %172 = vector.broadcast %171 : vector<2x8x1xf32> to vector<2x8x8xf32>
    %173 = arith.divf %169, %172 : vector<2x8x8xf32>
    "tpu.trace_start"() <{level = 10 : i32, message = "bqk,bkd->bqd"}> : () -> ()
    %cst_92 = arith.constant dense<0.000000e+00> : vector<2x8x8xf32>
    %174 = tpu.matmul %173, %161, %cst_92 {dimension_numbers = #tpu.dot_dimension_numbers<[2], [1], [1], [2], [0, 0, 0, 1, 1, 2], [0], [0]>} : vector<2x8x8xf32>, vector<2x8x8xf32>, vector<2x8x8xf32> -> vector<2x8x8xf32>
    "tpu.trace_stop"() : () -> ()
    %175 = vector.shape_cast %174 : vector<2x8x8xf32> to vector<16x8xf32>
    %176 = vector.extract_strided_slice %83 {offsets = [24, 0], sizes = [8, 32], strides = [1, 1]} : vector<32x32xf32> to vector<8x32xf32>
    %cst_93 = arith.constant dense<0.000000e+00> : vector<16x32xf32>
    %177 = tpu.matmul %175, %176, %cst_93 {dimension_numbers = #tpu.dot_dimension_numbers<[1], [0], [0], [1], [0, 0, 1, 1], [], []>} : vector<16x8xf32>, vector<8x32xf32>, vector<16x32xf32> -> vector<16x32xf32>
    %178 = arith.addf %155, %177 : vector<16x32xf32>
    %179 = vector.broadcast %85 : vector<1x32xf32> to vector<16x32xf32>
    %180 = arith.addf %178, %179 : vector<16x32xf32>
    %181 = arith.addf %180, %71 : vector<16x32xf32>
    %182 = vector.extract_strided_slice %73 {offsets = [0, 0], sizes = [1, 32], strides = [1, 1]} : vector<3x32xf32> to vector<1x32xf32>
    %183 = vector.extract_strided_slice %75 {offsets = [0, 0], sizes = [1, 32], strides = [1, 1]} : vector<3x32xf32> to vector<1x32xf32>
    %cst_94 = arith.constant dense<0.000000e+00> : vector<16xf32>
    %184 = vector.multi_reduction <add>, %181, %cst_94 [1] : vector<16x32xf32> to vector<16xf32>
    %185 = vector.shape_cast %184 : vector<16xf32> to vector<16x1xf32>
    %cst_95 = arith.constant 3.200000e+01 : f32
    %186 = vector.broadcast %cst_95 : f32 to vector<16x1xf32>
    %187 = arith.divf %185, %186 : vector<16x1xf32>
    %188 = vector.broadcast %187 : vector<16x1xf32> to vector<16x32xf32>
    %189 = arith.subf %181, %188 : vector<16x32xf32>
    %190 = arith.mulf %189, %189 : vector<16x32xf32>
    %cst_96 = arith.constant dense<0.000000e+00> : vector<16xf32>
    %191 = vector.multi_reduction <add>, %190, %cst_96 [1] : vector<16x32xf32> to vector<16xf32>
    %192 = vector.shape_cast %191 : vector<16xf32> to vector<16x1xf32>
    %cst_97 = arith.constant 3.200000e+01 : f32
    %193 = vector.broadcast %cst_97 : f32 to vector<16x1xf32>
    %194 = arith.divf %192, %193 : vector<16x1xf32>
    %195 = vector.broadcast %187 : vector<16x1xf32> to vector<16x32xf32>
    %196 = arith.subf %181, %195 : vector<16x32xf32>
    %cst_98 = arith.constant 9.99999974E-6 : f32
    %197 = vector.broadcast %cst_98 : f32 to vector<16x1xf32>
    %198 = arith.addf %194, %197 : vector<16x1xf32>
    %199 = math.rsqrt %198 : vector<16x1xf32>
    %200 = vector.broadcast %199 : vector<16x1xf32> to vector<16x32xf32>
    %201 = arith.mulf %196, %200 : vector<16x32xf32>
    %202 = vector.broadcast %182 : vector<1x32xf32> to vector<16x32xf32>
    %203 = arith.mulf %201, %202 : vector<16x32xf32>
    %204 = vector.broadcast %183 : vector<1x32xf32> to vector<16x32xf32>
    %205 = arith.addf %203, %204 : vector<16x32xf32>
    %c0_99 = arith.constant 0 : index
    %c0_100 = arith.constant 0 : index
    %c0_101 = arith.constant 0 : index
    %206 = vector.load %arg10[%c0_99, %c0_100, %c0_101] : memref<2x32x32xf32, #tpu.memory_space<vmem>>, vector<1x32x32xf32>
    %207 = vector.shape_cast %206 : vector<1x32x32xf32> to vector<32x32xf32>
    %cst_102 = arith.constant dense<0.000000e+00> : vector<16x32xf32>
    %208 = tpu.matmul %205, %207, %cst_102 {dimension_numbers = #tpu.dot_dimension_numbers<[1], [0], [0], [1], [0, 0, 1, 1], [], []>} : vector<16x32xf32>, vector<32x32xf32>, vector<16x32xf32> -> vector<16x32xf32>
    %c0_103 = arith.constant 0 : index
    %c0_104 = arith.constant 0 : index
    %c0_105 = arith.constant 0 : index
    %209 = vector.load %arg11[%c0_103, %c0_104, %c0_105] : memref<2x32x64xf32, #tpu.memory_space<vmem>>, vector<1x32x64xf32>
    %210 = vector.shape_cast %209 : vector<1x32x64xf32> to vector<32x64xf32>
    %cst_106 = arith.constant dense<0.000000e+00> : vector<32x64xf32>
    %211 = tpu.matmul %68, %210, %cst_106 {dimension_numbers = #tpu.dot_dimension_numbers<[1], [0], [0], [1], [0, 0, 1, 1], [], []>} : vector<32x32xf32>, vector<32x64xf32>, vector<32x64xf32> -> vector<32x64xf32>
    %212 = vector.extract_strided_slice %211 {offsets = [0, 0], sizes = [32, 32], strides = [1, 1]} : vector<32x64xf32> to vector<32x32xf32>
    %213 = vector.extract_strided_slice %211 {offsets = [0, 32], sizes = [32, 32], strides = [1, 1]} : vector<32x64xf32> to vector<32x32xf32>
    %c0_107 = arith.constant 0 : index
    %c0_108 = arith.constant 0 : index
    %c0_109 = arith.constant 0 : index
    %214 = vector.load %arg12[%c0_107, %c0_108, %c0_109] : memref<2x32x32xf32, #tpu.memory_space<vmem>>, vector<1x32x32xf32>
    %215 = vector.shape_cast %214 : vector<1x32x32xf32> to vector<32x32xf32>
    %c0_110 = arith.constant 0 : index
    %c0_111 = arith.constant 0 : index
    %c0_112 = arith.constant 0 : index
    %216 = vector.load %arg13[%c0_110, %c0_111, %c0_112] : memref<2x1x32xf32, #tpu.memory_space<vmem>>, vector<1x1x32xf32>
    %217 = vector.shape_cast %216 : vector<1x1x32xf32> to vector<1x32xf32>
    %cst_113 = arith.constant 0.000000e+00 : f32
    %218 = vector.broadcast %cst_113 : f32 to vector<16x32xf32>
    %219 = vector.extract_strided_slice %208 {offsets = [0, 0], sizes = [16, 8], strides = [1, 1]} : vector<16x32xf32> to vector<16x8xf32>
    %220 = vector.shape_cast %219 : vector<16x8xf32> to vector<2x8x8xf32>
    %221 = vector.extract_strided_slice %212 {offsets = [0, 0], sizes = [32, 8], strides = [1, 1]} : vector<32x32xf32> to vector<32x8xf32>
    %222 = vector.shape_cast %221 : vector<32x8xf32> to vector<2x16x8xf32>
    %223 = vector.extract_strided_slice %213 {offsets = [0, 0], sizes = [32, 8], strides = [1, 1]} : vector<32x32xf32> to vector<32x8xf32>
    %224 = vector.shape_cast %223 : vector<32x8xf32> to vector<2x16x8xf32>
    "tpu.trace_start"() <{level = 10 : i32, message = "bqd,bkd->bqk"}> : () -> ()
    %cst_114 = arith.constant dense<0.000000e+00> : vector<2x8x16xf32>
    %225 = tpu.matmul %220, %222, %cst_114 {dimension_numbers = #tpu.dot_dimension_numbers<[2], [2], [1], [1], [0, 0, 0, 1, 1, 1], [0], [0]>} : vector<2x8x8xf32>, vector<2x16x8xf32>, vector<2x8x16xf32> -> vector<2x8x16xf32>
    "tpu.trace_stop"() : () -> ()
    %cst_115 = arith.constant 0.353553385 : f32
    %226 = vector.broadcast %cst_115 : f32 to vector<2x8x16xf32>
    %227 = arith.mulf %225, %226 : vector<2x8x16xf32>
    %cst_116 = arith.constant dense<0xFF800000> : vector<2x8xf32>
    %228 = vector.multi_reduction <maximumf>, %227, %cst_116 [2] : vector<2x8x16xf32> to vector<2x8xf32>
    %229 = vector.shape_cast %228 : vector<2x8xf32> to vector<2x8x1xf32>
    %230 = vector.broadcast %229 : vector<2x8x1xf32> to vector<2x8x16xf32>
    %231 = arith.subf %227, %230 : vector<2x8x16xf32>
    %232 = math.exp %231 : vector<2x8x16xf32>
    %cst_117 = arith.constant dense<0.000000e+00> : vector<2x8xf32>
    %233 = vector.multi_reduction <add>, %232, %cst_117 [2] : vector<2x8x16xf32> to vector<2x8xf32>
    %234 = vector.shape_cast %233 : vector<2x8xf32> to vector<2x8x1xf32>
    %235 = vector.broadcast %234 : vector<2x8x1xf32> to vector<2x8x16xf32>
    %236 = arith.divf %232, %235 : vector<2x8x16xf32>
    "tpu.trace_start"() <{level = 10 : i32, message = "bqk,bkd->bqd"}> : () -> ()
    %cst_118 = arith.constant dense<0.000000e+00> : vector<2x8x8xf32>
    %237 = tpu.matmul %236, %224, %cst_118 {dimension_numbers = #tpu.dot_dimension_numbers<[2], [1], [1], [2], [0, 0, 0, 1, 1, 2], [0], [0]>} : vector<2x8x16xf32>, vector<2x16x8xf32>, vector<2x8x8xf32> -> vector<2x8x8xf32>
    "tpu.trace_stop"() : () -> ()
    %238 = vector.shape_cast %237 : vector<2x8x8xf32> to vector<16x8xf32>
    %239 = vector.extract_strided_slice %215 {offsets = [0, 0], sizes = [8, 32], strides = [1, 1]} : vector<32x32xf32> to vector<8x32xf32>
    %cst_119 = arith.constant dense<0.000000e+00> : vector<16x32xf32>
    %240 = tpu.matmul %238, %239, %cst_119 {dimension_numbers = #tpu.dot_dimension_numbers<[1], [0], [0], [1], [0, 0, 1, 1], [], []>} : vector<16x8xf32>, vector<8x32xf32>, vector<16x32xf32> -> vector<16x32xf32>
    %241 = arith.addf %218, %240 : vector<16x32xf32>
    %242 = vector.extract_strided_slice %208 {offsets = [0, 8], sizes = [16, 8], strides = [1, 1]} : vector<16x32xf32> to vector<16x8xf32>
    %243 = vector.shape_cast %242 : vector<16x8xf32> to vector<2x8x8xf32>
    %244 = vector.extract_strided_slice %212 {offsets = [0, 8], sizes = [32, 8], strides = [1, 1]} : vector<32x32xf32> to vector<32x8xf32>
    %245 = vector.shape_cast %244 : vector<32x8xf32> to vector<2x16x8xf32>
    %246 = vector.extract_strided_slice %213 {offsets = [0, 8], sizes = [32, 8], strides = [1, 1]} : vector<32x32xf32> to vector<32x8xf32>
    %247 = vector.shape_cast %246 : vector<32x8xf32> to vector<2x16x8xf32>
    "tpu.trace_start"() <{level = 10 : i32, message = "bqd,bkd->bqk"}> : () -> ()
    %cst_120 = arith.constant dense<0.000000e+00> : vector<2x8x16xf32>
    %248 = tpu.matmul %243, %245, %cst_120 {dimension_numbers = #tpu.dot_dimension_numbers<[2], [2], [1], [1], [0, 0, 0, 1, 1, 1], [0], [0]>} : vector<2x8x8xf32>, vector<2x16x8xf32>, vector<2x8x16xf32> -> vector<2x8x16xf32>
    "tpu.trace_stop"() : () -> ()
    %cst_121 = arith.constant 0.353553385 : f32
    %249 = vector.broadcast %cst_121 : f32 to vector<2x8x16xf32>
    %250 = arith.mulf %248, %249 : vector<2x8x16xf32>
    %cst_122 = arith.constant dense<0xFF800000> : vector<2x8xf32>
    %251 = vector.multi_reduction <maximumf>, %250, %cst_122 [2] : vector<2x8x16xf32> to vector<2x8xf32>
    %252 = vector.shape_cast %251 : vector<2x8xf32> to vector<2x8x1xf32>
    %253 = vector.broadcast %252 : vector<2x8x1xf32> to vector<2x8x16xf32>
    %254 = arith.subf %250, %253 : vector<2x8x16xf32>
    %255 = math.exp %254 : vector<2x8x16xf32>
    %cst_123 = arith.constant dense<0.000000e+00> : vector<2x8xf32>
    %256 = vector.multi_reduction <add>, %255, %cst_123 [2] : vector<2x8x16xf32> to vector<2x8xf32>
    %257 = vector.shape_cast %256 : vector<2x8xf32> to vector<2x8x1xf32>
    %258 = vector.broadcast %257 : vector<2x8x1xf32> to vector<2x8x16xf32>
    %259 = arith.divf %255, %258 : vector<2x8x16xf32>
    "tpu.trace_start"() <{level = 10 : i32, message = "bqk,bkd->bqd"}> : () -> ()
    %cst_124 = arith.constant dense<0.000000e+00> : vector<2x8x8xf32>
    %260 = tpu.matmul %259, %247, %cst_124 {dimension_numbers = #tpu.dot_dimension_numbers<[2], [1], [1], [2], [0, 0, 0, 1, 1, 2], [0], [0]>} : vector<2x8x16xf32>, vector<2x16x8xf32>, vector<2x8x8xf32> -> vector<2x8x8xf32>
    "tpu.trace_stop"() : () -> ()
    %261 = vector.shape_cast %260 : vector<2x8x8xf32> to vector<16x8xf32>
    %262 = vector.extract_strided_slice %215 {offsets = [8, 0], sizes = [8, 32], strides = [1, 1]} : vector<32x32xf32> to vector<8x32xf32>
    %cst_125 = arith.constant dense<0.000000e+00> : vector<16x32xf32>
    %263 = tpu.matmul %261, %262, %cst_125 {dimension_numbers = #tpu.dot_dimension_numbers<[1], [0], [0], [1], [0, 0, 1, 1], [], []>} : vector<16x8xf32>, vector<8x32xf32>, vector<16x32xf32> -> vector<16x32xf32>
    %264 = arith.addf %241, %263 : vector<16x32xf32>
    %265 = vector.extract_strided_slice %208 {offsets = [0, 16], sizes = [16, 8], strides = [1, 1]} : vector<16x32xf32> to vector<16x8xf32>
    %266 = vector.shape_cast %265 : vector<16x8xf32> to vector<2x8x8xf32>
    %267 = vector.extract_strided_slice %212 {offsets = [0, 16], sizes = [32, 8], strides = [1, 1]} : vector<32x32xf32> to vector<32x8xf32>
    %268 = vector.shape_cast %267 : vector<32x8xf32> to vector<2x16x8xf32>
    %269 = vector.extract_strided_slice %213 {offsets = [0, 16], sizes = [32, 8], strides = [1, 1]} : vector<32x32xf32> to vector<32x8xf32>
    %270 = vector.shape_cast %269 : vector<32x8xf32> to vector<2x16x8xf32>
    "tpu.trace_start"() <{level = 10 : i32, message = "bqd,bkd->bqk"}> : () -> ()
    %cst_126 = arith.constant dense<0.000000e+00> : vector<2x8x16xf32>
    %271 = tpu.matmul %266, %268, %cst_126 {dimension_numbers = #tpu.dot_dimension_numbers<[2], [2], [1], [1], [0, 0, 0, 1, 1, 1], [0], [0]>} : vector<2x8x8xf32>, vector<2x16x8xf32>, vector<2x8x16xf32> -> vector<2x8x16xf32>
    "tpu.trace_stop"() : () -> ()
    %cst_127 = arith.constant 0.353553385 : f32
    %272 = vector.broadcast %cst_127 : f32 to vector<2x8x16xf32>
    %273 = arith.mulf %271, %272 : vector<2x8x16xf32>
    %cst_128 = arith.constant dense<0xFF800000> : vector<2x8xf32>
    %274 = vector.multi_reduction <maximumf>, %273, %cst_128 [2] : vector<2x8x16xf32> to vector<2x8xf32>
    %275 = vector.shape_cast %274 : vector<2x8xf32> to vector<2x8x1xf32>
    %276 = vector.broadcast %275 : vector<2x8x1xf32> to vector<2x8x16xf32>
    %277 = arith.subf %273, %276 : vector<2x8x16xf32>
    %278 = math.exp %277 : vector<2x8x16xf32>
    %cst_129 = arith.constant dense<0.000000e+00> : vector<2x8xf32>
    %279 = vector.multi_reduction <add>, %278, %cst_129 [2] : vector<2x8x16xf32> to vector<2x8xf32>
    %280 = vector.shape_cast %279 : vector<2x8xf32> to vector<2x8x1xf32>
    %281 = vector.broadcast %280 : vector<2x8x1xf32> to vector<2x8x16xf32>
    %282 = arith.divf %278, %281 : vector<2x8x16xf32>
    "tpu.trace_start"() <{level = 10 : i32, message = "bqk,bkd->bqd"}> : () -> ()
    %cst_130 = arith.constant dense<0.000000e+00> : vector<2x8x8xf32>
    %283 = tpu.matmul %282, %270, %cst_130 {dimension_numbers = #tpu.dot_dimension_numbers<[2], [1], [1], [2], [0, 0, 0, 1, 1, 2], [0], [0]>} : vector<2x8x16xf32>, vector<2x16x8xf32>, vector<2x8x8xf32> -> vector<2x8x8xf32>
    "tpu.trace_stop"() : () -> ()
    %284 = vector.shape_cast %283 : vector<2x8x8xf32> to vector<16x8xf32>
    %285 = vector.extract_strided_slice %215 {offsets = [16, 0], sizes = [8, 32], strides = [1, 1]} : vector<32x32xf32> to vector<8x32xf32>
    %cst_131 = arith.constant dense<0.000000e+00> : vector<16x32xf32>
    %286 = tpu.matmul %284, %285, %cst_131 {dimension_numbers = #tpu.dot_dimension_numbers<[1], [0], [0], [1], [0, 0, 1, 1], [], []>} : vector<16x8xf32>, vector<8x32xf32>, vector<16x32xf32> -> vector<16x32xf32>
    %287 = arith.addf %264, %286 : vector<16x32xf32>
    %288 = vector.extract_strided_slice %208 {offsets = [0, 24], sizes = [16, 8], strides = [1, 1]} : vector<16x32xf32> to vector<16x8xf32>
    %289 = vector.shape_cast %288 : vector<16x8xf32> to vector<2x8x8xf32>
    %290 = vector.extract_strided_slice %212 {offsets = [0, 24], sizes = [32, 8], strides = [1, 1]} : vector<32x32xf32> to vector<32x8xf32>
    %291 = vector.shape_cast %290 : vector<32x8xf32> to vector<2x16x8xf32>
    %292 = vector.extract_strided_slice %213 {offsets = [0, 24], sizes = [32, 8], strides = [1, 1]} : vector<32x32xf32> to vector<32x8xf32>
    %293 = vector.shape_cast %292 : vector<32x8xf32> to vector<2x16x8xf32>
    "tpu.trace_start"() <{level = 10 : i32, message = "bqd,bkd->bqk"}> : () -> ()
    %cst_132 = arith.constant dense<0.000000e+00> : vector<2x8x16xf32>
    %294 = tpu.matmul %289, %291, %cst_132 {dimension_numbers = #tpu.dot_dimension_numbers<[2], [2], [1], [1], [0, 0, 0, 1, 1, 1], [0], [0]>} : vector<2x8x8xf32>, vector<2x16x8xf32>, vector<2x8x16xf32> -> vector<2x8x16xf32>
    "tpu.trace_stop"() : () -> ()
    %cst_133 = arith.constant 0.353553385 : f32
    %295 = vector.broadcast %cst_133 : f32 to vector<2x8x16xf32>
    %296 = arith.mulf %294, %295 : vector<2x8x16xf32>
    %cst_134 = arith.constant dense<0xFF800000> : vector<2x8xf32>
    %297 = vector.multi_reduction <maximumf>, %296, %cst_134 [2] : vector<2x8x16xf32> to vector<2x8xf32>
    %298 = vector.shape_cast %297 : vector<2x8xf32> to vector<2x8x1xf32>
    %299 = vector.broadcast %298 : vector<2x8x1xf32> to vector<2x8x16xf32>
    %300 = arith.subf %296, %299 : vector<2x8x16xf32>
    %301 = math.exp %300 : vector<2x8x16xf32>
    %cst_135 = arith.constant dense<0.000000e+00> : vector<2x8xf32>
    %302 = vector.multi_reduction <add>, %301, %cst_135 [2] : vector<2x8x16xf32> to vector<2x8xf32>
    %303 = vector.shape_cast %302 : vector<2x8xf32> to vector<2x8x1xf32>
    %304 = vector.broadcast %303 : vector<2x8x1xf32> to vector<2x8x16xf32>
    %305 = arith.divf %301, %304 : vector<2x8x16xf32>
    "tpu.trace_start"() <{level = 10 : i32, message = "bqk,bkd->bqd"}> : () -> ()
    %cst_136 = arith.constant dense<0.000000e+00> : vector<2x8x8xf32>
    %306 = tpu.matmul %305, %293, %cst_136 {dimension_numbers = #tpu.dot_dimension_numbers<[2], [1], [1], [2], [0, 0, 0, 1, 1, 2], [0], [0]>} : vector<2x8x16xf32>, vector<2x16x8xf32>, vector<2x8x8xf32> -> vector<2x8x8xf32>
    "tpu.trace_stop"() : () -> ()
    %307 = vector.shape_cast %306 : vector<2x8x8xf32> to vector<16x8xf32>
    %308 = vector.extract_strided_slice %215 {offsets = [24, 0], sizes = [8, 32], strides = [1, 1]} : vector<32x32xf32> to vector<8x32xf32>
    %cst_137 = arith.constant dense<0.000000e+00> : vector<16x32xf32>
    %309 = tpu.matmul %307, %308, %cst_137 {dimension_numbers = #tpu.dot_dimension_numbers<[1], [0], [0], [1], [0, 0, 1, 1], [], []>} : vector<16x8xf32>, vector<8x32xf32>, vector<16x32xf32> -> vector<16x32xf32>
    %310 = arith.addf %287, %309 : vector<16x32xf32>
    %311 = vector.broadcast %217 : vector<1x32xf32> to vector<16x32xf32>
    %312 = arith.addf %310, %311 : vector<16x32xf32>
    %313 = arith.addf %312, %205 : vector<16x32xf32>
    %314 = vector.extract_strided_slice %73 {offsets = [1, 0], sizes = [1, 32], strides = [1, 1]} : vector<3x32xf32> to vector<1x32xf32>
    %315 = vector.extract_strided_slice %75 {offsets = [1, 0], sizes = [1, 32], strides = [1, 1]} : vector<3x32xf32> to vector<1x32xf32>
    %cst_138 = arith.constant dense<0.000000e+00> : vector<16xf32>
    %316 = vector.multi_reduction <add>, %313, %cst_138 [1] : vector<16x32xf32> to vector<16xf32>
    %317 = vector.shape_cast %316 : vector<16xf32> to vector<16x1xf32>
    %cst_139 = arith.constant 3.200000e+01 : f32
    %318 = vector.broadcast %cst_139 : f32 to vector<16x1xf32>
    %319 = arith.divf %317, %318 : vector<16x1xf32>
    %320 = vector.broadcast %319 : vector<16x1xf32> to vector<16x32xf32>
    %321 = arith.subf %313, %320 : vector<16x32xf32>
    %322 = arith.mulf %321, %321 : vector<16x32xf32>
    %cst_140 = arith.constant dense<0.000000e+00> : vector<16xf32>
    %323 = vector.multi_reduction <add>, %322, %cst_140 [1] : vector<16x32xf32> to vector<16xf32>
    %324 = vector.shape_cast %323 : vector<16xf32> to vector<16x1xf32>
    %cst_141 = arith.constant 3.200000e+01 : f32
    %325 = vector.broadcast %cst_141 : f32 to vector<16x1xf32>
    %326 = arith.divf %324, %325 : vector<16x1xf32>
    %327 = vector.broadcast %319 : vector<16x1xf32> to vector<16x32xf32>
    %328 = arith.subf %313, %327 : vector<16x32xf32>
    %cst_142 = arith.constant 9.99999974E-6 : f32
    %329 = vector.broadcast %cst_142 : f32 to vector<16x1xf32>
    %330 = arith.addf %326, %329 : vector<16x1xf32>
    %331 = math.rsqrt %330 : vector<16x1xf32>
    %332 = vector.broadcast %331 : vector<16x1xf32> to vector<16x32xf32>
    %333 = arith.mulf %328, %332 : vector<16x32xf32>
    %334 = vector.broadcast %314 : vector<1x32xf32> to vector<16x32xf32>
    %335 = arith.mulf %333, %334 : vector<16x32xf32>
    %336 = vector.broadcast %315 : vector<1x32xf32> to vector<16x32xf32>
    %337 = arith.addf %335, %336 : vector<16x32xf32>
    %c0_143 = arith.constant 0 : index
    %c0_144 = arith.constant 0 : index
    %c0_145 = arith.constant 0 : index
    %338 = vector.load %arg14[%c0_143, %c0_144, %c0_145] : memref<2x32x64xf32, #tpu.memory_space<vmem>>, vector<1x32x64xf32>
    %339 = vector.shape_cast %338 : vector<1x32x64xf32> to vector<32x64xf32>
    %cst_146 = arith.constant dense<0.000000e+00> : vector<16x64xf32>
    %340 = tpu.matmul %337, %339, %cst_146 {dimension_numbers = #tpu.dot_dimension_numbers<[1], [0], [0], [1], [0, 0, 1, 1], [], []>} : vector<16x32xf32>, vector<32x64xf32>, vector<16x64xf32> -> vector<16x64xf32>
    %c0_147 = arith.constant 0 : index
    %c0_148 = arith.constant 0 : index
    %c0_149 = arith.constant 0 : index
    %341 = vector.load %arg15[%c0_147, %c0_148, %c0_149] : memref<2x1x64xf32, #tpu.memory_space<vmem>>, vector<1x1x64xf32>
    %342 = vector.shape_cast %341 : vector<1x1x64xf32> to vector<1x64xf32>
    %343 = vector.broadcast %342 : vector<1x64xf32> to vector<16x64xf32>
    %344 = arith.addf %340, %343 : vector<16x64xf32>
    %cst_150 = arith.constant 0.000000e+00 : f32
    %345 = vector.broadcast %cst_150 : f32 to vector<16x64xf32>
    %346 = arith.maximumf %344, %345 : vector<16x64xf32>
    %c0_151 = arith.constant 0 : index
    %c0_152 = arith.constant 0 : index
    %c0_153 = arith.constant 0 : index
    %347 = vector.load %arg16[%c0_151, %c0_152, %c0_153] : memref<2x64x32xf32, #tpu.memory_space<vmem>>, vector<1x64x32xf32>
    %348 = vector.shape_cast %347 : vector<1x64x32xf32> to vector<64x32xf32>
    %cst_154 = arith.constant dense<0.000000e+00> : vector<16x32xf32>
    %349 = tpu.matmul %346, %348, %cst_154 {dimension_numbers = #tpu.dot_dimension_numbers<[1], [0], [0], [1], [0, 0, 1, 1], [], []>} : vector<16x64xf32>, vector<64x32xf32>, vector<16x32xf32> -> vector<16x32xf32>
    %c0_155 = arith.constant 0 : index
    %c0_156 = arith.constant 0 : index
    %c0_157 = arith.constant 0 : index
    %350 = vector.load %arg17[%c0_155, %c0_156, %c0_157] : memref<2x1x32xf32, #tpu.memory_space<vmem>>, vector<1x1x32xf32>
    %351 = vector.shape_cast %350 : vector<1x1x32xf32> to vector<1x32xf32>
    %352 = vector.broadcast %351 : vector<1x32xf32> to vector<16x32xf32>
    %353 = arith.addf %349, %352 : vector<16x32xf32>
    %354 = arith.addf %353, %337 : vector<16x32xf32>
    %355 = vector.extract_strided_slice %73 {offsets = [2, 0], sizes = [1, 32], strides = [1, 1]} : vector<3x32xf32> to vector<1x32xf32>
    %356 = vector.extract_strided_slice %75 {offsets = [2, 0], sizes = [1, 32], strides = [1, 1]} : vector<3x32xf32> to vector<1x32xf32>
    %cst_158 = arith.constant dense<0.000000e+00> : vector<16xf32>
    %357 = vector.multi_reduction <add>, %354, %cst_158 [1] : vector<16x32xf32> to vector<16xf32>
    %358 = vector.shape_cast %357 : vector<16xf32> to vector<16x1xf32>
    %cst_159 = arith.constant 3.200000e+01 : f32
    %359 = vector.broadcast %cst_159 : f32 to vector<16x1xf32>
    %360 = arith.divf %358, %359 : vector<16x1xf32>
    %361 = vector.broadcast %360 : vector<16x1xf32> to vector<16x32xf32>
    %362 = arith.subf %354, %361 : vector<16x32xf32>
    %363 = arith.mulf %362, %362 : vector<16x32xf32>
    %cst_160 = arith.constant dense<0.000000e+00> : vector<16xf32>
    %364 = vector.multi_reduction <add>, %363, %cst_160 [1] : vector<16x32xf32> to vector<16xf32>
    %365 = vector.shape_cast %364 : vector<16xf32> to vector<16x1xf32>
    %cst_161 = arith.constant 3.200000e+01 : f32
    %366 = vector.broadcast %cst_161 : f32 to vector<16x1xf32>
    %367 = arith.divf %365, %366 : vector<16x1xf32>
    %368 = vector.broadcast %360 : vector<16x1xf32> to vector<16x32xf32>
    %369 = arith.subf %354, %368 : vector<16x32xf32>
    %cst_162 = arith.constant 9.99999974E-6 : f32
    %370 = vector.broadcast %cst_162 : f32 to vector<16x1xf32>
    %371 = arith.addf %367, %370 : vector<16x1xf32>
    %372 = math.rsqrt %371 : vector<16x1xf32>
    %373 = vector.broadcast %372 : vector<16x1xf32> to vector<16x32xf32>
    %374 = arith.mulf %369, %373 : vector<16x32xf32>
    %375 = vector.broadcast %355 : vector<1x32xf32> to vector<16x32xf32>
    %376 = arith.mulf %374, %375 : vector<16x32xf32>
    %377 = vector.broadcast %356 : vector<1x32xf32> to vector<16x32xf32>
    %378 = arith.addf %376, %377 : vector<16x32xf32>
    %c1_163 = arith.constant 1 : index
    %c0_164 = arith.constant 0 : index
    %c0_165 = arith.constant 0 : index
    %379 = vector.load %arg18[%c1_163, %c0_164, %c0_165] : memref<2x3x32xf32, #tpu.memory_space<vmem>>, vector<1x3x32xf32>
    %380 = vector.shape_cast %379 : vector<1x3x32xf32> to vector<3x32xf32>
    %c1_166 = arith.constant 1 : index
    %c0_167 = arith.constant 0 : index
    %c0_168 = arith.constant 0 : index
    %381 = vector.load %arg19[%c1_166, %c0_167, %c0_168] : memref<2x3x32xf32, #tpu.memory_space<vmem>>, vector<1x3x32xf32>
    %382 = vector.shape_cast %381 : vector<1x3x32xf32> to vector<3x32xf32>
    %c1_169 = arith.constant 1 : index
    %c0_170 = arith.constant 0 : index
    %c0_171 = arith.constant 0 : index
    %383 = vector.load %arg7[%c1_169, %c0_170, %c0_171] : memref<2x32x96xf32, #tpu.memory_space<vmem>>, vector<1x32x96xf32>
    %384 = vector.shape_cast %383 : vector<1x32x96xf32> to vector<32x96xf32>
    %cst_172 = arith.constant dense<0.000000e+00> : vector<16x96xf32>
    %385 = tpu.matmul %378, %384, %cst_172 {dimension_numbers = #tpu.dot_dimension_numbers<[1], [0], [0], [1], [0, 0, 1, 1], [], []>} : vector<16x32xf32>, vector<32x96xf32>, vector<16x96xf32> -> vector<16x96xf32>
    %386 = vector.extract_strided_slice %385 {offsets = [0, 0], sizes = [16, 32], strides = [1, 1]} : vector<16x96xf32> to vector<16x32xf32>
    %387 = vector.extract_strided_slice %385 {offsets = [0, 32], sizes = [16, 32], strides = [1, 1]} : vector<16x96xf32> to vector<16x32xf32>
    %388 = vector.extract_strided_slice %385 {offsets = [0, 64], sizes = [16, 32], strides = [1, 1]} : vector<16x96xf32> to vector<16x32xf32>
    %c1_173 = arith.constant 1 : index
    %c0_174 = arith.constant 0 : index
    %c0_175 = arith.constant 0 : index
    %389 = vector.load %arg8[%c1_173, %c0_174, %c0_175] : memref<2x32x32xf32, #tpu.memory_space<vmem>>, vector<1x32x32xf32>
    %390 = vector.shape_cast %389 : vector<1x32x32xf32> to vector<32x32xf32>
    %c1_176 = arith.constant 1 : index
    %c0_177 = arith.constant 0 : index
    %c0_178 = arith.constant 0 : index
    %391 = vector.load %arg9[%c1_176, %c0_177, %c0_178] : memref<2x1x32xf32, #tpu.memory_space<vmem>>, vector<1x1x32xf32>
    %392 = vector.shape_cast %391 : vector<1x1x32xf32> to vector<1x32xf32>
    %cst_179 = arith.constant 0.000000e+00 : f32
    %393 = vector.broadcast %cst_179 : f32 to vector<16x32xf32>
    %394 = vector.extract_strided_slice %386 {offsets = [0, 0], sizes = [16, 8], strides = [1, 1]} : vector<16x32xf32> to vector<16x8xf32>
    %395 = vector.shape_cast %394 : vector<16x8xf32> to vector<2x8x8xf32>
    %396 = vector.extract_strided_slice %387 {offsets = [0, 0], sizes = [16, 8], strides = [1, 1]} : vector<16x32xf32> to vector<16x8xf32>
    %397 = vector.shape_cast %396 : vector<16x8xf32> to vector<2x8x8xf32>
    %398 = vector.extract_strided_slice %388 {offsets = [0, 0], sizes = [16, 8], strides = [1, 1]} : vector<16x32xf32> to vector<16x8xf32>
    %399 = vector.shape_cast %398 : vector<16x8xf32> to vector<2x8x8xf32>
    "tpu.trace_start"() <{level = 10 : i32, message = "bqd,bkd->bqk"}> : () -> ()
    %cst_180 = arith.constant dense<0.000000e+00> : vector<2x8x8xf32>
    %400 = tpu.matmul %395, %397, %cst_180 {dimension_numbers = #tpu.dot_dimension_numbers<[2], [2], [1], [1], [0, 0, 0, 1, 1, 1], [0], [0]>} : vector<2x8x8xf32>, vector<2x8x8xf32>, vector<2x8x8xf32> -> vector<2x8x8xf32>
    "tpu.trace_stop"() : () -> ()
    %cst_181 = arith.constant 0.353553385 : f32
    %401 = vector.broadcast %cst_181 : f32 to vector<2x8x8xf32>
    %402 = arith.mulf %400, %401 : vector<2x8x8xf32>
    %cst_182 = arith.constant dense<0xFF800000> : vector<2x8xf32>
    %403 = vector.multi_reduction <maximumf>, %402, %cst_182 [2] : vector<2x8x8xf32> to vector<2x8xf32>
    %404 = vector.shape_cast %403 : vector<2x8xf32> to vector<2x8x1xf32>
    %405 = vector.broadcast %404 : vector<2x8x1xf32> to vector<2x8x8xf32>
    %406 = arith.subf %402, %405 : vector<2x8x8xf32>
    %407 = math.exp %406 : vector<2x8x8xf32>
    %cst_183 = arith.constant dense<0.000000e+00> : vector<2x8xf32>
    %408 = vector.multi_reduction <add>, %407, %cst_183 [2] : vector<2x8x8xf32> to vector<2x8xf32>
    %409 = vector.shape_cast %408 : vector<2x8xf32> to vector<2x8x1xf32>
    %410 = vector.broadcast %409 : vector<2x8x1xf32> to vector<2x8x8xf32>
    %411 = arith.divf %407, %410 : vector<2x8x8xf32>
    "tpu.trace_start"() <{level = 10 : i32, message = "bqk,bkd->bqd"}> : () -> ()
    %cst_184 = arith.constant dense<0.000000e+00> : vector<2x8x8xf32>
    %412 = tpu.matmul %411, %399, %cst_184 {dimension_numbers = #tpu.dot_dimension_numbers<[2], [1], [1], [2], [0, 0, 0, 1, 1, 2], [0], [0]>} : vector<2x8x8xf32>, vector<2x8x8xf32>, vector<2x8x8xf32> -> vector<2x8x8xf32>
    "tpu.trace_stop"() : () -> ()
    %413 = vector.shape_cast %412 : vector<2x8x8xf32> to vector<16x8xf32>
    %414 = vector.extract_strided_slice %390 {offsets = [0, 0], sizes = [8, 32], strides = [1, 1]} : vector<32x32xf32> to vector<8x32xf32>
    %cst_185 = arith.constant dense<0.000000e+00> : vector<16x32xf32>
    %415 = tpu.matmul %413, %414, %cst_185 {dimension_numbers = #tpu.dot_dimension_numbers<[1], [0], [0], [1], [0, 0, 1, 1], [], []>} : vector<16x8xf32>, vector<8x32xf32>, vector<16x32xf32> -> vector<16x32xf32>
    %416 = arith.addf %393, %415 : vector<16x32xf32>
    %417 = vector.extract_strided_slice %386 {offsets = [0, 8], sizes = [16, 8], strides = [1, 1]} : vector<16x32xf32> to vector<16x8xf32>
    %418 = vector.shape_cast %417 : vector<16x8xf32> to vector<2x8x8xf32>
    %419 = vector.extract_strided_slice %387 {offsets = [0, 8], sizes = [16, 8], strides = [1, 1]} : vector<16x32xf32> to vector<16x8xf32>
    %420 = vector.shape_cast %419 : vector<16x8xf32> to vector<2x8x8xf32>
    %421 = vector.extract_strided_slice %388 {offsets = [0, 8], sizes = [16, 8], strides = [1, 1]} : vector<16x32xf32> to vector<16x8xf32>
    %422 = vector.shape_cast %421 : vector<16x8xf32> to vector<2x8x8xf32>
    "tpu.trace_start"() <{level = 10 : i32, message = "bqd,bkd->bqk"}> : () -> ()
    %cst_186 = arith.constant dense<0.000000e+00> : vector<2x8x8xf32>
    %423 = tpu.matmul %418, %420, %cst_186 {dimension_numbers = #tpu.dot_dimension_numbers<[2], [2], [1], [1], [0, 0, 0, 1, 1, 1], [0], [0]>} : vector<2x8x8xf32>, vector<2x8x8xf32>, vector<2x8x8xf32> -> vector<2x8x8xf32>
    "tpu.trace_stop"() : () -> ()
    %cst_187 = arith.constant 0.353553385 : f32
    %424 = vector.broadcast %cst_187 : f32 to vector<2x8x8xf32>
    %425 = arith.mulf %423, %424 : vector<2x8x8xf32>
    %cst_188 = arith.constant dense<0xFF800000> : vector<2x8xf32>
    %426 = vector.multi_reduction <maximumf>, %425, %cst_188 [2] : vector<2x8x8xf32> to vector<2x8xf32>
    %427 = vector.shape_cast %426 : vector<2x8xf32> to vector<2x8x1xf32>
    %428 = vector.broadcast %427 : vector<2x8x1xf32> to vector<2x8x8xf32>
    %429 = arith.subf %425, %428 : vector<2x8x8xf32>
    %430 = math.exp %429 : vector<2x8x8xf32>
    %cst_189 = arith.constant dense<0.000000e+00> : vector<2x8xf32>
    %431 = vector.multi_reduction <add>, %430, %cst_189 [2] : vector<2x8x8xf32> to vector<2x8xf32>
    %432 = vector.shape_cast %431 : vector<2x8xf32> to vector<2x8x1xf32>
    %433 = vector.broadcast %432 : vector<2x8x1xf32> to vector<2x8x8xf32>
    %434 = arith.divf %430, %433 : vector<2x8x8xf32>
    "tpu.trace_start"() <{level = 10 : i32, message = "bqk,bkd->bqd"}> : () -> ()
    %cst_190 = arith.constant dense<0.000000e+00> : vector<2x8x8xf32>
    %435 = tpu.matmul %434, %422, %cst_190 {dimension_numbers = #tpu.dot_dimension_numbers<[2], [1], [1], [2], [0, 0, 0, 1, 1, 2], [0], [0]>} : vector<2x8x8xf32>, vector<2x8x8xf32>, vector<2x8x8xf32> -> vector<2x8x8xf32>
    "tpu.trace_stop"() : () -> ()
    %436 = vector.shape_cast %435 : vector<2x8x8xf32> to vector<16x8xf32>
    %437 = vector.extract_strided_slice %390 {offsets = [8, 0], sizes = [8, 32], strides = [1, 1]} : vector<32x32xf32> to vector<8x32xf32>
    %cst_191 = arith.constant dense<0.000000e+00> : vector<16x32xf32>
    %438 = tpu.matmul %436, %437, %cst_191 {dimension_numbers = #tpu.dot_dimension_numbers<[1], [0], [0], [1], [0, 0, 1, 1], [], []>} : vector<16x8xf32>, vector<8x32xf32>, vector<16x32xf32> -> vector<16x32xf32>
    %439 = arith.addf %416, %438 : vector<16x32xf32>
    %440 = vector.extract_strided_slice %386 {offsets = [0, 16], sizes = [16, 8], strides = [1, 1]} : vector<16x32xf32> to vector<16x8xf32>
    %441 = vector.shape_cast %440 : vector<16x8xf32> to vector<2x8x8xf32>
    %442 = vector.extract_strided_slice %387 {offsets = [0, 16], sizes = [16, 8], strides = [1, 1]} : vector<16x32xf32> to vector<16x8xf32>
    %443 = vector.shape_cast %442 : vector<16x8xf32> to vector<2x8x8xf32>
    %444 = vector.extract_strided_slice %388 {offsets = [0, 16], sizes = [16, 8], strides = [1, 1]} : vector<16x32xf32> to vector<16x8xf32>
    %445 = vector.shape_cast %444 : vector<16x8xf32> to vector<2x8x8xf32>
    "tpu.trace_start"() <{level = 10 : i32, message = "bqd,bkd->bqk"}> : () -> ()
    %cst_192 = arith.constant dense<0.000000e+00> : vector<2x8x8xf32>
    %446 = tpu.matmul %441, %443, %cst_192 {dimension_numbers = #tpu.dot_dimension_numbers<[2], [2], [1], [1], [0, 0, 0, 1, 1, 1], [0], [0]>} : vector<2x8x8xf32>, vector<2x8x8xf32>, vector<2x8x8xf32> -> vector<2x8x8xf32>
    "tpu.trace_stop"() : () -> ()
    %cst_193 = arith.constant 0.353553385 : f32
    %447 = vector.broadcast %cst_193 : f32 to vector<2x8x8xf32>
    %448 = arith.mulf %446, %447 : vector<2x8x8xf32>
    %cst_194 = arith.constant dense<0xFF800000> : vector<2x8xf32>
    %449 = vector.multi_reduction <maximumf>, %448, %cst_194 [2] : vector<2x8x8xf32> to vector<2x8xf32>
    %450 = vector.shape_cast %449 : vector<2x8xf32> to vector<2x8x1xf32>
    %451 = vector.broadcast %450 : vector<2x8x1xf32> to vector<2x8x8xf32>
    %452 = arith.subf %448, %451 : vector<2x8x8xf32>
    %453 = math.exp %452 : vector<2x8x8xf32>
    %cst_195 = arith.constant dense<0.000000e+00> : vector<2x8xf32>
    %454 = vector.multi_reduction <add>, %453, %cst_195 [2] : vector<2x8x8xf32> to vector<2x8xf32>
    %455 = vector.shape_cast %454 : vector<2x8xf32> to vector<2x8x1xf32>
    %456 = vector.broadcast %455 : vector<2x8x1xf32> to vector<2x8x8xf32>
    %457 = arith.divf %453, %456 : vector<2x8x8xf32>
    "tpu.trace_start"() <{level = 10 : i32, message = "bqk,bkd->bqd"}> : () -> ()
    %cst_196 = arith.constant dense<0.000000e+00> : vector<2x8x8xf32>
    %458 = tpu.matmul %457, %445, %cst_196 {dimension_numbers = #tpu.dot_dimension_numbers<[2], [1], [1], [2], [0, 0, 0, 1, 1, 2], [0], [0]>} : vector<2x8x8xf32>, vector<2x8x8xf32>, vector<2x8x8xf32> -> vector<2x8x8xf32>
    "tpu.trace_stop"() : () -> ()
    %459 = vector.shape_cast %458 : vector<2x8x8xf32> to vector<16x8xf32>
    %460 = vector.extract_strided_slice %390 {offsets = [16, 0], sizes = [8, 32], strides = [1, 1]} : vector<32x32xf32> to vector<8x32xf32>
    %cst_197 = arith.constant dense<0.000000e+00> : vector<16x32xf32>
    %461 = tpu.matmul %459, %460, %cst_197 {dimension_numbers = #tpu.dot_dimension_numbers<[1], [0], [0], [1], [0, 0, 1, 1], [], []>} : vector<16x8xf32>, vector<8x32xf32>, vector<16x32xf32> -> vector<16x32xf32>
    %462 = arith.addf %439, %461 : vector<16x32xf32>
    %463 = vector.extract_strided_slice %386 {offsets = [0, 24], sizes = [16, 8], strides = [1, 1]} : vector<16x32xf32> to vector<16x8xf32>
    %464 = vector.shape_cast %463 : vector<16x8xf32> to vector<2x8x8xf32>
    %465 = vector.extract_strided_slice %387 {offsets = [0, 24], sizes = [16, 8], strides = [1, 1]} : vector<16x32xf32> to vector<16x8xf32>
    %466 = vector.shape_cast %465 : vector<16x8xf32> to vector<2x8x8xf32>
    %467 = vector.extract_strided_slice %388 {offsets = [0, 24], sizes = [16, 8], strides = [1, 1]} : vector<16x32xf32> to vector<16x8xf32>
    %468 = vector.shape_cast %467 : vector<16x8xf32> to vector<2x8x8xf32>
    "tpu.trace_start"() <{level = 10 : i32, message = "bqd,bkd->bqk"}> : () -> ()
    %cst_198 = arith.constant dense<0.000000e+00> : vector<2x8x8xf32>
    %469 = tpu.matmul %464, %466, %cst_198 {dimension_numbers = #tpu.dot_dimension_numbers<[2], [2], [1], [1], [0, 0, 0, 1, 1, 1], [0], [0]>} : vector<2x8x8xf32>, vector<2x8x8xf32>, vector<2x8x8xf32> -> vector<2x8x8xf32>
    "tpu.trace_stop"() : () -> ()
    %cst_199 = arith.constant 0.353553385 : f32
    %470 = vector.broadcast %cst_199 : f32 to vector<2x8x8xf32>
    %471 = arith.mulf %469, %470 : vector<2x8x8xf32>
    %cst_200 = arith.constant dense<0xFF800000> : vector<2x8xf32>
    %472 = vector.multi_reduction <maximumf>, %471, %cst_200 [2] : vector<2x8x8xf32> to vector<2x8xf32>
    %473 = vector.shape_cast %472 : vector<2x8xf32> to vector<2x8x1xf32>
    %474 = vector.broadcast %473 : vector<2x8x1xf32> to vector<2x8x8xf32>
    %475 = arith.subf %471, %474 : vector<2x8x8xf32>
    %476 = math.exp %475 : vector<2x8x8xf32>
    %cst_201 = arith.constant dense<0.000000e+00> : vector<2x8xf32>
    %477 = vector.multi_reduction <add>, %476, %cst_201 [2] : vector<2x8x8xf32> to vector<2x8xf32>
    %478 = vector.shape_cast %477 : vector<2x8xf32> to vector<2x8x1xf32>
    %479 = vector.broadcast %478 : vector<2x8x1xf32> to vector<2x8x8xf32>
    %480 = arith.divf %476, %479 : vector<2x8x8xf32>
    "tpu.trace_start"() <{level = 10 : i32, message = "bqk,bkd->bqd"}> : () -> ()
    %cst_202 = arith.constant dense<0.000000e+00> : vector<2x8x8xf32>
    %481 = tpu.matmul %480, %468, %cst_202 {dimension_numbers = #tpu.dot_dimension_numbers<[2], [1], [1], [2], [0, 0, 0, 1, 1, 2], [0], [0]>} : vector<2x8x8xf32>, vector<2x8x8xf32>, vector<2x8x8xf32> -> vector<2x8x8xf32>
    "tpu.trace_stop"() : () -> ()
    %482 = vector.shape_cast %481 : vector<2x8x8xf32> to vector<16x8xf32>
    %483 = vector.extract_strided_slice %390 {offsets = [24, 0], sizes = [8, 32], strides = [1, 1]} : vector<32x32xf32> to vector<8x32xf32>
    %cst_203 = arith.constant dense<0.000000e+00> : vector<16x32xf32>
    %484 = tpu.matmul %482, %483, %cst_203 {dimension_numbers = #tpu.dot_dimension_numbers<[1], [0], [0], [1], [0, 0, 1, 1], [], []>} : vector<16x8xf32>, vector<8x32xf32>, vector<16x32xf32> -> vector<16x32xf32>
    %485 = arith.addf %462, %484 : vector<16x32xf32>
    %486 = vector.broadcast %392 : vector<1x32xf32> to vector<16x32xf32>
    %487 = arith.addf %485, %486 : vector<16x32xf32>
    %488 = arith.addf %487, %378 : vector<16x32xf32>
    %489 = vector.extract_strided_slice %380 {offsets = [0, 0], sizes = [1, 32], strides = [1, 1]} : vector<3x32xf32> to vector<1x32xf32>
    %490 = vector.extract_strided_slice %382 {offsets = [0, 0], sizes = [1, 32], strides = [1, 1]} : vector<3x32xf32> to vector<1x32xf32>
    %cst_204 = arith.constant dense<0.000000e+00> : vector<16xf32>
    %491 = vector.multi_reduction <add>, %488, %cst_204 [1] : vector<16x32xf32> to vector<16xf32>
    %492 = vector.shape_cast %491 : vector<16xf32> to vector<16x1xf32>
    %cst_205 = arith.constant 3.200000e+01 : f32
    %493 = vector.broadcast %cst_205 : f32 to vector<16x1xf32>
    %494 = arith.divf %492, %493 : vector<16x1xf32>
    %495 = vector.broadcast %494 : vector<16x1xf32> to vector<16x32xf32>
    %496 = arith.subf %488, %495 : vector<16x32xf32>
    %497 = arith.mulf %496, %496 : vector<16x32xf32>
    %cst_206 = arith.constant dense<0.000000e+00> : vector<16xf32>
    %498 = vector.multi_reduction <add>, %497, %cst_206 [1] : vector<16x32xf32> to vector<16xf32>
    %499 = vector.shape_cast %498 : vector<16xf32> to vector<16x1xf32>
    %cst_207 = arith.constant 3.200000e+01 : f32
    %500 = vector.broadcast %cst_207 : f32 to vector<16x1xf32>
    %501 = arith.divf %499, %500 : vector<16x1xf32>
    %502 = vector.broadcast %494 : vector<16x1xf32> to vector<16x32xf32>
    %503 = arith.subf %488, %502 : vector<16x32xf32>
    %cst_208 = arith.constant 9.99999974E-6 : f32
    %504 = vector.broadcast %cst_208 : f32 to vector<16x1xf32>
    %505 = arith.addf %501, %504 : vector<16x1xf32>
    %506 = math.rsqrt %505 : vector<16x1xf32>
    %507 = vector.broadcast %506 : vector<16x1xf32> to vector<16x32xf32>
    %508 = arith.mulf %503, %507 : vector<16x32xf32>
    %509 = vector.broadcast %489 : vector<1x32xf32> to vector<16x32xf32>
    %510 = arith.mulf %508, %509 : vector<16x32xf32>
    %511 = vector.broadcast %490 : vector<1x32xf32> to vector<16x32xf32>
    %512 = arith.addf %510, %511 : vector<16x32xf32>
    %c1_209 = arith.constant 1 : index
    %c0_210 = arith.constant 0 : index
    %c0_211 = arith.constant 0 : index
    %513 = vector.load %arg10[%c1_209, %c0_210, %c0_211] : memref<2x32x32xf32, #tpu.memory_space<vmem>>, vector<1x32x32xf32>
    %514 = vector.shape_cast %513 : vector<1x32x32xf32> to vector<32x32xf32>
    %cst_212 = arith.constant dense<0.000000e+00> : vector<16x32xf32>
    %515 = tpu.matmul %512, %514, %cst_212 {dimension_numbers = #tpu.dot_dimension_numbers<[1], [0], [0], [1], [0, 0, 1, 1], [], []>} : vector<16x32xf32>, vector<32x32xf32>, vector<16x32xf32> -> vector<16x32xf32>
    %c1_213 = arith.constant 1 : index
    %c0_214 = arith.constant 0 : index
    %c0_215 = arith.constant 0 : index
    %516 = vector.load %arg11[%c1_213, %c0_214, %c0_215] : memref<2x32x64xf32, #tpu.memory_space<vmem>>, vector<1x32x64xf32>
    %517 = vector.shape_cast %516 : vector<1x32x64xf32> to vector<32x64xf32>
    %cst_216 = arith.constant dense<0.000000e+00> : vector<32x64xf32>
    %518 = tpu.matmul %68, %517, %cst_216 {dimension_numbers = #tpu.dot_dimension_numbers<[1], [0], [0], [1], [0, 0, 1, 1], [], []>} : vector<32x32xf32>, vector<32x64xf32>, vector<32x64xf32> -> vector<32x64xf32>
    %519 = vector.extract_strided_slice %518 {offsets = [0, 0], sizes = [32, 32], strides = [1, 1]} : vector<32x64xf32> to vector<32x32xf32>
    %520 = vector.extract_strided_slice %518 {offsets = [0, 32], sizes = [32, 32], strides = [1, 1]} : vector<32x64xf32> to vector<32x32xf32>
    %c1_217 = arith.constant 1 : index
    %c0_218 = arith.constant 0 : index
    %c0_219 = arith.constant 0 : index
    %521 = vector.load %arg12[%c1_217, %c0_218, %c0_219] : memref<2x32x32xf32, #tpu.memory_space<vmem>>, vector<1x32x32xf32>
    %522 = vector.shape_cast %521 : vector<1x32x32xf32> to vector<32x32xf32>
    %c1_220 = arith.constant 1 : index
    %c0_221 = arith.constant 0 : index
    %c0_222 = arith.constant 0 : index
    %523 = vector.load %arg13[%c1_220, %c0_221, %c0_222] : memref<2x1x32xf32, #tpu.memory_space<vmem>>, vector<1x1x32xf32>
    %524 = vector.shape_cast %523 : vector<1x1x32xf32> to vector<1x32xf32>
    %cst_223 = arith.constant 0.000000e+00 : f32
    %525 = vector.broadcast %cst_223 : f32 to vector<16x32xf32>
    %526 = vector.extract_strided_slice %515 {offsets = [0, 0], sizes = [16, 8], strides = [1, 1]} : vector<16x32xf32> to vector<16x8xf32>
    %527 = vector.shape_cast %526 : vector<16x8xf32> to vector<2x8x8xf32>
    %528 = vector.extract_strided_slice %519 {offsets = [0, 0], sizes = [32, 8], strides = [1, 1]} : vector<32x32xf32> to vector<32x8xf32>
    %529 = vector.shape_cast %528 : vector<32x8xf32> to vector<2x16x8xf32>
    %530 = vector.extract_strided_slice %520 {offsets = [0, 0], sizes = [32, 8], strides = [1, 1]} : vector<32x32xf32> to vector<32x8xf32>
    %531 = vector.shape_cast %530 : vector<32x8xf32> to vector<2x16x8xf32>
    "tpu.trace_start"() <{level = 10 : i32, message = "bqd,bkd->bqk"}> : () -> ()
    %cst_224 = arith.constant dense<0.000000e+00> : vector<2x8x16xf32>
    %532 = tpu.matmul %527, %529, %cst_224 {dimension_numbers = #tpu.dot_dimension_numbers<[2], [2], [1], [1], [0, 0, 0, 1, 1, 1], [0], [0]>} : vector<2x8x8xf32>, vector<2x16x8xf32>, vector<2x8x16xf32> -> vector<2x8x16xf32>
    "tpu.trace_stop"() : () -> ()
    %cst_225 = arith.constant 0.353553385 : f32
    %533 = vector.broadcast %cst_225 : f32 to vector<2x8x16xf32>
    %534 = arith.mulf %532, %533 : vector<2x8x16xf32>
    %cst_226 = arith.constant dense<0xFF800000> : vector<2x8xf32>
    %535 = vector.multi_reduction <maximumf>, %534, %cst_226 [2] : vector<2x8x16xf32> to vector<2x8xf32>
    %536 = vector.shape_cast %535 : vector<2x8xf32> to vector<2x8x1xf32>
    %537 = vector.broadcast %536 : vector<2x8x1xf32> to vector<2x8x16xf32>
    %538 = arith.subf %534, %537 : vector<2x8x16xf32>
    %539 = math.exp %538 : vector<2x8x16xf32>
    %cst_227 = arith.constant dense<0.000000e+00> : vector<2x8xf32>
    %540 = vector.multi_reduction <add>, %539, %cst_227 [2] : vector<2x8x16xf32> to vector<2x8xf32>
    %541 = vector.shape_cast %540 : vector<2x8xf32> to vector<2x8x1xf32>
    %542 = vector.broadcast %541 : vector<2x8x1xf32> to vector<2x8x16xf32>
    %543 = arith.divf %539, %542 : vector<2x8x16xf32>
    "tpu.trace_start"() <{level = 10 : i32, message = "bqk,bkd->bqd"}> : () -> ()
    %cst_228 = arith.constant dense<0.000000e+00> : vector<2x8x8xf32>
    %544 = tpu.matmul %543, %531, %cst_228 {dimension_numbers = #tpu.dot_dimension_numbers<[2], [1], [1], [2], [0, 0, 0, 1, 1, 2], [0], [0]>} : vector<2x8x16xf32>, vector<2x16x8xf32>, vector<2x8x8xf32> -> vector<2x8x8xf32>
    "tpu.trace_stop"() : () -> ()
    %545 = vector.shape_cast %544 : vector<2x8x8xf32> to vector<16x8xf32>
    %546 = vector.extract_strided_slice %522 {offsets = [0, 0], sizes = [8, 32], strides = [1, 1]} : vector<32x32xf32> to vector<8x32xf32>
    %cst_229 = arith.constant dense<0.000000e+00> : vector<16x32xf32>
    %547 = tpu.matmul %545, %546, %cst_229 {dimension_numbers = #tpu.dot_dimension_numbers<[1], [0], [0], [1], [0, 0, 1, 1], [], []>} : vector<16x8xf32>, vector<8x32xf32>, vector<16x32xf32> -> vector<16x32xf32>
    %548 = arith.addf %525, %547 : vector<16x32xf32>
    %549 = vector.extract_strided_slice %515 {offsets = [0, 8], sizes = [16, 8], strides = [1, 1]} : vector<16x32xf32> to vector<16x8xf32>
    %550 = vector.shape_cast %549 : vector<16x8xf32> to vector<2x8x8xf32>
    %551 = vector.extract_strided_slice %519 {offsets = [0, 8], sizes = [32, 8], strides = [1, 1]} : vector<32x32xf32> to vector<32x8xf32>
    %552 = vector.shape_cast %551 : vector<32x8xf32> to vector<2x16x8xf32>
    %553 = vector.extract_strided_slice %520 {offsets = [0, 8], sizes = [32, 8], strides = [1, 1]} : vector<32x32xf32> to vector<32x8xf32>
    %554 = vector.shape_cast %553 : vector<32x8xf32> to vector<2x16x8xf32>
    "tpu.trace_start"() <{level = 10 : i32, message = "bqd,bkd->bqk"}> : () -> ()
    %cst_230 = arith.constant dense<0.000000e+00> : vector<2x8x16xf32>
    %555 = tpu.matmul %550, %552, %cst_230 {dimension_numbers = #tpu.dot_dimension_numbers<[2], [2], [1], [1], [0, 0, 0, 1, 1, 1], [0], [0]>} : vector<2x8x8xf32>, vector<2x16x8xf32>, vector<2x8x16xf32> -> vector<2x8x16xf32>
    "tpu.trace_stop"() : () -> ()
    %cst_231 = arith.constant 0.353553385 : f32
    %556 = vector.broadcast %cst_231 : f32 to vector<2x8x16xf32>
    %557 = arith.mulf %555, %556 : vector<2x8x16xf32>
    %cst_232 = arith.constant dense<0xFF800000> : vector<2x8xf32>
    %558 = vector.multi_reduction <maximumf>, %557, %cst_232 [2] : vector<2x8x16xf32> to vector<2x8xf32>
    %559 = vector.shape_cast %558 : vector<2x8xf32> to vector<2x8x1xf32>
    %560 = vector.broadcast %559 : vector<2x8x1xf32> to vector<2x8x16xf32>
    %561 = arith.subf %557, %560 : vector<2x8x16xf32>
    %562 = math.exp %561 : vector<2x8x16xf32>
    %cst_233 = arith.constant dense<0.000000e+00> : vector<2x8xf32>
    %563 = vector.multi_reduction <add>, %562, %cst_233 [2] : vector<2x8x16xf32> to vector<2x8xf32>
    %564 = vector.shape_cast %563 : vector<2x8xf32> to vector<2x8x1xf32>
    %565 = vector.broadcast %564 : vector<2x8x1xf32> to vector<2x8x16xf32>
    %566 = arith.divf %562, %565 : vector<2x8x16xf32>
    "tpu.trace_start"() <{level = 10 : i32, message = "bqk,bkd->bqd"}> : () -> ()
    %cst_234 = arith.constant dense<0.000000e+00> : vector<2x8x8xf32>
    %567 = tpu.matmul %566, %554, %cst_234 {dimension_numbers = #tpu.dot_dimension_numbers<[2], [1], [1], [2], [0, 0, 0, 1, 1, 2], [0], [0]>} : vector<2x8x16xf32>, vector<2x16x8xf32>, vector<2x8x8xf32> -> vector<2x8x8xf32>
    "tpu.trace_stop"() : () -> ()
    %568 = vector.shape_cast %567 : vector<2x8x8xf32> to vector<16x8xf32>
    %569 = vector.extract_strided_slice %522 {offsets = [8, 0], sizes = [8, 32], strides = [1, 1]} : vector<32x32xf32> to vector<8x32xf32>
    %cst_235 = arith.constant dense<0.000000e+00> : vector<16x32xf32>
    %570 = tpu.matmul %568, %569, %cst_235 {dimension_numbers = #tpu.dot_dimension_numbers<[1], [0], [0], [1], [0, 0, 1, 1], [], []>} : vector<16x8xf32>, vector<8x32xf32>, vector<16x32xf32> -> vector<16x32xf32>
    %571 = arith.addf %548, %570 : vector<16x32xf32>
    %572 = vector.extract_strided_slice %515 {offsets = [0, 16], sizes = [16, 8], strides = [1, 1]} : vector<16x32xf32> to vector<16x8xf32>
    %573 = vector.shape_cast %572 : vector<16x8xf32> to vector<2x8x8xf32>
    %574 = vector.extract_strided_slice %519 {offsets = [0, 16], sizes = [32, 8], strides = [1, 1]} : vector<32x32xf32> to vector<32x8xf32>
    %575 = vector.shape_cast %574 : vector<32x8xf32> to vector<2x16x8xf32>
    %576 = vector.extract_strided_slice %520 {offsets = [0, 16], sizes = [32, 8], strides = [1, 1]} : vector<32x32xf32> to vector<32x8xf32>
    %577 = vector.shape_cast %576 : vector<32x8xf32> to vector<2x16x8xf32>
    "tpu.trace_start"() <{level = 10 : i32, message = "bqd,bkd->bqk"}> : () -> ()
    %cst_236 = arith.constant dense<0.000000e+00> : vector<2x8x16xf32>
    %578 = tpu.matmul %573, %575, %cst_236 {dimension_numbers = #tpu.dot_dimension_numbers<[2], [2], [1], [1], [0, 0, 0, 1, 1, 1], [0], [0]>} : vector<2x8x8xf32>, vector<2x16x8xf32>, vector<2x8x16xf32> -> vector<2x8x16xf32>
    "tpu.trace_stop"() : () -> ()
    %cst_237 = arith.constant 0.353553385 : f32
    %579 = vector.broadcast %cst_237 : f32 to vector<2x8x16xf32>
    %580 = arith.mulf %578, %579 : vector<2x8x16xf32>
    %cst_238 = arith.constant dense<0xFF800000> : vector<2x8xf32>
    %581 = vector.multi_reduction <maximumf>, %580, %cst_238 [2] : vector<2x8x16xf32> to vector<2x8xf32>
    %582 = vector.shape_cast %581 : vector<2x8xf32> to vector<2x8x1xf32>
    %583 = vector.broadcast %582 : vector<2x8x1xf32> to vector<2x8x16xf32>
    %584 = arith.subf %580, %583 : vector<2x8x16xf32>
    %585 = math.exp %584 : vector<2x8x16xf32>
    %cst_239 = arith.constant dense<0.000000e+00> : vector<2x8xf32>
    %586 = vector.multi_reduction <add>, %585, %cst_239 [2] : vector<2x8x16xf32> to vector<2x8xf32>
    %587 = vector.shape_cast %586 : vector<2x8xf32> to vector<2x8x1xf32>
    %588 = vector.broadcast %587 : vector<2x8x1xf32> to vector<2x8x16xf32>
    %589 = arith.divf %585, %588 : vector<2x8x16xf32>
    "tpu.trace_start"() <{level = 10 : i32, message = "bqk,bkd->bqd"}> : () -> ()
    %cst_240 = arith.constant dense<0.000000e+00> : vector<2x8x8xf32>
    %590 = tpu.matmul %589, %577, %cst_240 {dimension_numbers = #tpu.dot_dimension_numbers<[2], [1], [1], [2], [0, 0, 0, 1, 1, 2], [0], [0]>} : vector<2x8x16xf32>, vector<2x16x8xf32>, vector<2x8x8xf32> -> vector<2x8x8xf32>
    "tpu.trace_stop"() : () -> ()
    %591 = vector.shape_cast %590 : vector<2x8x8xf32> to vector<16x8xf32>
    %592 = vector.extract_strided_slice %522 {offsets = [16, 0], sizes = [8, 32], strides = [1, 1]} : vector<32x32xf32> to vector<8x32xf32>
    %cst_241 = arith.constant dense<0.000000e+00> : vector<16x32xf32>
    %593 = tpu.matmul %591, %592, %cst_241 {dimension_numbers = #tpu.dot_dimension_numbers<[1], [0], [0], [1], [0, 0, 1, 1], [], []>} : vector<16x8xf32>, vector<8x32xf32>, vector<16x32xf32> -> vector<16x32xf32>
    %594 = arith.addf %571, %593 : vector<16x32xf32>
    %595 = vector.extract_strided_slice %515 {offsets = [0, 24], sizes = [16, 8], strides = [1, 1]} : vector<16x32xf32> to vector<16x8xf32>
    %596 = vector.shape_cast %595 : vector<16x8xf32> to vector<2x8x8xf32>
    %597 = vector.extract_strided_slice %519 {offsets = [0, 24], sizes = [32, 8], strides = [1, 1]} : vector<32x32xf32> to vector<32x8xf32>
    %598 = vector.shape_cast %597 : vector<32x8xf32> to vector<2x16x8xf32>
    %599 = vector.extract_strided_slice %520 {offsets = [0, 24], sizes = [32, 8], strides = [1, 1]} : vector<32x32xf32> to vector<32x8xf32>
    %600 = vector.shape_cast %599 : vector<32x8xf32> to vector<2x16x8xf32>
    "tpu.trace_start"() <{level = 10 : i32, message = "bqd,bkd->bqk"}> : () -> ()
    %cst_242 = arith.constant dense<0.000000e+00> : vector<2x8x16xf32>
    %601 = tpu.matmul %596, %598, %cst_242 {dimension_numbers = #tpu.dot_dimension_numbers<[2], [2], [1], [1], [0, 0, 0, 1, 1, 1], [0], [0]>} : vector<2x8x8xf32>, vector<2x16x8xf32>, vector<2x8x16xf32> -> vector<2x8x16xf32>
    "tpu.trace_stop"() : () -> ()
    %cst_243 = arith.constant 0.353553385 : f32
    %602 = vector.broadcast %cst_243 : f32 to vector<2x8x16xf32>
    %603 = arith.mulf %601, %602 : vector<2x8x16xf32>
    %cst_244 = arith.constant dense<0xFF800000> : vector<2x8xf32>
    %604 = vector.multi_reduction <maximumf>, %603, %cst_244 [2] : vector<2x8x16xf32> to vector<2x8xf32>
    %605 = vector.shape_cast %604 : vector<2x8xf32> to vector<2x8x1xf32>
    %606 = vector.broadcast %605 : vector<2x8x1xf32> to vector<2x8x16xf32>
    %607 = arith.subf %603, %606 : vector<2x8x16xf32>
    %608 = math.exp %607 : vector<2x8x16xf32>
    %cst_245 = arith.constant dense<0.000000e+00> : vector<2x8xf32>
    %609 = vector.multi_reduction <add>, %608, %cst_245 [2] : vector<2x8x16xf32> to vector<2x8xf32>
    %610 = vector.shape_cast %609 : vector<2x8xf32> to vector<2x8x1xf32>
    %611 = vector.broadcast %610 : vector<2x8x1xf32> to vector<2x8x16xf32>
    %612 = arith.divf %608, %611 : vector<2x8x16xf32>
    "tpu.trace_start"() <{level = 10 : i32, message = "bqk,bkd->bqd"}> : () -> ()
    %cst_246 = arith.constant dense<0.000000e+00> : vector<2x8x8xf32>
    %613 = tpu.matmul %612, %600, %cst_246 {dimension_numbers = #tpu.dot_dimension_numbers<[2], [1], [1], [2], [0, 0, 0, 1, 1, 2], [0], [0]>} : vector<2x8x16xf32>, vector<2x16x8xf32>, vector<2x8x8xf32> -> vector<2x8x8xf32>
    "tpu.trace_stop"() : () -> ()
    %614 = vector.shape_cast %613 : vector<2x8x8xf32> to vector<16x8xf32>
    %615 = vector.extract_strided_slice %522 {offsets = [24, 0], sizes = [8, 32], strides = [1, 1]} : vector<32x32xf32> to vector<8x32xf32>
    %cst_247 = arith.constant dense<0.000000e+00> : vector<16x32xf32>
    %616 = tpu.matmul %614, %615, %cst_247 {dimension_numbers = #tpu.dot_dimension_numbers<[1], [0], [0], [1], [0, 0, 1, 1], [], []>} : vector<16x8xf32>, vector<8x32xf32>, vector<16x32xf32> -> vector<16x32xf32>
    %617 = arith.addf %594, %616 : vector<16x32xf32>
    %618 = vector.broadcast %524 : vector<1x32xf32> to vector<16x32xf32>
    %619 = arith.addf %617, %618 : vector<16x32xf32>
    %620 = arith.addf %619, %512 : vector<16x32xf32>
    %621 = vector.extract_strided_slice %380 {offsets = [1, 0], sizes = [1, 32], strides = [1, 1]} : vector<3x32xf32> to vector<1x32xf32>
    %622 = vector.extract_strided_slice %382 {offsets = [1, 0], sizes = [1, 32], strides = [1, 1]} : vector<3x32xf32> to vector<1x32xf32>
    %cst_248 = arith.constant dense<0.000000e+00> : vector<16xf32>
    %623 = vector.multi_reduction <add>, %620, %cst_248 [1] : vector<16x32xf32> to vector<16xf32>
    %624 = vector.shape_cast %623 : vector<16xf32> to vector<16x1xf32>
    %cst_249 = arith.constant 3.200000e+01 : f32
    %625 = vector.broadcast %cst_249 : f32 to vector<16x1xf32>
    %626 = arith.divf %624, %625 : vector<16x1xf32>
    %627 = vector.broadcast %626 : vector<16x1xf32> to vector<16x32xf32>
    %628 = arith.subf %620, %627 : vector<16x32xf32>
    %629 = arith.mulf %628, %628 : vector<16x32xf32>
    %cst_250 = arith.constant dense<0.000000e+00> : vector<16xf32>
    %630 = vector.multi_reduction <add>, %629, %cst_250 [1] : vector<16x32xf32> to vector<16xf32>
    %631 = vector.shape_cast %630 : vector<16xf32> to vector<16x1xf32>
    %cst_251 = arith.constant 3.200000e+01 : f32
    %632 = vector.broadcast %cst_251 : f32 to vector<16x1xf32>
    %633 = arith.divf %631, %632 : vector<16x1xf32>
    %634 = vector.broadcast %626 : vector<16x1xf32> to vector<16x32xf32>
    %635 = arith.subf %620, %634 : vector<16x32xf32>
    %cst_252 = arith.constant 9.99999974E-6 : f32
    %636 = vector.broadcast %cst_252 : f32 to vector<16x1xf32>
    %637 = arith.addf %633, %636 : vector<16x1xf32>
    %638 = math.rsqrt %637 : vector<16x1xf32>
    %639 = vector.broadcast %638 : vector<16x1xf32> to vector<16x32xf32>
    %640 = arith.mulf %635, %639 : vector<16x32xf32>
    %641 = vector.broadcast %621 : vector<1x32xf32> to vector<16x32xf32>
    %642 = arith.mulf %640, %641 : vector<16x32xf32>
    %643 = vector.broadcast %622 : vector<1x32xf32> to vector<16x32xf32>
    %644 = arith.addf %642, %643 : vector<16x32xf32>
    %c1_253 = arith.constant 1 : index
    %c0_254 = arith.constant 0 : index
    %c0_255 = arith.constant 0 : index
    %645 = vector.load %arg14[%c1_253, %c0_254, %c0_255] : memref<2x32x64xf32, #tpu.memory_space<vmem>>, vector<1x32x64xf32>
    %646 = vector.shape_cast %645 : vector<1x32x64xf32> to vector<32x64xf32>
    %cst_256 = arith.constant dense<0.000000e+00> : vector<16x64xf32>
    %647 = tpu.matmul %644, %646, %cst_256 {dimension_numbers = #tpu.dot_dimension_numbers<[1], [0], [0], [1], [0, 0, 1, 1], [], []>} : vector<16x32xf32>, vector<32x64xf32>, vector<16x64xf32> -> vector<16x64xf32>
    %c1_257 = arith.constant 1 : index
    %c0_258 = arith.constant 0 : index
    %c0_259 = arith.constant 0 : index
    %648 = vector.load %arg15[%c1_257, %c0_258, %c0_259] : memref<2x1x64xf32, #tpu.memory_space<vmem>>, vector<1x1x64xf32>
    %649 = vector.shape_cast %648 : vector<1x1x64xf32> to vector<1x64xf32>
    %650 = vector.broadcast %649 : vector<1x64xf32> to vector<16x64xf32>
    %651 = arith.addf %647, %650 : vector<16x64xf32>
    %cst_260 = arith.constant 0.000000e+00 : f32
    %652 = vector.broadcast %cst_260 : f32 to vector<16x64xf32>
    %653 = arith.maximumf %651, %652 : vector<16x64xf32>
    %c1_261 = arith.constant 1 : index
    %c0_262 = arith.constant 0 : index
    %c0_263 = arith.constant 0 : index
    %654 = vector.load %arg16[%c1_261, %c0_262, %c0_263] : memref<2x64x32xf32, #tpu.memory_space<vmem>>, vector<1x64x32xf32>
    %655 = vector.shape_cast %654 : vector<1x64x32xf32> to vector<64x32xf32>
    %cst_264 = arith.constant dense<0.000000e+00> : vector<16x32xf32>
    %656 = tpu.matmul %653, %655, %cst_264 {dimension_numbers = #tpu.dot_dimension_numbers<[1], [0], [0], [1], [0, 0, 1, 1], [], []>} : vector<16x64xf32>, vector<64x32xf32>, vector<16x32xf32> -> vector<16x32xf32>
    %c1_265 = arith.constant 1 : index
    %c0_266 = arith.constant 0 : index
    %c0_267 = arith.constant 0 : index
    %657 = vector.load %arg17[%c1_265, %c0_266, %c0_267] : memref<2x1x32xf32, #tpu.memory_space<vmem>>, vector<1x1x32xf32>
    %658 = vector.shape_cast %657 : vector<1x1x32xf32> to vector<1x32xf32>
    %659 = vector.broadcast %658 : vector<1x32xf32> to vector<16x32xf32>
    %660 = arith.addf %656, %659 : vector<16x32xf32>
    %661 = arith.addf %660, %644 : vector<16x32xf32>
    %662 = vector.extract_strided_slice %380 {offsets = [2, 0], sizes = [1, 32], strides = [1, 1]} : vector<3x32xf32> to vector<1x32xf32>
    %663 = vector.extract_strided_slice %382 {offsets = [2, 0], sizes = [1, 32], strides = [1, 1]} : vector<3x32xf32> to vector<1x32xf32>
    %cst_268 = arith.constant dense<0.000000e+00> : vector<16xf32>
    %664 = vector.multi_reduction <add>, %661, %cst_268 [1] : vector<16x32xf32> to vector<16xf32>
    %665 = vector.shape_cast %664 : vector<16xf32> to vector<16x1xf32>
    %cst_269 = arith.constant 3.200000e+01 : f32
    %666 = vector.broadcast %cst_269 : f32 to vector<16x1xf32>
    %667 = arith.divf %665, %666 : vector<16x1xf32>
    %668 = vector.broadcast %667 : vector<16x1xf32> to vector<16x32xf32>
    %669 = arith.subf %661, %668 : vector<16x32xf32>
    %670 = arith.mulf %669, %669 : vector<16x32xf32>
    %cst_270 = arith.constant dense<0.000000e+00> : vector<16xf32>
    %671 = vector.multi_reduction <add>, %670, %cst_270 [1] : vector<16x32xf32> to vector<16xf32>
    %672 = vector.shape_cast %671 : vector<16xf32> to vector<16x1xf32>
    %cst_271 = arith.constant 3.200000e+01 : f32
    %673 = vector.broadcast %cst_271 : f32 to vector<16x1xf32>
    %674 = arith.divf %672, %673 : vector<16x1xf32>
    %675 = vector.broadcast %667 : vector<16x1xf32> to vector<16x32xf32>
    %676 = arith.subf %661, %675 : vector<16x32xf32>
    %cst_272 = arith.constant 9.99999974E-6 : f32
    %677 = vector.broadcast %cst_272 : f32 to vector<16x1xf32>
    %678 = arith.addf %674, %677 : vector<16x1xf32>
    %679 = math.rsqrt %678 : vector<16x1xf32>
    %680 = vector.broadcast %679 : vector<16x1xf32> to vector<16x32xf32>
    %681 = arith.mulf %676, %680 : vector<16x32xf32>
    %682 = vector.broadcast %662 : vector<1x32xf32> to vector<16x32xf32>
    %683 = arith.mulf %681, %682 : vector<16x32xf32>
    %684 = vector.broadcast %663 : vector<1x32xf32> to vector<16x32xf32>
    %685 = arith.addf %683, %684 : vector<16x32xf32>
    %686 = vector.shape_cast %685 : vector<16x32xf32> to vector<2x8x32xf32>
    %687 = vector.shape_cast %70 : vector<8x32xf32> to vector<1x8x32xf32>
    %688 = vector.broadcast %687 : vector<1x8x32xf32> to vector<2x8x32xf32>
    %689 = arith.mulf %686, %688 : vector<2x8x32xf32>
    %cst_273 = arith.constant dense<0.000000e+00> : vector<2x8xf32>
    %690 = vector.multi_reduction <add>, %689, %cst_273 [2] : vector<2x8x32xf32> to vector<2x8xf32>
    %c0_274 = arith.constant 0 : index
    %c0_275 = arith.constant 0 : index
    %691 = vector.load %arg21[%c0_274, %c0_275] : memref<2x8xf32, #tpu.memory_space<vmem>>, vector<2x8xf32>
    tpu.vector_store %arg21[%c0_274, %c0_275], %690 {strides = array<i32>} : memref<2x8xf32, #tpu.memory_space<vmem>>, vector<2x8xf32>,
    return
  }
}

</mosaic_0001>

<llo_original>
// kernel: lamp_forward.1
$region0: #{lamp_forward.1}
  #allocation0 [shape = 'u32[]', space=smem, size = 0x4, offset = 0x4, fixed_abs, tag = 'smem constant byte address 0x4 - core index']
  #allocation1 [shape = 'u32[72,128]{1,0:T(1,128)}', space=vmem, size = 0x9000, scoped, tag = 'internal scratch']
  %s0 = inlined_call_operand.vmem [shape: f32[128,27], index: 0, kind: input, shape index: {}]
  %s1 = inlined_call_operand.vmem [shape: f32[27,16], index: 1, kind: input, shape index: {}]
  %s2 = inlined_call_operand.vmem [shape: f32[1,16], index: 2, kind: input, shape index: {}]
  %s3 = inlined_call_operand.vmem [shape: f32[9,32,128], index: 3, kind: input, shape index: {}]
  %s4 = inlined_call_operand.vmem [shape: f32[144,32], index: 4, kind: input, shape index: {}]
  %s5 = inlined_call_operand.vmem [shape: f32[1,32], index: 5, kind: input, shape index: {}]
  %s6 = inlined_call_operand.vmem [shape: f32[8,32], index: 6, kind: input, shape index: {}]
  %s7 = inlined_call_operand.vmem [shape: f32[2,32,96], index: 7, kind: input, shape index: {}]
  %s8 = inlined_call_operand.vmem [shape: f32[2,32,32], index: 8, kind: input, shape index: {}]
  %s9 = inlined_call_operand.vmem [shape: f32[2,1,32], index: 9, kind: input, shape index: {}]
  %s10 = inlined_call_operand.vmem [shape: f32[2,32,32], index: 10, kind: input, shape index: {}]
  %s11 = inlined_call_operand.vmem [shape: f32[2,32,64], index: 11, kind: input, shape index: {}]
  %s12 = inlined_call_operand.vmem [shape: f32[2,32,32], index: 12, kind: input, shape index: {}]
  %s13 = inlined_call_operand.vmem [shape: f32[2,1,32], index: 13, kind: input, shape index: {}]
  %s14 = inlined_call_operand.vmem [shape: f32[2,32,64], index: 14, kind: input, shape index: {}]
  %s15 = inlined_call_operand.vmem [shape: f32[2,1,64], index: 15, kind: input, shape index: {}]
  %s16 = inlined_call_operand.vmem [shape: f32[2,64,32], index: 16, kind: input, shape index: {}]
  %s17 = inlined_call_operand.vmem [shape: f32[2,1,32], index: 17, kind: input, shape index: {}]
  %s18 = inlined_call_operand.vmem [shape: f32[2,3,32], index: 18, kind: input, shape index: {}]
  %s19 = inlined_call_operand.vmem [shape: f32[2,3,32], index: 19, kind: input, shape index: {}]
  %s20 = inlined_call_operand.hbm [shape: f32[32,32], index: 20, kind: output, shape index: {0}]
  %s21 = inlined_call_operand.hbm [shape: f32[2,8], index: 21, kind: output, shape index: {1}]
  %22 = xla_tuple %s20, %s21
  %s23 = sld [smem:[#allocation0]]
  $region98: #{lamp_forward.1} parent=0
    _
  %s25 = ssub.s32 1, %s23
  %s26 = scalar_select 0, %s25, %s23
  $region1: #{lamp_forward.1} parent=0
    #allocation2 [shape = 'u8[16384]{0}', space=vmem, size = 0x4000, scoped, tag = 'output window, operand 0, single buffered']
    #allocation3 [shape = 's32[1]{0}', space=sflag, size = 0x4, scoped, tag = 'scoped memory for lamp_forward.1']
    #allocation4 [shape = 'u8[1024]{0}', space=vmem, size = 0x400, scoped, tag = 'output window, operand 1, single buffered']
    #allocation5 [shape = 's32[1]{0}', space=sflag, size = 0x4, scoped, tag = 'scoped memory for lamp_forward.1']
    %27 = vsyncpa [#allocation3], 0
    %28 = vsyncpa [#allocation5], 0
    // Predicated region
    $region2: #{lamp_forward.1} parent=1 // pred_check
      _
    $region3: #{lamp_forward.1} parent=1 // pred_check_branch
      %30 = sbr.rel (0) target = $region5
    $region4: #{lamp_forward.1} parent=1 // pred_region
      _
    $region5: #{lamp_forward.1} parent=1 // pred_fallthru
      _
    // Predicated region
    $region6: #{lamp_forward.1} parent=1 // pred_check
      _
    $region7: #{lamp_forward.1} parent=1 // pred_check_branch
      %32 = sbr.rel (0) target = $region9
    $region8: #{lamp_forward.1} parent=1 // pred_region
      _
    $region9: #{lamp_forward.1} parent=1 // pred_fallthru
      _
    // Predicated region
    $region10: #{lamp_forward.1} parent=1 // pred_check
      _
    $region11: #{lamp_forward.1} parent=1 // pred_check_branch
      %34 = sbr.rel (0) target = $region13
    $region12: #{lamp_forward.1} parent=1 // pred_region
      _
    $region13: #{lamp_forward.1} parent=1 // pred_fallthru
      _
    // Predicated region
    $region14: #{lamp_forward.1} parent=1 // pred_check
      _
    $region15: #{lamp_forward.1} parent=1 // pred_check_branch
      %36 = sbr.rel (0) target = $region17
    $region16: #{lamp_forward.1} parent=1 // pred_region
      _
    $region17: #{lamp_forward.1} parent=1 // pred_fallthru
      _
    // Predicated region
    $region18: #{lamp_forward.1} parent=1 // pred_check
      _
    $region19: #{lamp_forward.1} parent=1 // pred_check_branch
      %38 = sbr.rel (0) target = $region21
    $region20: #{lamp_forward.1} parent=1 // pred_region
      _
    $region21: #{lamp_forward.1} parent=1 // pred_fallthru
      _
    // Predicated region
    $region22: #{lamp_forward.1} parent=1 // pred_check
      _
    $region23: #{lamp_forward.1} parent=1 // pred_check_branch
      %40 = sbr.rel (0) target = $region25
    $region24: #{lamp_forward.1} parent=1 // pred_region
      _
    $region25: #{lamp_forward.1} parent=1 // pred_fallthru
      _
    // Predicated region
    $region26: #{lamp_forward.1} parent=1 // pred_check
      _
    $region27: #{lamp_forward.1} parent=1 // pred_check_branch
      %42 = sbr.rel (0) target = $region29
    $region28: #{lamp_forward.1} parent=1 // pred_region
      _
    $region29: #{lamp_forward.1} parent=1 // pred_fallthru
      _
    // Predicated region
    $region30: #{lamp_forward.1} parent=1 // pred_check
      _
    $region31: #{lamp_forward.1} parent=1 // pred_check_branch
      %44 = sbr.rel (0) target = $region33
    $region32: #{lamp_forward.1} parent=1 // pred_region
      _
    $region33: #{lamp_forward.1} parent=1 // pred_fallthru
      _
    // Predicated region
    $region34: #{lamp_forward.1} parent=1 // pred_check
      _
    $region35: #{lamp_forward.1} parent=1 // pred_check_branch
      %46 = sbr.rel (0) target = $region37
    $region36: #{lamp_forward.1} parent=1 // pred_region
      _
    $region37: #{lamp_forward.1} parent=1 // pred_fallthru
      _
    // Predicated region
    $region38: #{lamp_forward.1} parent=1 // pred_check
      _
    $region39: #{lamp_forward.1} parent=1 // pred_check_branch
      %48 = sbr.rel (0) target = $region41
    $region40: #{lamp_forward.1} parent=1 // pred_region
      _
    $region41: #{lamp_forward.1} parent=1 // pred_fallthru
      _
    // Predicated region
    $region42: #{lamp_forward.1} parent=1 // pred_check
      _
    $region43: #{lamp_forward.1} parent=1 // pred_check_branch
      %50 = sbr.rel (0) target = $region45
    $region44: #{lamp_forward.1} parent=1 // pred_region
      _
    $region45: #{lamp_forward.1} parent=1 // pred_fallthru
      _
    // Predicated region
    $region46: #{lamp_forward.1} parent=1 // pred_check
      _
    $region47: #{lamp_forward.1} parent=1 // pred_check_branch
      %52 = sbr.rel (0) target = $region49
    $region48: #{lamp_forward.1} parent=1 // pred_region
      _
    $region49: #{lamp_forward.1} parent=1 // pred_fallthru
      _
    // Predicated region
    $region50: #{lamp_forward.1} parent=1 // pred_check
      _
    $region51: #{lamp_forward.1} parent=1 // pred_check_branch
      %54 = sbr.rel (0) target = $region53
    $region52: #{lamp_forward.1} parent=1 // pred_region
      _
    $region53: #{lamp_forward.1} parent=1 // pred_fallthru
      _
    // Predicated region
    $region54: #{lamp_forward.1} parent=1 // pred_check
      _
    $region55: #{lamp_forward.1} parent=1 // pred_check_branch
      %56 = sbr.rel (0) target = $region57
    $region56: #{lamp_forward.1} parent=1 // pred_region
      _
    $region57: #{lamp_forward.1} parent=1 // pred_fallthru
      _
    // Predicated region
    $region58: #{lamp_forward.1} parent=1 // pred_check
      _
    $region59: #{lamp_forward.1} parent=1 // pred_check_branch
      %58 = sbr.rel (0) target = $region61
    $region60: #{lamp_forward.1} parent=1 // pred_region
      _
    $region61: #{lamp_forward.1} parent=1 // pred_fallthru
      _
    // Predicated region
    $region62: #{lamp_forward.1} parent=1 // pred_check
      _
    $region63: #{lamp_forward.1} parent=1 // pred_check_branch
      %60 = sbr.rel (0) target = $region65
    $region64: #{lamp_forward.1} parent=1 // pred_region
      _
    $region65: #{lamp_forward.1} parent=1 // pred_fallthru
      _
    // Predicated region
    $region66: #{lamp_forward.1} parent=1 // pred_check
      _
    $region67: #{lamp_forward.1} parent=1 // pred_check_branch
      %62 = sbr.rel (0) target = $region69
    $region68: #{lamp_forward.1} parent=1 // pred_region
      _
    $region69: #{lamp_forward.1} parent=1 // pred_fallthru
      _
    // Predicated region
    $region70: #{lamp_forward.1} parent=1 // pred_check
      _
    $region71: #{lamp_forward.1} parent=1 // pred_check_branch
      %64 = sbr.rel (0) target = $region73
    $region72: #{lamp_forward.1} parent=1 // pred_region
      _
    $region73: #{lamp_forward.1} parent=1 // pred_fallthru
      _
    // Predicated region
    $region74: #{lamp_forward.1} parent=1 // pred_check
      _
    $region75: #{lamp_forward.1} parent=1 // pred_check_branch
      %66 = sbr.rel (0) target = $region77
    $region76: #{lamp_forward.1} parent=1 // pred_region
      _
    $region77: #{lamp_forward.1} parent=1 // pred_fallthru
      _
    // Predicated region
    $region78: #{lamp_forward.1} parent=1 // pred_check
      _
    $region79: #{lamp_forward.1} parent=1 // pred_check_branch
      %68 = sbr.rel (0) target = $region81
    $region80: #{lamp_forward.1} parent=1 // pred_region
      _
    $region81: #{lamp_forward.1} parent=1 // pred_fallthru
      _
    %v69 = vld [vmem:[%s0] sm:$0xff]
    %v70 = vld [vmem:[%s0 + $0x8] sm:$0xff]
    %v71 = vld [vmem:[%s0 + $0x10] sm:$0xff]
    %v72 = vld [vmem:[%s0 + $0x18] sm:$0xff]
    %v73 = vld [vmem:[%s0 + $0x20] sm:$0xff]
    %v74 = vld [vmem:[%s0 + $0x28] sm:$0xff]
    %v75 = vld [vmem:[%s0 + $0x30] sm:$0xff]
    %v76 = vld [vmem:[%s0 + $0x38] sm:$0xff]
    %v77 = vld [vmem:[%s0 + $0x40] sm:$0xff]
    %v78 = vld [vmem:[%s0 + $0x48] sm:$0xff]
    %v79 = vld [vmem:[%s0 + $0x50] sm:$0xff]
    %v80 = vld [vmem:[%s0 + $0x58] sm:$0xff]
    %v81 = vld [vmem:[%s0 + $0x60] sm:$0xff]
    %v82 = vld [vmem:[%s0 + $0x68] sm:$0xff]
    %v83 = vld [vmem:[%s0 + $0x70] sm:$0xff]
    %v84 = vld [vmem:[%s0 + $0x78] sm:$0xff]
    %v85 = vld [vmem:[%s1] sm:$0xff]
    %v86 = vld [vmem:[%s1 + $0x8] sm:$0xff]
    %v87 = vld [vmem:[%s1 + $0x10] sm:$0xff]
    %v88 = vld [vmem:[%s1 + $0x18] sm:$0x7]
    %v89 = vld [vmem:[%s2] sm:$0x1]
    %v91 = vperm.slane %v89, 0
    %vm93 = vcmask 220160
    %v95 = vsel %vm93, %v69, 0
    %v98 = vsel %vm93, %v70, 0
    %v101 = vsel %vm93, %v71, 0
    %v104 = vsel %vm93, %v72, 0
    %v107 = vsel %vm93, %v73, 0
    %v110 = vsel %vm93, %v74, 0
    %v113 = vsel %vm93, %v75, 0
    %v116 = vsel %vm93, %v76, 0
    %v119 = vsel %vm93, %v77, 0
    %v122 = vsel %vm93, %v78, 0
    %v125 = vsel %vm93, %v79, 0
    %v128 = vsel %vm93, %v80, 0
    %v131 = vsel %vm93, %v81, 0
    %v134 = vsel %vm93, %v82, 0
    %v137 = vsel %vm93, %v83, 0
    %v140 = vsel %vm93, %v84, 0
    %vm142 = vcmask 1042432
    %v144 = vsel %vm142, %v88, 0
    %146 = vmatpush.msra.mxu0 0.0
    %147 = vmatpush.msra.mxu0 0.0
    %148 = vmatpush.msra.mxu0 0.0
    %149 = vmatpush.msra.mxu0 0.0
    %150 = vmatpush.msra.mxu0 0.0
    %151 = vmatpush.msra.mxu0 0.0
    %152 = vmatpush.msra.mxu0 0.0
    %153 = vmatpush.msra.mxu0 0.0
    %154 = vmatpush.msra.mxu0 0.0
    %155 = vmatpush.msra.mxu0 0.0
    %156 = vmatpush.msra.mxu0 0.0
    %157 = vmatpush.msra.mxu0 0.0
    %158 = vmatpush.msra.mxu0 %v144
    %159 = vmatpush.msra.mxu0 %v87
    %160 = vmatpush.msra.mxu0 %v86
    %161 = vmatpush.msra.mxu0 %v85
    %162 = vmatmul.f32.gmra.mxu0 %v95
    %v163 = vpop.f32.mrf.mxu0
    %v164 = vadd.f32 %v91, %v163
    %165 = vmatmul.f32.gmra.mxu0 %v98
    %v166 = vpop.f32.mrf.mxu0
    %v167 = vadd.f32 %v91, %v166
    %168 = vmatmul.f32.gmra.mxu0 %v101
    %v169 = vpop.f32.mrf.mxu0
    %v170 = vadd.f32 %v91, %v169
    %171 = vmatmul.f32.gmra.mxu0 %v104
    %v172 = vpop.f32.mrf.mxu0
    %v173 = vadd.f32 %v91, %v172
    %174 = vmatmul.f32.gmra.mxu0 %v107
    %v175 = vpop.f32.mrf.mxu0
    %v176 = vadd.f32 %v91, %v175
    %177 = vmatmul.f32.gmra.mxu0 %v110
    %v178 = vpop.f32.mrf.mxu0
    %v179 = vadd.f32 %v91, %v178
    %180 = vmatmul.f32.gmra.mxu0 %v113
    %v181 = vpop.f32.mrf.mxu0
    %v182 = vadd.f32 %v91, %v181
    %183 = vmatmul.f32.gmra.mxu0 %v116
    %v184 = vpop.f32.mrf.mxu0
    %v185 = vadd.f32 %v91, %v184
    %186 = vmatmul.f32.gmra.mxu0 %v119
    %v187 = vpop.f32.mrf.mxu0
    %v188 = vadd.f32 %v91, %v187
    %189 = vmatmul.f32.gmra.mxu0 %v122
    %v190 = vpop.f32.mrf.mxu0
    %v191 = vadd.f32 %v91, %v190
    %192 = vmatmul.f32.gmra.mxu0 %v125
    %v193 = vpop.f32.mrf.mxu0
    %v194 = vadd.f32 %v91, %v193
    %195 = vmatmul.f32.gmra.mxu0 %v128
    %v196 = vpop.f32.mrf.mxu0
    %v197 = vadd.f32 %v91, %v196
    %198 = vmatmul.f32.gmra.mxu0 %v131
    %v199 = vpop.f32.mrf.mxu0
    %v200 = vadd.f32 %v91, %v199
    %201 = vmatmul.f32.gmra.mxu0 %v134
    %v202 = vpop.f32.mrf.mxu0
    %v203 = vadd.f32 %v91, %v202
    %204 = vmatmul.f32.gmra.mxu0 %v137
    %v205 = vpop.f32.mrf.mxu0
    %v206 = vadd.f32 %v91, %v205
    %207 = vmatmul.f32.gmra.mxu0 %v140
    %v208 = vpop.f32.mrf.mxu0
    %v209 = vadd.f32 %v91, %v208
    %210 = vdwg.mxu0
    %v211 = vmax.f32 %v164, 0.0
    %v212 = vmax.f32 %v167, 0.0
    %v213 = vmax.f32 %v170, 0.0
    %v214 = vmax.f32 %v173, 0.0
    %v215 = vmax.f32 %v176, 0.0
    %v216 = vmax.f32 %v179, 0.0
    %v217 = vmax.f32 %v182, 0.0
    %v218 = vmax.f32 %v185, 0.0
    %v219 = vmax.f32 %v188, 0.0
    %v220 = vmax.f32 %v191, 0.0
    %v221 = vmax.f32 %v194, 0.0
    %v222 = vmax.f32 %v197, 0.0
    %v223 = vmax.f32 %v200, 0.0
    %v224 = vmax.f32 %v203, 0.0
    %v225 = vmax.f32 %v206, 0.0
    %v226 = vmax.f32 %v209, 0.0
    %v227 = vld [vmem:[%s4] sm:$0xff]
    %v228 = vld [vmem:[%s4 + $0x8] sm:$0xff]
    %v229 = vld [vmem:[%s4 + $0x10] sm:$0xff]
    %v230 = vld [vmem:[%s4 + $0x18] sm:$0xff]
    %v231 = vld [vmem:[%s4 + $0x20] sm:$0xff]
    %v232 = vld [vmem:[%s4 + $0x28] sm:$0xff]
    %v233 = vld [vmem:[%s4 + $0x30] sm:$0xff]
    %v234 = vld [vmem:[%s4 + $0x38] sm:$0xff]
    %v235 = vld [vmem:[%s4 + $0x40] sm:$0xff]
    %v236 = vld [vmem:[%s4 + $0x48] sm:$0xff]
    %v237 = vld [vmem:[%s4 + $0x50] sm:$0xff]
    %v238 = vld [vmem:[%s4 + $0x58] sm:$0xff]
    %v239 = vld [vmem:[%s4 + $0x60] sm:$0xff]
    %v240 = vld [vmem:[%s4 + $0x68] sm:$0xff]
    %v241 = vld [vmem:[%s4 + $0x70] sm:$0xff]
    %v242 = vld [vmem:[%s4 + $0x78] sm:$0xff]
    %v243 = vld [vmem:[%s4 + $0x80] sm:$0xff]
    %v244 = vld [vmem:[%s4 + $0x88] sm:$0xff]
    %v245 = vld [vmem:[%s3] sm:$0xff]
    %v246 = vld [vmem:[%s3 + $0x8] sm:$0xff]
    %v247 = vld [vmem:[%s3 + $0x10] sm:$0xff]
    %v248 = vld [vmem:[%s3 + $0x18] sm:$0xff]
    %249 = vmatpush.msra.mxu0 %v226
    %250 = vmatpush.msra.mxu0 %v225
    %251 = vmatpush.msra.mxu0 %v224
    %252 = vmatpush.msra.mxu0 %v223
    %253 = vmatpush.msra.mxu0 %v222
    %254 = vmatpush.msra.mxu0 %v221
    %255 = vmatpush.msra.mxu0 %v220
    %256 = vmatpush.msra.mxu0 %v219
    %257 = vmatpush.msra.mxu0 %v218
    %258 = vmatpush.msra.mxu0 %v217
    %259 = vmatpush.msra.mxu0 %v216
    %260 = vmatpush.msra.mxu0 %v215
    %261 = vmatpush.msra.mxu0 %v214
    %262 = vmatpush.msra.mxu0 %v213
    %263 = vmatpush.msra.mxu0 %v212
    %264 = vmatpush.msra.mxu0 %v211
    %265 = vmatmul.f32.gmra.mxu0 %v245
    %v266 = vpop.f32.mrf.mxu0
    %v267 = vadd.f32 0.0, %v266
    %268 = vmatmul.f32.gmra.mxu0 %v246
    %v269 = vpop.f32.mrf.mxu0
    %v270 = vadd.f32 0.0, %v269
    %271 = vmatmul.f32.gmra.mxu0 %v247
    %v272 = vpop.f32.mrf.mxu0
    %v273 = vadd.f32 0.0, %v272
    %274 = vmatmul.f32.gmra.mxu0 %v248
    %v275 = vpop.f32.mrf.mxu0
    %v276 = vadd.f32 0.0, %v275
    %277 = vdwg.mxu0
    %s278 = scalar_lea.vmem %s3, 32
    %v279 = vld [vmem:[%s278] sm:$0xff]
    %v280 = vld [vmem:[%s278 + $0x8] sm:$0xff]
    %v281 = vld [vmem:[%s278 + $0x10] sm:$0xff]
    %v282 = vld [vmem:[%s278 + $0x18] sm:$0xff]
    %283 = vmatpush.msra.mxu0 %v226
    %284 = vmatpush.msra.mxu0 %v225
    %285 = vmatpush.msra.mxu0 %v224
    %286 = vmatpush.msra.mxu0 %v223
    %287 = vmatpush.msra.mxu0 %v222
    %288 = vmatpush.msra.mxu0 %v221
    %289 = vmatpush.msra.mxu0 %v220
    %290 = vmatpush.msra.mxu0 %v219
    %291 = vmatpush.msra.mxu0 %v218
    %292 = vmatpush.msra.mxu0 %v217
    %293 = vmatpush.msra.mxu0 %v216
    %294 = vmatpush.msra.mxu0 %v215
    %295 = vmatpush.msra.mxu0 %v214
    %296 = vmatpush.msra.mxu0 %v213
    %297 = vmatpush.msra.mxu0 %v212
    %298 = vmatpush.msra.mxu0 %v211
    %299 = vmatmul.f32.gmra.mxu0 %v279
    %v300 = vpop.f32.mrf.mxu0
    %v301 = vadd.f32 0.0, %v300
    %302 = vmatmul.f32.gmra.mxu0 %v280
    %v303 = vpop.f32.mrf.mxu0
    %v304 = vadd.f32 0.0, %v303
    %305 = vmatmul.f32.gmra.mxu0 %v281
    %v306 = vpop.f32.mrf.mxu0
    %v307 = vadd.f32 0.0, %v306
    %308 = vmatmul.f32.gmra.mxu0 %v282
    %v309 = vpop.f32.mrf.mxu0
    %v310 = vadd.f32 0.0, %v309
    %311 = vdwg.mxu0
    %vm312 = vcmask 130048
    %v314 = vsel %vm312, %v301, 0
    %v317 = vsel %vm312, %v304, 0
    %v320 = vsel %vm312, %v307, 0
    %v323 = vsel %vm312, %v310, 0
    %325 = vmatpush.msra.mxu0 0.0
    %326 = vmatpush.msra.mxu0 0.0
    %327 = vmatpush.msra.mxu0 0.0
    %328 = vmatpush.msra.mxu0 0.0
    %329 = vmatpush.msra.mxu0 0.0
    %330 = vmatpush.msra.mxu0 0.0
    %331 = vmatpush.msra.mxu0 0.0
    %332 = vmatpush.msra.mxu0 0.0
    %333 = vmatpush.msra.mxu0 0.0
    %334 = vmatpush.msra.mxu0 0.0
    %335 = vmatpush.msra.mxu0 0.0
    %336 = vmatpush.msra.mxu0 0.0
    %337 = vmatpush.msra.mxu0 0.0
    %338 = vmatpush.msra.mxu0 0.0
    %339 = vmatpush.msra.mxu0 %v230
    %340 = vmatpush.msra.mxu0 %v229
    %341 = vmatmul.f32.gmra.mxu0 %v314
    %v342 = vpop.f32.mrf.mxu0
    %v343 = vadd.f32 0.0, %v342
    %344 = vmatmul.f32.gmra.mxu0 %v317
    %v345 = vpop.f32.mrf.mxu0
    %v346 = vadd.f32 0.0, %v345
    %347 = vmatmul.f32.gmra.mxu0 %v320
    %v348 = vpop.f32.mrf.mxu0
    %v349 = vadd.f32 0.0, %v348
    %350 = vmatmul.f32.gmra.mxu0 %v323
    %v351 = vpop.f32.mrf.mxu0
    %v352 = vadd.f32 0.0, %v351
    %353 = vdwg.mxu0
    %v355 = vsel %vm312, %v267, 0
    %v358 = vsel %vm312, %v270, 0
    %v361 = vsel %vm312, %v273, 0
    %v364 = vsel %vm312, %v276, 0
    %366 = vmatpush.msra.mxu0 0.0
    %367 = vmatpush.msra.mxu0 0.0
    %368 = vmatpush.msra.mxu0 0.0
    %369 = vmatpush.msra.mxu0 0.0
    %370 = vmatpush.msra.mxu0 0.0
    %371 = vmatpush.msra.mxu0 0.0
    %372 = vmatpush.msra.mxu0 0.0
    %373 = vmatpush.msra.mxu0 0.0
    %374 = vmatpush.msra.mxu0 0.0
    %375 = vmatpush.msra.mxu0 0.0
    %376 = vmatpush.msra.mxu0 0.0
    %377 = vmatpush.msra.mxu0 0.0
    %378 = vmatpush.msra.mxu0 0.0
    %379 = vmatpush.msra.mxu0 0.0
    %380 = vmatpush.msra.mxu0 %v228
    %381 = vmatpush.msra.mxu0 %v227
    %382 = vmatmul.f32.gmra.mxu0 %v355
    %v383 = vpop.f32.mrf.mxu0
    %v384 = vadd.f32 %v343, %v383
    %385 = vmatmul.f32.gmra.mxu0 %v358
    %v386 = vpop.f32.mrf.mxu0
    %v387 = vadd.f32 %v346, %v386
    %388 = vmatmul.f32.gmra.mxu0 %v361
    %v389 = vpop.f32.mrf.mxu0
    %v390 = vadd.f32 %v349, %v389
    %391 = vmatmul.f32.gmra.mxu0 %v364
    %v392 = vpop.f32.mrf.mxu0
    %v393 = vadd.f32 %v352, %v392
    %394 = vdwg.mxu0
    %s395 = scalar_lea.vmem %s3, 64
    %v396 = vld [vmem:[%s395] sm:$0xff]
    %v397 = vld [vmem:[%s395 + $0x8] sm:$0xff]
    %v398 = vld [vmem:[%s395 + $0x10] sm:$0xff]
    %v399 = vld [vmem:[%s395 + $0x18] sm:$0xff]
    %400 = vmatpush.msra.mxu0 %v226
    %401 = vmatpush.msra.mxu0 %v225
    %402 = vmatpush.msra.mxu0 %v224
    %403 = vmatpush.msra.mxu0 %v223
    %404 = vmatpush.msra.mxu0 %v222
    %405 = vmatpush.msra.mxu0 %v221
    %406 = vmatpush.msra.mxu0 %v220
    %407 = vmatpush.msra.mxu0 %v219
    %408 = vmatpush.msra.mxu0 %v218
    %409 = vmatpush.msra.mxu0 %v217
    %410 = vmatpush.msra.mxu0 %v216
    %411 = vmatpush.msra.mxu0 %v215
    %412 = vmatpush.msra.mxu0 %v214
    %413 = vmatpush.msra.mxu0 %v213
    %414 = vmatpush.msra.mxu0 %v212
    %415 = vmatpush.msra.mxu0 %v211
    %416 = vmatmul.f32.gmra.mxu0 %v396
    %v417 = vpop.f32.mrf.mxu0
    %v418 = vadd.f32 0.0, %v417
    %419 = vmatmul.f32.gmra.mxu0 %v397
    %v420 = vpop.f32.mrf.mxu0
    %v421 = vadd.f32 0.0, %v420
    %422 = vmatmul.f32.gmra.mxu0 %v398
    %v423 = vpop.f32.mrf.mxu0
    %v424 = vadd.f32 0.0, %v423
    %425 = vmatmul.f32.gmra.mxu0 %v399
    %v426 = vpop.f32.mrf.mxu0
    %v427 = vadd.f32 0.0, %v426
    %428 = vdwg.mxu0
    %v430 = vsel %vm312, %v418, 0
    %v433 = vsel %vm312, %v421, 0
    %v436 = vsel %vm312, %v424, 0
    %v439 = vsel %vm312, %v427, 0
    %441 = vmatpush.msra.mxu0 0.0
    %442 = vmatpush.msra.mxu0 0.0
    %443 = vmatpush.msra.mxu0 0.0
    %444 = vmatpush.msra.mxu0 0.0
    %445 = vmatpush.msra.mxu0 0.0
    %446 = vmatpush.msra.mxu0 0.0
    %447 = vmatpush.msra.mxu0 0.0
    %448 = vmatpush.msra.mxu0 0.0
    %449 = vmatpush.msra.mxu0 0.0
    %450 = vmatpush.msra.mxu0 0.0
    %451 = vmatpush.msra.mxu0 0.0
    %452 = vmatpush.msra.mxu0 0.0
    %453 = vmatpush.msra.mxu0 0.0
    %454 = vmatpush.msra.mxu0 0.0
    %455 = vmatpush.msra.mxu0 %v232
    %456 = vmatpush.msra.mxu0 %v231
    %457 = vmatmul.f32.gmra.mxu0 %v430
    %v458 = vpop.f32.mrf.mxu0
    %v459 = vadd.f32 0.0, %v458
    %460 = vmatmul.f32.gmra.mxu0 %v433
    %v461 = vpop.f32.mrf.mxu0
    %v462 = vadd.f32 0.0, %v461
    %463 = vmatmul.f32.gmra.mxu0 %v436
    %v464 = vpop.f32.mrf.mxu0
    %v465 = vadd.f32 0.0, %v464
    %466 = vmatmul.f32.gmra.mxu0 %v439
    %v467 = vpop.f32.mrf.mxu0
    %v468 = vadd.f32 0.0, %v467
    %469 = vdwg.mxu0
    %v470 = vadd.f32 %v384, %v459
    %v471 = vadd.f32 %v387, %v462
    %v472 = vadd.f32 %v390, %v465
    %v473 = vadd.f32 %v393, %v468
    %s474 = scalar_lea.vmem %s3, 96
    %v475 = vld [vmem:[%s474] sm:$0xff]
    %v476 = vld [vmem:[%s474 + $0x8] sm:$0xff]
    %v477 = vld [vmem:[%s474 + $0x10] sm:$0xff]
    %v478 = vld [vmem:[%s474 + $0x18] sm:$0xff]
    %479 = vmatpush.msra.mxu0 %v226
    %480 = vmatpush.msra.mxu0 %v225
    %481 = vmatpush.msra.mxu0 %v224
    %482 = vmatpush.msra.mxu0 %v223
    %483 = vmatpush.msra.mxu0 %v222
    %484 = vmatpush.msra.mxu0 %v221
    %485 = vmatpush.msra.mxu0 %v220
    %486 = vmatpush.msra.mxu0 %v219
    %487 = vmatpush.msra.mxu0 %v218
    %488 = vmatpush.msra.mxu0 %v217
    %489 = vmatpush.msra.mxu0 %v216
    %490 = vmatpush.msra.mxu0 %v215
    %491 = vmatpush.msra.mxu0 %v214
    %492 = vmatpush.msra.mxu0 %v213
    %493 = vmatpush.msra.mxu0 %v212
    %494 = vmatpush.msra.mxu0 %v211
    %495 = vmatmul.f32.gmra.mxu0 %v475
    %v496 = vpop.f32.mrf.mxu0
    %v497 = vadd.f32 0.0, %v496
    %498 = vmatmul.f32.gmra.mxu0 %v476
    %v499 = vpop.f32.mrf.mxu0
    %v500 = vadd.f32 0.0, %v499
    %501 = vmatmul.f32.gmra.mxu0 %v477
    %v502 = vpop.f32.mrf.mxu0
    %v503 = vadd.f32 0.0, %v502
    %504 = vmatmul.f32.gmra.mxu0 %v478
    %v505 = vpop.f32.mrf.mxu0
    %v506 = vadd.f32 0.0, %v505
    %507 = vdwg.mxu0
    %v509 = vsel %vm312, %v497, 0
    %v512 = vsel %vm312, %v500, 0
    %v515 = vsel %vm312, %v503, 0
    %v518 = vsel %vm312, %v506, 0
    %520 = vmatpush.msra.mxu0 0.0
    %521 = vmatpush.msra.mxu0 0.0
    %522 = vmatpush.msra.mxu0 0.0
    %523 = vmatpush.msra.mxu0 0.0
    %524 = vmatpush.msra.mxu0 0.0
    %525 = vmatpush.msra.mxu0 0.0
    %526 = vmatpush.msra.mxu0 0.0
    %527 = vmatpush.msra.mxu0 0.0
    %528 = vmatpush.msra.mxu0 0.0
    %529 = vmatpush.msra.mxu0 0.0
    %530 = vmatpush.msra.mxu0 0.0
    %531 = vmatpush.msra.mxu0 0.0
    %532 = vmatpush.msra.mxu0 0.0
    %533 = vmatpush.msra.mxu0 0.0
    %534 = vmatpush.msra.mxu0 %v234
    %535 = vmatpush.msra.mxu0 %v233
    %536 = vmatmul.f32.gmra.mxu0 %v509
    %v537 = vpop.f32.mrf.mxu0
    %v538 = vadd.f32 0.0, %v537
    %539 = vmatmul.f32.gmra.mxu0 %v512
    %v540 = vpop.f32.mrf.mxu0
    %v541 = vadd.f32 0.0, %v540
    %542 = vmatmul.f32.gmra.mxu0 %v515
    %v543 = vpop.f32.mrf.mxu0
    %v544 = vadd.f32 0.0, %v543
    %545 = vmatmul.f32.gmra.mxu0 %v518
    %v546 = vpop.f32.mrf.mxu0
    %v547 = vadd.f32 0.0, %v546
    %548 = vdwg.mxu0
    %v549 = vadd.f32 %v470, %v538
    %v550 = vadd.f32 %v471, %v541
    %v551 = vadd.f32 %v472, %v544
    %v552 = vadd.f32 %v473, %v547
    %s553 = scalar_lea.vmem %s3, 128
    %v554 = vld [vmem:[%s553] sm:$0xff]
    %v555 = vld [vmem:[%s553 + $0x8] sm:$0xff]
    %v556 = vld [vmem:[%s553 + $0x10] sm:$0xff]
    %v557 = vld [vmem:[%s553 + $0x18] sm:$0xff]
    %558 = vmatpush.msra.mxu0 %v226
    %559 = vmatpush.msra.mxu0 %v225
    %560 = vmatpush.msra.mxu0 %v224
    %561 = vmatpush.msra.mxu0 %v223
    %562 = vmatpush.msra.mxu0 %v222
    %563 = vmatpush.msra.mxu0 %v221
    %564 = vmatpush.msra.mxu0 %v220
    %565 = vmatpush.msra.mxu0 %v219
    %566 = vmatpush.msra.mxu0 %v218
    %567 = vmatpush.msra.mxu0 %v217
    %568 = vmatpush.msra.mxu0 %v216
    %569 = vmatpush.msra.mxu0 %v215
    %570 = vmatpush.msra.mxu0 %v214
    %571 = vmatpush.msra.mxu0 %v213
    %572 = vmatpush.msra.mxu0 %v212
    %573 = vmatpush.msra.mxu0 %v211
    %574 = vmatmul.f32.gmra.mxu0 %v554
    %v575 = vpop.f32.mrf.mxu0
    %v576 = vadd.f32 0.0, %v575
    %577 = vmatmul.f32.gmra.mxu0 %v555
    %v578 = vpop.f32.mrf.mxu0
    %v579 = vadd.f32 0.0, %v578
    %580 = vmatmul.f32.gmra.mxu0 %v556
    %v581 = vpop.f32.mrf.mxu0
    %v582 = vadd.f32 0.0, %v581
    %583 = vmatmul.f32.gmra.mxu0 %v557
    %v584 = vpop.f32.mrf.mxu0
    %v585 = vadd.f32 0.0, %v584
    %586 = vdwg.mxu0
    %v588 = vsel %vm312, %v576, 0
    %v591 = vsel %vm312, %v579, 0
    %v594 = vsel %vm312, %v582, 0
    %v597 = vsel %vm312, %v585, 0
    %599 = vmatpush.msra.mxu0 0.0
    %600 = vmatpush.msra.mxu0 0.0
    %601 = vmatpush.msra.mxu0 0.0
    %602 = vmatpush.msra.mxu0 0.0
    %603 = vmatpush.msra.mxu0 0.0
    %604 = vmatpush.msra.mxu0 0.0
    %605 = vmatpush.msra.mxu0 0.0
    %606 = vmatpush.msra.mxu0 0.0
    %607 = vmatpush.msra.mxu0 0.0
    %608 = vmatpush.msra.mxu0 0.0
    %609 = vmatpush.msra.mxu0 0.0
    %610 = vmatpush.msra.mxu0 0.0
    %611 = vmatpush.msra.mxu0 0.0
    %612 = vmatpush.msra.mxu0 0.0
    %613 = vmatpush.msra.mxu0 %v236
    %614 = vmatpush.msra.mxu0 %v235
    %615 = vmatmul.f32.gmra.mxu0 %v588
    %v616 = vpop.f32.mrf.mxu0
    %v617 = vadd.f32 0.0, %v616
    %618 = vmatmul.f32.gmra.mxu0 %v591
    %v619 = vpop.f32.mrf.mxu0
    %v620 = vadd.f32 0.0, %v619
    %621 = vmatmul.f32.gmra.mxu0 %v594
    %v622 = vpop.f32.mrf.mxu0
    %v623 = vadd.f32 0.0, %v622
    %624 = vmatmul.f32.gmra.mxu0 %v597
    %v625 = vpop.f32.mrf.mxu0
    %v626 = vadd.f32 0.0, %v625
    %627 = vdwg.mxu0
    %v628 = vadd.f32 %v549, %v617
    %v629 = vadd.f32 %v550, %v620
    %v630 = vadd.f32 %v551, %v623
    %v631 = vadd.f32 %v552, %v626
    %s632 = scalar_lea.vmem %s3, 160
    %v633 = vld [vmem:[%s632] sm:$0xff]
    %v634 = vld [vmem:[%s632 + $0x8] sm:$0xff]
    %v635 = vld [vmem:[%s632 + $0x10] sm:$0xff]
    %v636 = vld [vmem:[%s632 + $0x18] sm:$0xff]
    %637 = vmatpush.msra.mxu0 %v226
    %638 = vmatpush.msra.mxu0 %v225
    %639 = vmatpush.msra.mxu0 %v224
    %640 = vmatpush.msra.mxu0 %v223
    %641 = vmatpush.msra.mxu0 %v222
    %642 = vmatpush.msra.mxu0 %v221
    %643 = vmatpush.msra.mxu0 %v220
    %644 = vmatpush.msra.mxu0 %v219
    %645 = vmatpush.msra.mxu0 %v218
    %646 = vmatpush.msra.mxu0 %v217
    %647 = vmatpush.msra.mxu0 %v216
    %648 = vmatpush.msra.mxu0 %v215
    %649 = vmatpush.msra.mxu0 %v214
    %650 = vmatpush.msra.mxu0 %v213
    %651 = vmatpush.msra.mxu0 %v212
    %652 = vmatpush.msra.mxu0 %v211
    %653 = vmatmul.f32.gmra.mxu0 %v633
    %v654 = vpop.f32.mrf.mxu0
    %v655 = vadd.f32 0.0, %v654
    %656 = vmatmul.f32.gmra.mxu0 %v634
    %v657 = vpop.f32.mrf.mxu0
    %v658 = vadd.f32 0.0, %v657
    %659 = vmatmul.f32.gmra.mxu0 %v635
    %v660 = vpop.f32.mrf.mxu0
    %v661 = vadd.f32 0.0, %v660
    %662 = vmatmul.f32.gmra.mxu0 %v636
    %v663 = vpop.f32.mrf.mxu0
    %v664 = vadd.f32 0.0, %v663
    %665 = vdwg.mxu0
    %v667 = vsel %vm312, %v655, 0
    %v670 = vsel %vm312, %v658, 0
    %v673 = vsel %vm312, %v661, 0
    %v676 = vsel %vm312, %v664, 0
    %678 = vmatpush.msra.mxu0 0.0
    %679 = vmatpush.msra.mxu0 0.0
    %680 = vmatpush.msra.mxu0 0.0
    %681 = vmatpush.msra.mxu0 0.0
    %682 = vmatpush.msra.mxu0 0.0
    %683 = vmatpush.msra.mxu0 0.0
    %684 = vmatpush.msra.mxu0 0.0
    %685 = vmatpush.msra.mxu0 0.0
    %686 = vmatpush.msra.mxu0 0.0
    %687 = vmatpush.msra.mxu0 0.0
    %688 = vmatpush.msra.mxu0 0.0
    %689 = vmatpush.msra.mxu0 0.0
    %690 = vmatpush.msra.mxu0 0.0
    %691 = vmatpush.msra.mxu0 0.0
    %692 = vmatpush.msra.mxu0 %v238
    %693 = vmatpush.msra.mxu0 %v237
    %694 = vmatmul.f32.gmra.mxu0 %v667
    %v695 = vpop.f32.mrf.mxu0
    %v696 = vadd.f32 0.0, %v695
    %697 = vmatmul.f32.gmra.mxu0 %v670
    %v698 = vpop.f32.mrf.mxu0
    %v699 = vadd.f32 0.0, %v698
    %700 = vmatmul.f32.gmra.mxu0 %v673
    %v701 = vpop.f32.mrf.mxu0
    %v702 = vadd.f32 0.0, %v701
    %703 = vmatmul.f32.gmra.mxu0 %v676
    %v704 = vpop.f32.mrf.mxu0
    %v705 = vadd.f32 0.0, %v704
    %706 = vdwg.mxu0
    %v707 = vadd.f32 %v628, %v696
    %v708 = vadd.f32 %v629, %v699
    %v709 = vadd.f32 %v630, %v702
    %v710 = vadd.f32 %v631, %v705
    %s711 = scalar_lea.vmem %s3, 192
    %v712 = vld [vmem:[%s711] sm:$0xff]
    %v713 = vld [vmem:[%s711 + $0x8] sm:$0xff]
    %v714 = vld [vmem:[%s711 + $0x10] sm:$0xff]
    %v715 = vld [vmem:[%s711 + $0x18] sm:$0xff]
    %716 = vmatpush.msra.mxu0 %v226
    %717 = vmatpush.msra.mxu0 %v225
    %718 = vmatpush.msra.mxu0 %v224
    %719 = vmatpush.msra.mxu0 %v223
    %720 = vmatpush.msra.mxu0 %v222
    %721 = vmatpush.msra.mxu0 %v221
    %722 = vmatpush.msra.mxu0 %v220
    %723 = vmatpush.msra.mxu0 %v219
    %724 = vmatpush.msra.mxu0 %v218
    %725 = vmatpush.msra.mxu0 %v217
    %726 = vmatpush.msra.mxu0 %v216
    %727 = vmatpush.msra.mxu0 %v215
    %728 = vmatpush.msra.mxu0 %v214
    %729 = vmatpush.msra.mxu0 %v213
    %730 = vmatpush.msra.mxu0 %v212
    %731 = vmatpush.msra.mxu0 %v211
    %732 = vmatmul.f32.gmra.mxu0 %v712
    %v733 = vpop.f32.mrf.mxu0
    %v734 = vadd.f32 0.0, %v733
    %735 = vmatmul.f32.gmra.mxu0 %v713
    %v736 = vpop.f32.mrf.mxu0
    %v737 = vadd.f32 0.0, %v736
    %738 = vmatmul.f32.gmra.mxu0 %v714
    %v739 = vpop.f32.mrf.mxu0
    %v740 = vadd.f32 0.0, %v739
    %741 = vmatmul.f32.gmra.mxu0 %v715
    %v742 = vpop.f32.mrf.mxu0
    %v743 = vadd.f32 0.0, %v742
    %744 = vdwg.mxu0
    %v746 = vsel %vm312, %v734, 0
    %v749 = vsel %vm312, %v737, 0
    %v752 = vsel %vm312, %v740, 0
    %v755 = vsel %vm312, %v743, 0
    %757 = vmatpush.msra.mxu0 0.0
    %758 = vmatpush.msra.mxu0 0.0
    %759 = vmatpush.msra.mxu0 0.0
    %760 = vmatpush.msra.mxu0 0.0
    %761 = vmatpush.msra.mxu0 0.0
    %762 = vmatpush.msra.mxu0 0.0
    %763 = vmatpush.msra.mxu0 0.0
    %764 = vmatpush.msra.mxu0 0.0
    %765 = vmatpush.msra.mxu0 0.0
    %766 = vmatpush.msra.mxu0 0.0
    %767 = vmatpush.msra.mxu0 0.0
    %768 = vmatpush.msra.mxu0 0.0
    %769 = vmatpush.msra.mxu0 0.0
    %770 = vmatpush.msra.mxu0 0.0
    %771 = vmatpush.msra.mxu0 %v240
    %772 = vmatpush.msra.mxu0 %v239
    %773 = vmatmul.f32.gmra.mxu0 %v746
    %v774 = vpop.f32.mrf.mxu0
    %v775 = vadd.f32 0.0, %v774
    %776 = vmatmul.f32.gmra.mxu0 %v749
    %v777 = vpop.f32.mrf.mxu0
    %v778 = vadd.f32 0.0, %v777
    %779 = vmatmul.f32.gmra.mxu0 %v752
    %v780 = vpop.f32.mrf.mxu0
    %v781 = vadd.f32 0.0, %v780
    %782 = vmatmul.f32.gmra.mxu0 %v755
    %v783 = vpop.f32.mrf.mxu0
    %v784 = vadd.f32 0.0, %v783
    %785 = vdwg.mxu0
    %v786 = vadd.f32 %v707, %v775
    %v787 = vadd.f32 %v708, %v778
    %v788 = vadd.f32 %v709, %v781
    %v789 = vadd.f32 %v710, %v784
    %s790 = scalar_lea.vmem %s3, 224
    %v791 = vld [vmem:[%s790] sm:$0xff]
    %v792 = vld [vmem:[%s790 + $0x8] sm:$0xff]
    %v793 = vld [vmem:[%s790 + $0x10] sm:$0xff]
    %v794 = vld [vmem:[%s790 + $0x18] sm:$0xff]
    %795 = vmatpush.msra.mxu0 %v226
    %796 = vmatpush.msra.mxu0 %v225
    %797 = vmatpush.msra.mxu0 %v224
    %798 = vmatpush.msra.mxu0 %v223
    %799 = vmatpush.msra.mxu0 %v222
    %800 = vmatpush.msra.mxu0 %v221
    %801 = vmatpush.msra.mxu0 %v220
    %802 = vmatpush.msra.mxu0 %v219
    %803 = vmatpush.msra.mxu0 %v218
    %804 = vmatpush.msra.mxu0 %v217
    %805 = vmatpush.msra.mxu0 %v216
    %806 = vmatpush.msra.mxu0 %v215
    %807 = vmatpush.msra.mxu0 %v214
    %808 = vmatpush.msra.mxu0 %v213
    %809 = vmatpush.msra.mxu0 %v212
    %810 = vmatpush.msra.mxu0 %v211
    %811 = vmatmul.f32.gmra.mxu0 %v791
    %v812 = vpop.f32.mrf.mxu0
    %v813 = vadd.f32 0.0, %v812
    %814 = vmatmul.f32.gmra.mxu0 %v792
    %v815 = vpop.f32.mrf.mxu0
    %v816 = vadd.f32 0.0, %v815
    %817 = vmatmul.f32.gmra.mxu0 %v793
    %v818 = vpop.f32.mrf.mxu0
    %v819 = vadd.f32 0.0, %v818
    %820 = vmatmul.f32.gmra.mxu0 %v794
    %v821 = vpop.f32.mrf.mxu0
    %v822 = vadd.f32 0.0, %v821
    %823 = vdwg.mxu0
    %v825 = vsel %vm312, %v813, 0
    %v828 = vsel %vm312, %v816, 0
    %v831 = vsel %vm312, %v819, 0
    %v834 = vsel %vm312, %v822, 0
    %836 = vmatpush.msra.mxu0 0.0
    %837 = vmatpush.msra.mxu0 0.0
    %838 = vmatpush.msra.mxu0 0.0
    %839 = vmatpush.msra.mxu0 0.0
    %840 = vmatpush.msra.mxu0 0.0
    %841 = vmatpush.msra.mxu0 0.0
    %842 = vmatpush.msra.mxu0 0.0
    %843 = vmatpush.msra.mxu0 0.0
    %844 = vmatpush.msra.mxu0 0.0
    %845 = vmatpush.msra.mxu0 0.0
    %846 = vmatpush.msra.mxu0 0.0
    %847 = vmatpush.msra.mxu0 0.0
    %848 = vmatpush.msra.mxu0 0.0
    %849 = vmatpush.msra.mxu0 0.0
    %850 = vmatpush.msra.mxu0 %v242
    %851 = vmatpush.msra.mxu0 %v241
    %852 = vmatmul.f32.gmra.mxu0 %v825
    %v853 = vpop.f32.mrf.mxu0
    %v854 = vadd.f32 0.0, %v853
    %855 = vmatmul.f32.gmra.mxu0 %v828
    %v856 = vpop.f32.mrf.mxu0
    %v857 = vadd.f32 0.0, %v856
    %858 = vmatmul.f32.gmra.mxu0 %v831
    %v859 = vpop.f32.mrf.mxu0
    %v860 = vadd.f32 0.0, %v859
    %861 = vmatmul.f32.gmra.mxu0 %v834
    %v862 = vpop.f32.mrf.mxu0
    %v863 = vadd.f32 0.0, %v862
    %864 = vdwg.mxu0
    %v865 = vadd.f32 %v786, %v854
    %v866 = vadd.f32 %v787, %v857
    %v867 = vadd.f32 %v788, %v860
    %v868 = vadd.f32 %v789, %v863
    %s869 = scalar_lea.vmem %s3, 256
    %v870 = vld [vmem:[%s869] sm:$0xff]
    %v871 = vld [vmem:[%s869 + $0x8] sm:$0xff]
    %v872 = vld [vmem:[%s869 + $0x10] sm:$0xff]
    %v873 = vld [vmem:[%s869 + $0x18] sm:$0xff]
    %874 = vmatpush.msra.mxu0 %v226
    %875 = vmatpush.msra.mxu0 %v225
    %876 = vmatpush.msra.mxu0 %v224
    %877 = vmatpush.msra.mxu0 %v223
    %878 = vmatpush.msra.mxu0 %v222
    %879 = vmatpush.msra.mxu0 %v221
    %880 = vmatpush.msra.mxu0 %v220
    %881 = vmatpush.msra.mxu0 %v219
    %882 = vmatpush.msra.mxu0 %v218
    %883 = vmatpush.msra.mxu0 %v217
    %884 = vmatpush.msra.mxu0 %v216
    %885 = vmatpush.msra.mxu0 %v215
    %886 = vmatpush.msra.mxu0 %v214
    %887 = vmatpush.msra.mxu0 %v213
    %888 = vmatpush.msra.mxu0 %v212
    %889 = vmatpush.msra.mxu0 %v211
    %890 = vmatmul.f32.gmra.mxu0 %v870
    %v891 = vpop.f32.mrf.mxu0
    %v892 = vadd.f32 0.0, %v891
    %893 = vmatmul.f32.gmra.mxu0 %v871
    %v894 = vpop.f32.mrf.mxu0
    %v895 = vadd.f32 0.0, %v894
    %896 = vmatmul.f32.gmra.mxu0 %v872
    %v897 = vpop.f32.mrf.mxu0
    %v898 = vadd.f32 0.0, %v897
    %899 = vmatmul.f32.gmra.mxu0 %v873
    %v900 = vpop.f32.mrf.mxu0
    %v901 = vadd.f32 0.0, %v900
    %902 = vdwg.mxu0
    %v904 = vsel %vm312, %v892, 0
    %v907 = vsel %vm312, %v895, 0
    %v910 = vsel %vm312, %v898, 0
    %v913 = vsel %vm312, %v901, 0
    %915 = vmatpush.msra.mxu0 0.0
    %916 = vmatpush.msra.mxu0 0.0
    %917 = vmatpush.msra.mxu0 0.0
    %918 = vmatpush.msra.mxu0 0.0
    %919 = vmatpush.msra.mxu0 0.0
    %920 = vmatpush.msra.mxu0 0.0
    %921 = vmatpush.msra.mxu0 0.0
    %922 = vmatpush.msra.mxu0 0.0
    %923 = vmatpush.msra.mxu0 0.0
    %924 = vmatpush.msra.mxu0 0.0
    %925 = vmatpush.msra.mxu0 0.0
    %926 = vmatpush.msra.mxu0 0.0
    %927 = vmatpush.msra.mxu0 0.0
    %928 = vmatpush.msra.mxu0 0.0
    %929 = vmatpush.msra.mxu0 %v244
    %930 = vmatpush.msra.mxu0 %v243
    %931 = vmatmul.f32.gmra.mxu0 %v904
    %v932 = vpop.f32.mrf.mxu0
    %v933 = vadd.f32 0.0, %v932
    %934 = vmatmul.f32.gmra.mxu0 %v907
    %v935 = vpop.f32.mrf.mxu0
    %v936 = vadd.f32 0.0, %v935
    %937 = vmatmul.f32.gmra.mxu0 %v910
    %v938 = vpop.f32.mrf.mxu0
    %v939 = vadd.f32 0.0, %v938
    %940 = vmatmul.f32.gmra.mxu0 %v913
    %v941 = vpop.f32.mrf.mxu0
    %v942 = vadd.f32 0.0, %v941
    %943 = vdwg.mxu0
    %v944 = vadd.f32 %v865, %v933
    %v945 = vadd.f32 %v866, %v936
    %v946 = vadd.f32 %v867, %v939
    %v947 = vadd.f32 %v868, %v942
    %v948 = vld [vmem:[%s5] sm:$0x1]
    %v950 = vperm.slane %v948, 0
    %v952 = vadd.f32 %v944, %v950
    %v953 = vadd.f32 %v945, %v950
    %v954 = vadd.f32 %v946, %v950
    %v955 = vadd.f32 %v947, %v950
    %v956 = vmax.f32 %v952, 0.0
    %v957 = vmax.f32 %v953, 0.0
    %v958 = vmax.f32 %v954, 0.0
    %v959 = vmax.f32 %v955, 0.0
    %vm960 = vcmask 261120
    %961 = vst.msk [vmem:[#allocation2] sm:$0xff] %vm960, %v956
    %962 = vst.msk [vmem:[#allocation2 + $0x8] sm:$0xff] %vm960, %v957
    %963 = vst.msk [vmem:[#allocation2 + $0x10] sm:$0xff] %vm960, %v958
    %964 = vst.msk [vmem:[#allocation2 + $0x18] sm:$0xff] %vm960, %v959
    %v965 = vld [vmem:[%s6] sm:$0xff]
    %v966 = vld [vmem:[%s18] sm:$0x7]
    %v967 = vld [vmem:[%s19] sm:$0x7]
    %v968 = vld [vmem:[%s7] sm:$0xff]
    %v969 = vld [vmem:[%s7 + $0x8] sm:$0xff]
    %v970 = vld [vmem:[%s7 + $0x10] sm:$0xff]
    %v971 = vld [vmem:[%s7 + $0x18] sm:$0xff]
    %v973 = vsel %vm960, %v965, 0
    %975 = vmatpush.msra.mxu0 0.0
    %976 = vmatpush.msra.mxu0 0.0
    %977 = vmatpush.msra.mxu0 0.0
    %978 = vmatpush.msra.mxu0 0.0
    %979 = vmatpush.msra.mxu0 0.0
    %980 = vmatpush.msra.mxu0 0.0
    %981 = vmatpush.msra.mxu0 0.0
    %982 = vmatpush.msra.mxu0 0.0
    %983 = vmatpush.msra.mxu0 0.0
    %984 = vmatpush.msra.mxu0 0.0
    %985 = vmatpush.msra.mxu0 0.0
    %986 = vmatpush.msra.mxu0 0.0
    %987 = vmatpush.msra.mxu0 %v971
    %988 = vmatpush.msra.mxu0 %v970
    %989 = vmatpush.msra.mxu0 %v969
    %990 = vmatpush.msra.mxu0 %v968
    %991 = vmatmul.f32.gmra.mxu0 %v973
    %v992 = vpop.f32.mrf.mxu0
    %v993 = vadd.f32 0.0, %v992
    %994 = vmatmul.f32.gmra.mxu0 %v973
    %v995 = vpop.f32.mrf.mxu0
    %v996 = vadd.f32 0.0, %v995
    %997 = vdwg.mxu0
    %v998 = vld [vmem:[%s8] sm:$0xff]
    %v999 = vld [vmem:[%s8 + $0x8] sm:$0xff]
    %v1000 = vld [vmem:[%s8 + $0x10] sm:$0xff]
    %v1001 = vld [vmem:[%s8 + $0x18] sm:$0xff]
    %v1002 = vld [vmem:[%s9] sm:$0x1]
    %1004 = vrot.lane.b32.xlu0 %v993, 96
    %v1005 = vpop.permute.xlu0 %1004
    %vm1006 = vcmask 64512
    %v1007 = vsel %vm1006, %v993, 0
    %v1009 = vsel %vm1006, %v1005, 0
    %1011 = vmatpush.xpose.msra.mxu0 0.0
    %1012 = vmatpush.xpose.msra.mxu0 0.0
    %1013 = vmatpush.xpose.msra.mxu0 0.0
    %1014 = vmatpush.xpose.msra.mxu0 0.0
    %1015 = vmatpush.xpose.msra.mxu0 0.0
    %1016 = vmatpush.xpose.msra.mxu0 0.0
    %1017 = vmatpush.xpose.msra.mxu0 0.0
    %1018 = vmatpush.xpose.msra.mxu0 0.0
    %1019 = vmatpush.xpose.msra.mxu0 0.0
    %1020 = vmatpush.xpose.msra.mxu0 0.0
    %1021 = vmatpush.xpose.msra.mxu0 0.0
    %1022 = vmatpush.xpose.msra.mxu0 0.0
    %1023 = vmatpush.xpose.msra.mxu0 0.0
    %1024 = vmatpush.xpose.msra.mxu0 0.0
    %1025 = vmatpush.xpose.msra.mxu0 0.0
    %1026 = vmatpush.xpose.msra.mxu0 %v1009
    %1027 = vmatmul.f32.gmra.mxu0 %v1007
    %v1028 = vpop.f32.mrf.mxu0
    %v1029 = vadd.f32 0.0, %v1028
    %1030 = vdwg.mxu0
    %1032 = vrot.lane.b32.xlu0 %v996, 96
    %v1033 = vpop.permute.xlu0 %1032
    %v1034 = vsel %vm1006, %v996, 0
    %v1036 = vsel %vm1006, %v1033, 0
    %1038 = vmatpush.xpose.msra.mxu0 0.0
    %1039 = vmatpush.xpose.msra.mxu0 0.0
    %1040 = vmatpush.xpose.msra.mxu0 0.0
    %1041 = vmatpush.xpose.msra.mxu0 0.0
    %1042 = vmatpush.xpose.msra.mxu0 0.0
    %1043 = vmatpush.xpose.msra.mxu0 0.0
    %1044 = vmatpush.xpose.msra.mxu0 0.0
    %1045 = vmatpush.xpose.msra.mxu0 0.0
    %1046 = vmatpush.xpose.msra.mxu0 0.0
    %1047 = vmatpush.xpose.msra.mxu0 0.0
    %1048 = vmatpush.xpose.msra.mxu0 0.0
    %1049 = vmatpush.xpose.msra.mxu0 0.0
    %1050 = vmatpush.xpose.msra.mxu0 0.0
    %1051 = vmatpush.xpose.msra.mxu0 0.0
    %1052 = vmatpush.xpose.msra.mxu0 0.0
    %1053 = vmatpush.xpose.msra.mxu0 %v1036
    %1054 = vmatmul.f32.gmra.mxu0 %v1034
    %v1055 = vpop.f32.mrf.mxu0
    %v1056 = vadd.f32 0.0, %v1055
    %1057 = vdwg.mxu0
    %v1058 = vmul.f32 %v1029, 0.35355338
    %v1059 = vmul.f32 %v1056, 0.35355338
    %v1060 = vsel %vm1006, %v1058, -inf
    %1061 = vmax.xlane.f32.xlu0 %v1060
    %v1062 = vpop.xlane.xlu0 %1061
    %v1063 = vsel %vm1006, %v1059, -inf
    %1064 = vmax.xlane.f32.xlu0 %v1063
    %v1065 = vpop.xlane.xlu0 %1064
    %v1066 = vsub.f32 %v1058, %v1062
    %v1067 = vsub.f32 %v1059, %v1065
    %v1068 = vmul.f32 %v1066, 1.442695
    %v1069 = vpow.pop %v1068
    %v1070 = vmul.f32 %v1067, 1.442695
    %v1071 = vpow.pop %v1070
    %v1072 = vsel %vm1006, %v1069, 0.0
    %1073 = vadd.xlane.f32.xlu0 %v1072
    %v1074 = vpop.xlane.xlu0 %1073
    %v1075 = vsel %vm1006, %v1071, 0.0
    %1076 = vadd.xlane.f32.xlu0 %v1075
    %v1077 = vpop.xlane.xlu0 %1076
    %v1078 = vrcp.pop %v1074
    %v1079 = vmul.f32 %v1074, %v1078
    %v1080 = vsub.f32 1.0, %v1079
    %v1081 = vmul.f32 %v1078, %v1080
    %v1082 = vadd.f32 %v1078, %v1081
    %vm1083 = vweird.f32 %v1074
    %vm1084 = vweird.f32 %v1078
    %vm1085 = vmor %vm1083, %vm1084
    %v1086 = vsel %vm1085, %v1078, %v1082
    %v1087 = vand.u32 2147483647, %v1074
    %vm1088 = vcmp.eq.f32.partialorder %v1087, 8.507059e+37
    %v1089 = vand.u32 %v1074, 2147483648
    %v1090 = vor.u32 1.1754944e-38, %v1089
    %v1091 = vsel %vm1088, %v1090, %v1086
    %v1092 = vmul.f32 %v1069, %v1091
    %v1093 = vrcp.pop %v1077
    %v1094 = vmul.f32 %v1077, %v1093
    %v1095 = vsub.f32 1.0, %v1094
    %v1096 = vmul.f32 %v1093, %v1095
    %v1097 = vadd.f32 %v1093, %v1096
    %vm1098 = vweird.f32 %v1077
    %vm1099 = vweird.f32 %v1093
    %vm1100 = vmor %vm1098, %vm1099
    %v1101 = vsel %vm1100, %v1093, %v1097
    %v1102 = vand.u32 2147483647, %v1077
    %vm1103 = vcmp.eq.f32.partialorder %v1102, 8.507059e+37
    %v1104 = vand.u32 %v1077, 2147483648
    %v1105 = vor.u32 1.1754944e-38, %v1104
    %v1106 = vsel %vm1103, %v1105, %v1101
    %v1107 = vmul.f32 %v1071, %v1106
    %1108 = vrot.lane.b32.xlu0 %v993, 64
    %v1109 = vpop.permute.xlu0 %1108
    %v1112 = vsel %vm1006, %v1092, 0
    %1114 = vmatpush.msra.mxu0 0.0
    %1115 = vmatpush.msra.mxu0 0.0
    %1116 = vmatpush.msra.mxu0 0.0
    %1117 = vmatpush.msra.mxu0 0.0
    %1118 = vmatpush.msra.mxu0 0.0
    %1119 = vmatpush.msra.mxu0 0.0
    %1120 = vmatpush.msra.mxu0 0.0
    %1121 = vmatpush.msra.mxu0 0.0
    %1122 = vmatpush.msra.mxu0 0.0
    %1123 = vmatpush.msra.mxu0 0.0
    %1124 = vmatpush.msra.mxu0 0.0
    %1125 = vmatpush.msra.mxu0 0.0
    %1126 = vmatpush.msra.mxu0 0.0
    %1127 = vmatpush.msra.mxu0 0.0
    %1128 = vmatpush.msra.mxu0 0.0
    %1129 = vmatpush.msra.mxu0 %v1109
    %1130 = vmatmul.f32.gmra.mxu0 %v1112
    %v1131 = vpop.f32.mrf.mxu0
    %v1132 = vadd.f32 0.0, %v1131
    %1133 = vdwg.mxu0
    %1134 = vrot.lane.b32.xlu0 %v996, 64
    %v1135 = vpop.permute.xlu0 %1134
    %v1138 = vsel %vm1006, %v1107, 0
    %1140 = vmatpush.msra.mxu0 0.0
    %1141 = vmatpush.msra.mxu0 0.0
    %1142 = vmatpush.msra.mxu0 0.0
    %1143 = vmatpush.msra.mxu0 0.0
    %1144 = vmatpush.msra.mxu0 0.0
    %1145 = vmatpush.msra.mxu0 0.0
    %1146 = vmatpush.msra.mxu0 0.0
    %1147 = vmatpush.msra.mxu0 0.0
    %1148 = vmatpush.msra.mxu0 0.0
    %1149 = vmatpush.msra.mxu0 0.0
    %1150 = vmatpush.msra.mxu0 0.0
    %1151 = vmatpush.msra.mxu0 0.0
    %1152 = vmatpush.msra.mxu0 0.0
    %1153 = vmatpush.msra.mxu0 0.0
    %1154 = vmatpush.msra.mxu0 0.0
    %1155 = vmatpush.msra.mxu0 %v1135
    %1156 = vmatmul.f32.gmra.mxu0 %v1138
    %v1157 = vpop.f32.mrf.mxu0
    %v1158 = vadd.f32 0.0, %v1157
    %1159 = vdwg.mxu0
    %1160 = vrot.lane.b32.xlu0 %v993, 120
    %v1161 = vpop.permute.xlu0 %1160
    %1162 = vrot.lane.b32.xlu0 %v993, 88
    %v1163 = vpop.permute.xlu0 %1162
    %v1164 = vsel %vm1006, %v1161, 0
    %v1166 = vsel %vm1006, %v1163, 0
    %1168 = vmatpush.xpose.msra.mxu0 0.0
    %1169 = vmatpush.xpose.msra.mxu0 0.0
    %1170 = vmatpush.xpose.msra.mxu0 0.0
    %1171 = vmatpush.xpose.msra.mxu0 0.0
    %1172 = vmatpush.xpose.msra.mxu0 0.0
    %1173 = vmatpush.xpose.msra.mxu0 0.0
    %1174 = vmatpush.xpose.msra.mxu0 0.0
    %1175 = vmatpush.xpose.msra.mxu0 0.0
    %1176 = vmatpush.xpose.msra.mxu0 0.0
    %1177 = vmatpush.xpose.msra.mxu0 0.0
    %1178 = vmatpush.xpose.msra.mxu0 0.0
    %1179 = vmatpush.xpose.msra.mxu0 0.0
    %1180 = vmatpush.xpose.msra.mxu0 0.0
    %1181 = vmatpush.xpose.msra.mxu0 0.0
    %1182 = vmatpush.xpose.msra.mxu0 0.0
    %1183 = vmatpush.xpose.msra.mxu0 %v1166
    %1184 = vmatmul.f32.gmra.mxu0 %v1164
    %v1185 = vpop.f32.mrf.mxu0
    %v1186 = vadd.f32 0.0, %v1185
    %1187 = vdwg.mxu0
    %1188 = vrot.lane.b32.xlu0 %v996, 120
    %v1189 = vpop.permute.xlu0 %1188
    %1190 = vrot.lane.b32.xlu0 %v996, 88
    %v1191 = vpop.permute.xlu0 %1190
    %v1192 = vsel %vm1006, %v1189, 0
    %v1194 = vsel %vm1006, %v1191, 0
    %1196 = vmatpush.xpose.msra.mxu0 0.0
    %1197 = vmatpush.xpose.msra.mxu0 0.0
    %1198 = vmatpush.xpose.msra.mxu0 0.0
    %1199 = vmatpush.xpose.msra.mxu0 0.0
    %1200 = vmatpush.xpose.msra.mxu0 0.0
    %1201 = vmatpush.xpose.msra.mxu0 0.0
    %1202 = vmatpush.xpose.msra.mxu0 0.0
    %1203 = vmatpush.xpose.msra.mxu0 0.0
    %1204 = vmatpush.xpose.msra.mxu0 0.0
    %1205 = vmatpush.xpose.msra.mxu0 0.0
    %1206 = vmatpush.xpose.msra.mxu0 0.0
    %1207 = vmatpush.xpose.msra.mxu0 0.0
    %1208 = vmatpush.xpose.msra.mxu0 0.0
    %1209 = vmatpush.xpose.msra.mxu0 0.0
    %1210 = vmatpush.xpose.msra.mxu0 0.0
    %1211 = vmatpush.xpose.msra.mxu0 %v1194
    %1212 = vmatmul.f32.gmra.mxu0 %v1192
    %v1213 = vpop.f32.mrf.mxu0
    %v1214 = vadd.f32 0.0, %v1213
    %1215 = vdwg.mxu0
    %v1216 = vmul.f32 %v1186, 0.35355338
    %v1217 = vmul.f32 %v1214, 0.35355338
    %v1218 = vsel %vm1006, %v1216, -inf
    %1219 = vmax.xlane.f32.xlu0 %v1218
    %v1220 = vpop.xlane.xlu0 %1219
    %v1221 = vsel %vm1006, %v1217, -inf
    %1222 = vmax.xlane.f32.xlu0 %v1221
    %v1223 = vpop.xlane.xlu0 %1222
    %v1224 = vsub.f32 %v1216, %v1220
    %v1225 = vsub.f32 %v1217, %v1223
    %v1226 = vmul.f32 %v1224, 1.442695
    %v1227 = vpow.pop %v1226
    %v1228 = vmul.f32 %v1225, 1.442695
    %v1229 = vpow.pop %v1228
    %v1230 = vsel %vm1006, %v1227, 0.0
    %1231 = vadd.xlane.f32.xlu0 %v1230
    %v1232 = vpop.xlane.xlu0 %1231
    %v1233 = vsel %vm1006, %v1229, 0.0
    %1234 = vadd.xlane.f32.xlu0 %v1233
    %v1235 = vpop.xlane.xlu0 %1234
    %v1236 = vrcp.pop %v1232
    %v1237 = vmul.f32 %v1232, %v1236
    %v1238 = vsub.f32 1.0, %v1237
    %v1239 = vmul.f32 %v1236, %v1238
    %v1240 = vadd.f32 %v1236, %v1239
    %vm1241 = vweird.f32 %v1232
    %vm1242 = vweird.f32 %v1236
    %vm1243 = vmor %vm1241, %vm1242
    %v1244 = vsel %vm1243, %v1236, %v1240
    %v1245 = vand.u32 2147483647, %v1232
    %vm1246 = vcmp.eq.f32.partialorder %v1245, 8.507059e+37
    %v1247 = vand.u32 %v1232, 2147483648
    %v1248 = vor.u32 1.1754944e-38, %v1247
    %v1249 = vsel %vm1246, %v1248, %v1244
    %v1250 = vmul.f32 %v1227, %v1249
    %v1251 = vrcp.pop %v1235
    %v1252 = vmul.f32 %v1235, %v1251
    %v1253 = vsub.f32 1.0, %v1252
    %v1254 = vmul.f32 %v1251, %v1253
    %v1255 = vadd.f32 %v1251, %v1254
    %vm1256 = vweird.f32 %v1235
    %vm1257 = vweird.f32 %v1251
    %vm1258 = vmor %vm1256, %vm1257
    %v1259 = vsel %vm1258, %v1251, %v1255
    %v1260 = vand.u32 2147483647, %v1235
    %vm1261 = vcmp.eq.f32.partialorder %v1260, 8.507059e+37
    %v1262 = vand.u32 %v1235, 2147483648
    %v1263 = vor.u32 1.1754944e-38, %v1262
    %v1264 = vsel %vm1261, %v1263, %v1259
    %v1265 = vmul.f32 %v1229, %v1264
    %1266 = vrot.lane.b32.xlu0 %v993, 56
    %v1267 = vpop.permute.xlu0 %1266
    %v1270 = vsel %vm1006, %v1250, 0
    %1272 = vmatpush.msra.mxu0 0.0
    %1273 = vmatpush.msra.mxu0 0.0
    %1274 = vmatpush.msra.mxu0 0.0
    %1275 = vmatpush.msra.mxu0 0.0
    %1276 = vmatpush.msra.mxu0 0.0
    %1277 = vmatpush.msra.mxu0 0.0
    %1278 = vmatpush.msra.mxu0 0.0
    %1279 = vmatpush.msra.mxu0 0.0
    %1280 = vmatpush.msra.mxu0 0.0
    %1281 = vmatpush.msra.mxu0 0.0
    %1282 = vmatpush.msra.mxu0 0.0
    %1283 = vmatpush.msra.mxu0 0.0
    %1284 = vmatpush.msra.mxu0 0.0
    %1285 = vmatpush.msra.mxu0 0.0
    %1286 = vmatpush.msra.mxu0 0.0
    %1287 = vmatpush.msra.mxu0 %v1267
    %1288 = vmatmul.f32.gmra.mxu0 %v1270
    %v1289 = vpop.f32.mrf.mxu0
    %v1290 = vadd.f32 0.0, %v1289
    %1291 = vdwg.mxu0
    %1292 = vrot.lane.b32.xlu0 %v996, 56
    %v1293 = vpop.permute.xlu0 %1292
    %v1296 = vsel %vm1006, %v1265, 0
    %1298 = vmatpush.msra.mxu0 0.0
    %1299 = vmatpush.msra.mxu0 0.0
    %1300 = vmatpush.msra.mxu0 0.0
    %1301 = vmatpush.msra.mxu0 0.0
    %1302 = vmatpush.msra.mxu0 0.0
    %1303 = vmatpush.msra.mxu0 0.0
    %1304 = vmatpush.msra.mxu0 0.0
    %1305 = vmatpush.msra.mxu0 0.0
    %1306 = vmatpush.msra.mxu0 0.0
    %1307 = vmatpush.msra.mxu0 0.0
    %1308 = vmatpush.msra.mxu0 0.0
    %1309 = vmatpush.msra.mxu0 0.0
    %1310 = vmatpush.msra.mxu0 0.0
    %1311 = vmatpush.msra.mxu0 0.0
    %1312 = vmatpush.msra.mxu0 0.0
    %1313 = vmatpush.msra.mxu0 %v1293
    %1314 = vmatmul.f32.gmra.mxu0 %v1296
    %v1315 = vpop.f32.mrf.mxu0
    %v1316 = vadd.f32 0.0, %v1315
    %1317 = vdwg.mxu0
    %v1319 = vsel %vm1006, %v1290, 0
    %v1322 = vsel %vm1006, %v1316, 0
    %1324 = vmatpush.msra.mxu0 0.0
    %1325 = vmatpush.msra.mxu0 0.0
    %1326 = vmatpush.msra.mxu0 0.0
    %1327 = vmatpush.msra.mxu0 0.0
    %1328 = vmatpush.msra.mxu0 0.0
    %1329 = vmatpush.msra.mxu0 0.0
    %1330 = vmatpush.msra.mxu0 0.0
    %1331 = vmatpush.msra.mxu0 0.0
    %1332 = vmatpush.msra.mxu0 0.0
    %1333 = vmatpush.msra.mxu0 0.0
    %1334 = vmatpush.msra.mxu0 0.0
    %1335 = vmatpush.msra.mxu0 0.0
    %1336 = vmatpush.msra.mxu0 0.0
    %1337 = vmatpush.msra.mxu0 0.0
    %1338 = vmatpush.msra.mxu0 0.0
    %1339 = vmatpush.msra.mxu0 %v999
    %1340 = vmatmul.f32.gmra.mxu0 %v1319
    %v1341 = vpop.f32.mrf.mxu0
    %v1342 = vadd.f32 0.0, %v1341
    %1343 = vmatmul.f32.gmra.mxu0 %v1322
    %v1344 = vpop.f32.mrf.mxu0
    %v1345 = vadd.f32 0.0, %v1344
    %1346 = vdwg.mxu0
    %v1348 = vsel %vm1006, %v1132, 0
    %v1351 = vsel %vm1006, %v1158, 0
    %1353 = vmatpush.msra.mxu0 0.0
    %1354 = vmatpush.msra.mxu0 0.0
    %1355 = vmatpush.msra.mxu0 0.0
    %1356 = vmatpush.msra.mxu0 0.0
    %1357 = vmatpush.msra.mxu0 0.0
    %1358 = vmatpush.msra.mxu0 0.0
    %1359 = vmatpush.msra.mxu0 0.0
    %1360 = vmatpush.msra.mxu0 0.0
    %1361 = vmatpush.msra.mxu0 0.0
    %1362 = vmatpush.msra.mxu0 0.0
    %1363 = vmatpush.msra.mxu0 0.0
    %1364 = vmatpush.msra.mxu0 0.0
    %1365 = vmatpush.msra.mxu0 0.0
    %1366 = vmatpush.msra.mxu0 0.0
    %1367 = vmatpush.msra.mxu0 0.0
    %1368 = vmatpush.msra.mxu0 %v998
    %1369 = vmatmul.f32.gmra.mxu0 %v1348
    %v1370 = vpop.f32.mrf.mxu0
    %v1371 = vadd.f32 %v1342, %v1370
    %1372 = vmatmul.f32.gmra.mxu0 %v1351
    %v1373 = vpop.f32.mrf.mxu0
    %v1374 = vadd.f32 %v1345, %v1373
    %1375 = vdwg.mxu0
    %1376 = vrot.lane.b32.xlu0 %v993, 112
    %v1377 = vpop.permute.xlu0 %1376
    %1378 = vrot.lane.b32.xlu0 %v993, 80
    %v1379 = vpop.permute.xlu0 %1378
    %v1380 = vsel %vm1006, %v1377, 0
    %v1382 = vsel %vm1006, %v1379, 0
    %1384 = vmatpush.xpose.msra.mxu0 0.0
    %1385 = vmatpush.xpose.msra.mxu0 0.0
    %1386 = vmatpush.xpose.msra.mxu0 0.0
    %1387 = vmatpush.xpose.msra.mxu0 0.0
    %1388 = vmatpush.xpose.msra.mxu0 0.0
    %1389 = vmatpush.xpose.msra.mxu0 0.0
    %1390 = vmatpush.xpose.msra.mxu0 0.0
    %1391 = vmatpush.xpose.msra.mxu0 0.0
    %1392 = vmatpush.xpose.msra.mxu0 0.0
    %1393 = vmatpush.xpose.msra.mxu0 0.0
    %1394 = vmatpush.xpose.msra.mxu0 0.0
    %1395 = vmatpush.xpose.msra.mxu0 0.0
    %1396 = vmatpush.xpose.msra.mxu0 0.0
    %1397 = vmatpush.xpose.msra.mxu0 0.0
    %1398 = vmatpush.xpose.msra.mxu0 0.0
    %1399 = vmatpush.xpose.msra.mxu0 %v1382
    %1400 = vmatmul.f32.gmra.mxu0 %v1380
    %v1401 = vpop.f32.mrf.mxu0
    %v1402 = vadd.f32 0.0, %v1401
    %1403 = vdwg.mxu0
    %1404 = vrot.lane.b32.xlu0 %v996, 112
    %v1405 = vpop.permute.xlu0 %1404
    %1406 = vrot.lane.b32.xlu0 %v996, 80
    %v1407 = vpop.permute.xlu0 %1406
    %v1408 = vsel %vm1006, %v1405, 0
    %v1410 = vsel %vm1006, %v1407, 0
    %1412 = vmatpush.xpose.msra.mxu0 0.0
    %1413 = vmatpush.xpose.msra.mxu0 0.0
    %1414 = vmatpush.xpose.msra.mxu0 0.0
    %1415 = vmatpush.xpose.msra.mxu0 0.0
    %1416 = vmatpush.xpose.msra.mxu0 0.0
    %1417 = vmatpush.xpose.msra.mxu0 0.0
    %1418 = vmatpush.xpose.msra.mxu0 0.0
    %1419 = vmatpush.xpose.msra.mxu0 0.0
    %1420 = vmatpush.xpose.msra.mxu0 0.0
    %1421 = vmatpush.xpose.msra.mxu0 0.0
    %1422 = vmatpush.xpose.msra.mxu0 0.0
    %1423 = vmatpush.xpose.msra.mxu0 0.0
    %1424 = vmatpush.xpose.msra.mxu0 0.0
    %1425 = vmatpush.xpose.msra.mxu0 0.0
    %1426 = vmatpush.xpose.msra.mxu0 0.0
    %1427 = vmatpush.xpose.msra.mxu0 %v1410
    %1428 = vmatmul.f32.gmra.mxu0 %v1408
    %v1429 = vpop.f32.mrf.mxu0
    %v1430 = vadd.f32 0.0, %v1429
    %1431 = vdwg.mxu0
    %v1432 = vmul.f32 %v1402, 0.35355338
    %v1433 = vmul.f32 %v1430, 0.35355338
    %v1434 = vsel %vm1006, %v1432, -inf
    %1435 = vmax.xlane.f32.xlu0 %v1434
    %v1436 = vpop.xlane.xlu0 %1435
    %v1437 = vsel %vm1006, %v1433, -inf
    %1438 = vmax.xlane.f32.xlu0 %v1437
    %v1439 = vpop.xlane.xlu0 %1438
    %v1440 = vsub.f32 %v1432, %v1436
    %v1441 = vsub.f32 %v1433, %v1439
    %v1442 = vmul.f32 %v1440, 1.442695
    %v1443 = vpow.pop %v1442
    %v1444 = vmul.f32 %v1441, 1.442695
    %v1445 = vpow.pop %v1444
    %v1446 = vsel %vm1006, %v1443, 0.0
    %1447 = vadd.xlane.f32.xlu0 %v1446
    %v1448 = vpop.xlane.xlu0 %1447
    %v1449 = vsel %vm1006, %v1445, 0.0
    %1450 = vadd.xlane.f32.xlu0 %v1449
    %v1451 = vpop.xlane.xlu0 %1450
    %v1452 = vrcp.pop %v1448
    %v1453 = vmul.f32 %v1448, %v1452
    %v1454 = vsub.f32 1.0, %v1453
    %v1455 = vmul.f32 %v1452, %v1454
    %v1456 = vadd.f32 %v1452, %v1455
    %vm1457 = vweird.f32 %v1448
    %vm1458 = vweird.f32 %v1452
    %vm1459 = vmor %vm1457, %vm1458
    %v1460 = vsel %vm1459, %v1452, %v1456
    %v1461 = vand.u32 2147483647, %v1448
    %vm1462 = vcmp.eq.f32.partialorder %v1461, 8.507059e+37
    %v1463 = vand.u32 %v1448, 2147483648
    %v1464 = vor.u32 1.1754944e-38, %v1463
    %v1465 = vsel %vm1462, %v1464, %v1460
    %v1466 = vmul.f32 %v1443, %v1465
    %v1467 = vrcp.pop %v1451
    %v1468 = vmul.f32 %v1451, %v1467
    %v1469 = vsub.f32 1.0, %v1468
    %v1470 = vmul.f32 %v1467, %v1469
    %v1471 = vadd.f32 %v1467, %v1470
    %vm1472 = vweird.f32 %v1451
    %vm1473 = vweird.f32 %v1467
    %vm1474 = vmor %vm1472, %vm1473
    %v1475 = vsel %vm1474, %v1467, %v1471
    %v1476 = vand.u32 2147483647, %v1451
    %vm1477 = vcmp.eq.f32.partialorder %v1476, 8.507059e+37
    %v1478 = vand.u32 %v1451, 2147483648
    %v1479 = vor.u32 1.1754944e-38, %v1478
    %v1480 = vsel %vm1477, %v1479, %v1475
    %v1481 = vmul.f32 %v1445, %v1480
    %1482 = vrot.lane.b32.xlu0 %v993, 48
    %v1483 = vpop.permute.xlu0 %1482
    %v1486 = vsel %vm1006, %v1466, 0
    %1488 = vmatpush.msra.mxu0 0.0
    %1489 = vmatpush.msra.mxu0 0.0
    %1490 = vmatpush.msra.mxu0 0.0
    %1491 = vmatpush.msra.mxu0 0.0
    %1492 = vmatpush.msra.mxu0 0.0
    %1493 = vmatpush.msra.mxu0 0.0
    %1494 = vmatpush.msra.mxu0 0.0
    %1495 = vmatpush.msra.mxu0 0.0
    %1496 = vmatpush.msra.mxu0 0.0
    %1497 = vmatpush.msra.mxu0 0.0
    %1498 = vmatpush.msra.mxu0 0.0
    %1499 = vmatpush.msra.mxu0 0.0
    %1500 = vmatpush.msra.mxu0 0.0
    %1501 = vmatpush.msra.mxu0 0.0
    %1502 = vmatpush.msra.mxu0 0.0
    %1503 = vmatpush.msra.mxu0 %v1483
    %1504 = vmatmul.f32.gmra.mxu0 %v1486
    %v1505 = vpop.f32.mrf.mxu0
    %v1506 = vadd.f32 0.0, %v1505
    %1507 = vdwg.mxu0
    %1508 = vrot.lane.b32.xlu0 %v996, 48
    %v1509 = vpop.permute.xlu0 %1508
    %v1512 = vsel %vm1006, %v1481, 0
    %1514 = vmatpush.msra.mxu0 0.0
    %1515 = vmatpush.msra.mxu0 0.0
    %1516 = vmatpush.msra.mxu0 0.0
    %1517 = vmatpush.msra.mxu0 0.0
    %1518 = vmatpush.msra.mxu0 0.0
    %1519 = vmatpush.msra.mxu0 0.0
    %1520 = vmatpush.msra.mxu0 0.0
    %1521 = vmatpush.msra.mxu0 0.0
    %1522 = vmatpush.msra.mxu0 0.0
    %1523 = vmatpush.msra.mxu0 0.0
    %1524 = vmatpush.msra.mxu0 0.0
    %1525 = vmatpush.msra.mxu0 0.0
    %1526 = vmatpush.msra.mxu0 0.0
    %1527 = vmatpush.msra.mxu0 0.0
    %1528 = vmatpush.msra.mxu0 0.0
    %1529 = vmatpush.msra.mxu0 %v1509
    %1530 = vmatmul.f32.gmra.mxu0 %v1512
    %v1531 = vpop.f32.mrf.mxu0
    %v1532 = vadd.f32 0.0, %v1531
    %1533 = vdwg.mxu0
    %v1535 = vsel %vm1006, %v1506, 0
    %v1538 = vsel %vm1006, %v1532, 0
    %1540 = vmatpush.msra.mxu0 0.0
    %1541 = vmatpush.msra.mxu0 0.0
    %1542 = vmatpush.msra.mxu0 0.0
    %1543 = vmatpush.msra.mxu0 0.0
    %1544 = vmatpush.msra.mxu0 0.0
    %1545 = vmatpush.msra.mxu0 0.0
    %1546 = vmatpush.msra.mxu0 0.0
    %1547 = vmatpush.msra.mxu0 0.0
    %1548 = vmatpush.msra.mxu0 0.0
    %1549 = vmatpush.msra.mxu0 0.0
    %1550 = vmatpush.msra.mxu0 0.0
    %1551 = vmatpush.msra.mxu0 0.0
    %1552 = vmatpush.msra.mxu0 0.0
    %1553 = vmatpush.msra.mxu0 0.0
    %1554 = vmatpush.msra.mxu0 0.0
    %1555 = vmatpush.msra.mxu0 %v1000
    %1556 = vmatmul.f32.gmra.mxu0 %v1535
    %v1557 = vpop.f32.mrf.mxu0
    %v1558 = vadd.f32 0.0, %v1557
    %1559 = vmatmul.f32.gmra.mxu0 %v1538
    %v1560 = vpop.f32.mrf.mxu0
    %v1561 = vadd.f32 0.0, %v1560
    %1562 = vdwg.mxu0
    %v1563 = vadd.f32 %v1371, %v1558
    %v1564 = vadd.f32 %v1374, %v1561
    %1565 = vrot.lane.b32.xlu0 %v993, 104
    %v1566 = vpop.permute.xlu0 %1565
    %1567 = vrot.lane.b32.xlu0 %v993, 72
    %v1568 = vpop.permute.xlu0 %1567
    %v1569 = vsel %vm1006, %v1566, 0
    %v1571 = vsel %vm1006, %v1568, 0
    %1573 = vmatpush.xpose.msra.mxu0 0.0
    %1574 = vmatpush.xpose.msra.mxu0 0.0
    %1575 = vmatpush.xpose.msra.mxu0 0.0
    %1576 = vmatpush.xpose.msra.mxu0 0.0
    %1577 = vmatpush.xpose.msra.mxu0 0.0
    %1578 = vmatpush.xpose.msra.mxu0 0.0
    %1579 = vmatpush.xpose.msra.mxu0 0.0
    %1580 = vmatpush.xpose.msra.mxu0 0.0
    %1581 = vmatpush.xpose.msra.mxu0 0.0
    %1582 = vmatpush.xpose.msra.mxu0 0.0
    %1583 = vmatpush.xpose.msra.mxu0 0.0
    %1584 = vmatpush.xpose.msra.mxu0 0.0
    %1585 = vmatpush.xpose.msra.mxu0 0.0
    %1586 = vmatpush.xpose.msra.mxu0 0.0
    %1587 = vmatpush.xpose.msra.mxu0 0.0
    %1588 = vmatpush.xpose.msra.mxu0 %v1571
    %1589 = vmatmul.f32.gmra.mxu0 %v1569
    %v1590 = vpop.f32.mrf.mxu0
    %v1591 = vadd.f32 0.0, %v1590
    %1592 = vdwg.mxu0
    %1593 = vrot.lane.b32.xlu0 %v996, 104
    %v1594 = vpop.permute.xlu0 %1593
    %1595 = vrot.lane.b32.xlu0 %v996, 72
    %v1596 = vpop.permute.xlu0 %1595
    %v1597 = vsel %vm1006, %v1594, 0
    %v1599 = vsel %vm1006, %v1596, 0
    %1601 = vmatpush.xpose.msra.mxu0 0.0
    %1602 = vmatpush.xpose.msra.mxu0 0.0
    %1603 = vmatpush.xpose.msra.mxu0 0.0
    %1604 = vmatpush.xpose.msra.mxu0 0.0
    %1605 = vmatpush.xpose.msra.mxu0 0.0
    %1606 = vmatpush.xpose.msra.mxu0 0.0
    %1607 = vmatpush.xpose.msra.mxu0 0.0
    %1608 = vmatpush.xpose.msra.mxu0 0.0
    %1609 = vmatpush.xpose.msra.mxu0 0.0
    %1610 = vmatpush.xpose.msra.mxu0 0.0
    %1611 = vmatpush.xpose.msra.mxu0 0.0
    %1612 = vmatpush.xpose.msra.mxu0 0.0
    %1613 = vmatpush.xpose.msra.mxu0 0.0
    %1614 = vmatpush.xpose.msra.mxu0 0.0
    %1615 = vmatpush.xpose.msra.mxu0 0.0
    %1616 = vmatpush.xpose.msra.mxu0 %v1599
    %1617 = vmatmul.f32.gmra.mxu0 %v1597
    %v1618 = vpop.f32.mrf.mxu0
    %v1619 = vadd.f32 0.0, %v1618
    %1620 = vdwg.mxu0
    %v1621 = vmul.f32 %v1591, 0.35355338
    %v1622 = vmul.f32 %v1619, 0.35355338
    %v1623 = vsel %vm1006, %v1621, -inf
    %1624 = vmax.xlane.f32.xlu0 %v1623
    %v1625 = vpop.xlane.xlu0 %1624
    %v1626 = vsel %vm1006, %v1622, -inf
    %1627 = vmax.xlane.f32.xlu0 %v1626
    %v1628 = vpop.xlane.xlu0 %1627
    %v1629 = vsub.f32 %v1621, %v1625
    %v1630 = vsub.f32 %v1622, %v1628
    %v1631 = vmul.f32 %v1629, 1.442695
    %v1632 = vpow.pop %v1631
    %v1633 = vmul.f32 %v1630, 1.442695
    %v1634 = vpow.pop %v1633
    %v1635 = vsel %vm1006, %v1632, 0.0
    %1636 = vadd.xlane.f32.xlu0 %v1635
    %v1637 = vpop.xlane.xlu0 %1636
    %v1638 = vsel %vm1006, %v1634, 0.0
    %1639 = vadd.xlane.f32.xlu0 %v1638
    %v1640 = vpop.xlane.xlu0 %1639
    %v1641 = vrcp.pop %v1637
    %v1642 = vmul.f32 %v1637, %v1641
    %v1643 = vsub.f32 1.0, %v1642
    %v1644 = vmul.f32 %v1641, %v1643
    %v1645 = vadd.f32 %v1641, %v1644
    %vm1646 = vweird.f32 %v1637
    %vm1647 = vweird.f32 %v1641
    %vm1648 = vmor %vm1646, %vm1647
    %v1649 = vsel %vm1648, %v1641, %v1645
    %v1650 = vand.u32 2147483647, %v1637
    %vm1651 = vcmp.eq.f32.partialorder %v1650, 8.507059e+37
    %v1652 = vand.u32 %v1637, 2147483648
    %v1653 = vor.u32 1.1754944e-38, %v1652
    %v1654 = vsel %vm1651, %v1653, %v1649
    %v1655 = vmul.f32 %v1632, %v1654
    %v1656 = vrcp.pop %v1640
    %v1657 = vmul.f32 %v1640, %v1656
    %v1658 = vsub.f32 1.0, %v1657
    %v1659 = vmul.f32 %v1656, %v1658
    %v1660 = vadd.f32 %v1656, %v1659
    %vm1661 = vweird.f32 %v1640
    %vm1662 = vweird.f32 %v1656
    %vm1663 = vmor %vm1661, %vm1662
    %v1664 = vsel %vm1663, %v1656, %v1660
    %v1665 = vand.u32 2147483647, %v1640
    %vm1666 = vcmp.eq.f32.partialorder %v1665, 8.507059e+37
    %v1667 = vand.u32 %v1640, 2147483648
    %v1668 = vor.u32 1.1754944e-38, %v1667
    %v1669 = vsel %vm1666, %v1668, %v1664
    %v1670 = vmul.f32 %v1634, %v1669
    %1671 = vrot.lane.b32.xlu0 %v993, 40
    %v1672 = vpop.permute.xlu0 %1671
    %v1675 = vsel %vm1006, %v1655, 0
    %1677 = vmatpush.msra.mxu0 0.0
    %1678 = vmatpush.msra.mxu0 0.0
    %1679 = vmatpush.msra.mxu0 0.0
    %1680 = vmatpush.msra.mxu0 0.0
    %1681 = vmatpush.msra.mxu0 0.0
    %1682 = vmatpush.msra.mxu0 0.0
    %1683 = vmatpush.msra.mxu0 0.0
    %1684 = vmatpush.msra.mxu0 0.0
    %1685 = vmatpush.msra.mxu0 0.0
    %1686 = vmatpush.msra.mxu0 0.0
    %1687 = vmatpush.msra.mxu0 0.0
    %1688 = vmatpush.msra.mxu0 0.0
    %1689 = vmatpush.msra.mxu0 0.0
    %1690 = vmatpush.msra.mxu0 0.0
    %1691 = vmatpush.msra.mxu0 0.0
    %1692 = vmatpush.msra.mxu0 %v1672
    %1693 = vmatmul.f32.gmra.mxu0 %v1675
    %v1694 = vpop.f32.mrf.mxu0
    %v1695 = vadd.f32 0.0, %v1694
    %1696 = vdwg.mxu0
    %1697 = vrot.lane.b32.xlu0 %v996, 40
    %v1698 = vpop.permute.xlu0 %1697
    %v1701 = vsel %vm1006, %v1670, 0
    %1703 = vmatpush.msra.mxu0 0.0
    %1704 = vmatpush.msra.mxu0 0.0
    %1705 = vmatpush.msra.mxu0 0.0
    %1706 = vmatpush.msra.mxu0 0.0
    %1707 = vmatpush.msra.mxu0 0.0
    %1708 = vmatpush.msra.mxu0 0.0
    %1709 = vmatpush.msra.mxu0 0.0
    %1710 = vmatpush.msra.mxu0 0.0
    %1711 = vmatpush.msra.mxu0 0.0
    %1712 = vmatpush.msra.mxu0 0.0
    %1713 = vmatpush.msra.mxu0 0.0
    %1714 = vmatpush.msra.mxu0 0.0
    %1715 = vmatpush.msra.mxu0 0.0
    %1716 = vmatpush.msra.mxu0 0.0
    %1717 = vmatpush.msra.mxu0 0.0
    %1718 = vmatpush.msra.mxu0 %v1698
    %1719 = vmatmul.f32.gmra.mxu0 %v1701
    %v1720 = vpop.f32.mrf.mxu0
    %v1721 = vadd.f32 0.0, %v1720
    %1722 = vdwg.mxu0
    %v1724 = vsel %vm1006, %v1695, 0
    %v1727 = vsel %vm1006, %v1721, 0
    %1729 = vmatpush.msra.mxu0 0.0
    %1730 = vmatpush.msra.mxu0 0.0
    %1731 = vmatpush.msra.mxu0 0.0
    %1732 = vmatpush.msra.mxu0 0.0
    %1733 = vmatpush.msra.mxu0 0.0
    %1734 = vmatpush.msra.mxu0 0.0
    %1735 = vmatpush.msra.mxu0 0.0
    %1736 = vmatpush.msra.mxu0 0.0
    %1737 = vmatpush.msra.mxu0 0.0
    %1738 = vmatpush.msra.mxu0 0.0
    %1739 = vmatpush.msra.mxu0 0.0
    %1740 = vmatpush.msra.mxu0 0.0
    %1741 = vmatpush.msra.mxu0 0.0
    %1742 = vmatpush.msra.mxu0 0.0
    %1743 = vmatpush.msra.mxu0 0.0
    %1744 = vmatpush.msra.mxu0 %v1001
    %1745 = vmatmul.f32.gmra.mxu0 %v1724
    %v1746 = vpop.f32.mrf.mxu0
    %v1747 = vadd.f32 0.0, %v1746
    %1748 = vmatmul.f32.gmra.mxu0 %v1727
    %v1749 = vpop.f32.mrf.mxu0
    %v1750 = vadd.f32 0.0, %v1749
    %1751 = vdwg.mxu0
    %v1752 = vadd.f32 %v1563, %v1747
    %v1753 = vadd.f32 %v1564, %v1750
    %v1755 = vperm.slane %v1002, 0
    %v1757 = vadd.f32 %v1752, %v1755
    %v1758 = vadd.f32 %v1753, %v1755
    %v1759 = vadd.f32 %v1757, %v965
    %v1760 = vadd.f32 %v1758, %v965
    %v1761 = vsel %vm960, %v1759, 0.0
    %1762 = vadd.xlane.f32.xlu0 %v1761
    %v1763 = vpop.xlane.xlu0 %1762
    %v1764 = vsel %vm960, %v1760, 0.0
    %1765 = vadd.xlane.f32.xlu0 %v1764
    %v1766 = vpop.xlane.xlu0 %1765
    %v1767 = vrcp.pop 32.0
    %v1768 = vmul.f32 32.0, %v1767
    %v1769 = vsub.f32 1.0, %v1768
    %v1770 = vmul.f32 %v1767, %v1769
    %v1771 = vadd.f32 %v1767, %v1770
    %vm1772 = vweird.f32 %v1767
    %v1773 = vsel %vm1772, %v1767, %v1771
    %v1774 = vmul.f32 %v1763, %v1773
    %v1775 = vmul.f32 %v1766, %v1773
    %v1776 = vsub.f32 %v1759, %v1774
    %v1777 = vsub.f32 %v1760, %v1775
    %v1778 = vmul.f32 %v1776, %v1776
    %v1779 = vmul.f32 %v1777, %v1777
    %v1780 = vsel %vm960, %v1778, 0.0
    %1781 = vadd.xlane.f32.xlu0 %v1780
    %v1782 = vpop.xlane.xlu0 %1781
    %v1783 = vsel %vm960, %v1779, 0.0
    %1784 = vadd.xlane.f32.xlu0 %v1783
    %v1785 = vpop.xlane.xlu0 %1784
    %v1786 = vmul.f32 %v1782, %v1773
    %v1787 = vmul.f32 %v1785, %v1773
    %v1788 = vadd.f32 %v1786, 1e-05
    %v1789 = vadd.f32 %v1787, 1e-05
    %v1790 = vrsqrt.pop %v1788
    %v1791 = vmul.f32 %v1790, %v1788
    %v1792 = vmul.f32 %v1791, %v1790
    %v1793 = vmul.f32 0.5, %v1792
    %v1794 = vsub.f32 1.5, %v1793
    %v1795 = vmul.f32 %v1790, %v1794
    %vm1796 = vweird.f32 %v1788
    %vm1797 = vweird.f32 %v1790
    %vm1798 = vmor %vm1796, %vm1797
    %v1799 = vsel %vm1798, %v1790, %v1795
    %v1800 = vrsqrt.pop %v1789
    %v1801 = vmul.f32 %v1800, %v1789
    %v1802 = vmul.f32 %v1801, %v1800
    %v1803 = vmul.f32 0.5, %v1802
    %v1804 = vsub.f32 1.5, %v1803
    %v1805 = vmul.f32 %v1800, %v1804
    %vm1806 = vweird.f32 %v1789
    %vm1807 = vweird.f32 %v1800
    %vm1808 = vmor %vm1806, %vm1807
    %v1809 = vsel %vm1808, %v1800, %v1805
    %v1810 = vmul.f32 %v1776, %v1799
    %v1811 = vmul.f32 %v1777, %v1809
    %v1812 = vperm.slane %v966, 0
    %v1813 = vmul.f32 %v1810, %v1812
    %v1814 = vmul.f32 %v1811, %v1812
    %v1815 = vperm.slane %v967, 0
    %v1816 = vadd.f32 %v1813, %v1815
    %v1817 = vadd.f32 %v1814, %v1815
    %v1818 = vld [vmem:[%s10] sm:$0xff]
    %v1819 = vld [vmem:[%s10 + $0x8] sm:$0xff]
    %v1820 = vld [vmem:[%s10 + $0x10] sm:$0xff]
    %v1821 = vld [vmem:[%s10 + $0x18] sm:$0xff]
    %v1823 = vsel %vm960, %v1816, 0
    %v1826 = vsel %vm960, %v1817, 0
    %1828 = vmatpush.msra.mxu0 0.0
    %1829 = vmatpush.msra.mxu0 0.0
    %1830 = vmatpush.msra.mxu0 0.0
    %1831 = vmatpush.msra.mxu0 0.0
    %1832 = vmatpush.msra.mxu0 0.0
    %1833 = vmatpush.msra.mxu0 0.0
    %1834 = vmatpush.msra.mxu0 0.0
    %1835 = vmatpush.msra.mxu0 0.0
    %1836 = vmatpush.msra.mxu0 0.0
    %1837 = vmatpush.msra.mxu0 0.0
    %1838 = vmatpush.msra.mxu0 0.0
    %1839 = vmatpush.msra.mxu0 0.0
    %1840 = vmatpush.msra.mxu0 %v1821
    %1841 = vmatpush.msra.mxu0 %v1820
    %1842 = vmatpush.msra.mxu0 %v1819
    %1843 = vmatpush.msra.mxu0 %v1818
    %1844 = vmatmul.f32.gmra.mxu0 %v1823
    %v1845 = vpop.f32.mrf.mxu0
    %v1846 = vadd.f32 0.0, %v1845
    %1847 = vmatmul.f32.gmra.mxu0 %v1826
    %v1848 = vpop.f32.mrf.mxu0
    %v1849 = vadd.f32 0.0, %v1848
    %1850 = vdwg.mxu0
    %v1851 = vld [vmem:[%s11] sm:$0xff]
    %v1852 = vld [vmem:[%s11 + $0x8] sm:$0xff]
    %v1853 = vld [vmem:[%s11 + $0x10] sm:$0xff]
    %v1854 = vld [vmem:[%s11 + $0x18] sm:$0xff]
    %v1856 = vsel %vm960, %v956, 0
    %v1859 = vsel %vm960, %v957, 0
    %v1862 = vsel %vm960, %v958, 0
    %v1865 = vsel %vm960, %v959, 0
    %1867 = vmatpush.msra.mxu0 0.0
    %1868 = vmatpush.msra.mxu0 0.0
    %1869 = vmatpush.msra.mxu0 0.0
    %1870 = vmatpush.msra.mxu0 0.0
    %1871 = vmatpush.msra.mxu0 0.0
    %1872 = vmatpush.msra.mxu0 0.0
    %1873 = vmatpush.msra.mxu0 0.0
    %1874 = vmatpush.msra.mxu0 0.0
    %1875 = vmatpush.msra.mxu0 0.0
    %1876 = vmatpush.msra.mxu0 0.0
    %1877 = vmatpush.msra.mxu0 0.0
    %1878 = vmatpush.msra.mxu0 0.0
    %1879 = vmatpush.msra.mxu0 %v1854
    %1880 = vmatpush.msra.mxu0 %v1853
    %1881 = vmatpush.msra.mxu0 %v1852
    %1882 = vmatpush.msra.mxu0 %v1851
    %1883 = vmatmul.f32.gmra.mxu0 %v1856
    %v1884 = vpop.f32.mrf.mxu0
    %v1885 = vadd.f32 0.0, %v1884
    %1886 = vmatmul.f32.gmra.mxu0 %v1859
    %v1887 = vpop.f32.mrf.mxu0
    %v1888 = vadd.f32 0.0, %v1887
    %1889 = vmatmul.f32.gmra.mxu0 %v1862
    %v1890 = vpop.f32.mrf.mxu0
    %v1891 = vadd.f32 0.0, %v1890
    %1892 = vmatmul.f32.gmra.mxu0 %v1865
    %v1893 = vpop.f32.mrf.mxu0
    %v1894 = vadd.f32 0.0, %v1893
    %1895 = vdwg.mxu0
    %v1896 = vld [vmem:[%s12] sm:$0xff]
    %v1897 = vld [vmem:[%s12 + $0x8] sm:$0xff]
    %v1898 = vld [vmem:[%s12 + $0x10] sm:$0xff]
    %v1899 = vld [vmem:[%s12 + $0x18] sm:$0xff]
    %v1900 = vld [vmem:[%s13] sm:$0x1]
    %v1902 = vsel %vm1006, %v1846, 0
    %v1905 = vsel %vm1006, %v1885, 0
    %v1908 = vsel %vm1006, %v1888, 0
    %1910 = vmatpush.xpose.msra.mxu0 0.0
    %1911 = vmatpush.xpose.msra.mxu0 0.0
    %1912 = vmatpush.xpose.msra.mxu0 0.0
    %1913 = vmatpush.xpose.msra.mxu0 0.0
    %1914 = vmatpush.xpose.msra.mxu0 0.0
    %1915 = vmatpush.xpose.msra.mxu0 0.0
    %1916 = vmatpush.xpose.msra.mxu0 0.0
    %1917 = vmatpush.xpose.msra.mxu0 0.0
    %1918 = vmatpush.xpose.msra.mxu0 0.0
    %1919 = vmatpush.xpose.msra.mxu0 0.0
    %1920 = vmatpush.xpose.msra.mxu0 0.0
    %1921 = vmatpush.xpose.msra.mxu0 0.0
    %1922 = vmatpush.xpose.msra.mxu0 0.0
    %1923 = vmatpush.xpose.msra.mxu0 0.0
    %1924 = vmatpush.xpose.msra.mxu0 %v1908
    %1925 = vmatpush.xpose.msra.mxu0 %v1905
    %1926 = vmatmul.f32.gmra.mxu0 %v1902
    %v1927 = vpop.f32.mrf.mxu0
    %v1928 = vadd.f32 0.0, %v1927
    %1929 = vdwg.mxu0
    %v1931 = vsel %vm1006, %v1849, 0
    %v1934 = vsel %vm1006, %v1891, 0
    %v1937 = vsel %vm1006, %v1894, 0
    %1939 = vmatpush.xpose.msra.mxu0 0.0
    %1940 = vmatpush.xpose.msra.mxu0 0.0
    %1941 = vmatpush.xpose.msra.mxu0 0.0
    %1942 = vmatpush.xpose.msra.mxu0 0.0
    %1943 = vmatpush.xpose.msra.mxu0 0.0
    %1944 = vmatpush.xpose.msra.mxu0 0.0
    %1945 = vmatpush.xpose.msra.mxu0 0.0
    %1946 = vmatpush.xpose.msra.mxu0 0.0
    %1947 = vmatpush.xpose.msra.mxu0 0.0
    %1948 = vmatpush.xpose.msra.mxu0 0.0
    %1949 = vmatpush.xpose.msra.mxu0 0.0
    %1950 = vmatpush.xpose.msra.mxu0 0.0
    %1951 = vmatpush.xpose.msra.mxu0 0.0
    %1952 = vmatpush.xpose.msra.mxu0 0.0
    %1953 = vmatpush.xpose.msra.mxu0 %v1937
    %1954 = vmatpush.xpose.msra.mxu0 %v1934
    %1955 = vmatmul.f32.gmra.mxu0 %v1931
    %v1956 = vpop.f32.mrf.mxu0
    %v1957 = vadd.f32 0.0, %v1956
    %1958 = vdwg.mxu0
    %v1959 = vmul.f32 %v1928, 0.35355338
    %v1960 = vmul.f32 %v1957, 0.35355338
    %v1961 = vsel %vm312, %v1959, -inf
    %1962 = vmax.xlane.f32.xlu0 %v1961
    %v1963 = vpop.xlane.xlu0 %1962
    %v1964 = vsel %vm312, %v1960, -inf
    %1965 = vmax.xlane.f32.xlu0 %v1964
    %v1966 = vpop.xlane.xlu0 %1965
    %v1967 = vsub.f32 %v1959, %v1963
    %v1968 = vsub.f32 %v1960, %v1966
    %v1969 = vmul.f32 %v1967, 1.442695
    %v1970 = vpow.pop %v1969
    %v1971 = vmul.f32 %v1968, 1.442695
    %v1972 = vpow.pop %v1971
    %v1973 = vsel %vm312, %v1970, 0.0
    %1974 = vadd.xlane.f32.xlu0 %v1973
    %v1975 = vpop.xlane.xlu0 %1974
    %v1976 = vsel %vm312, %v1972, 0.0
    %1977 = vadd.xlane.f32.xlu0 %v1976
    %v1978 = vpop.xlane.xlu0 %1977
    %v1979 = vrcp.pop %v1975
    %v1980 = vmul.f32 %v1975, %v1979
    %v1981 = vsub.f32 1.0, %v1980
    %v1982 = vmul.f32 %v1979, %v1981
    %v1983 = vadd.f32 %v1979, %v1982
    %vm1984 = vweird.f32 %v1975
    %vm1985 = vweird.f32 %v1979
    %vm1986 = vmor %vm1984, %vm1985
    %v1987 = vsel %vm1986, %v1979, %v1983
    %v1988 = vand.u32 2147483647, %v1975
    %vm1989 = vcmp.eq.f32.partialorder %v1988, 8.507059e+37
    %v1990 = vand.u32 %v1975, 2147483648
    %v1991 = vor.u32 1.1754944e-38, %v1990
    %v1992 = vsel %vm1989, %v1991, %v1987
    %v1993 = vmul.f32 %v1970, %v1992
    %v1994 = vrcp.pop %v1978
    %v1995 = vmul.f32 %v1978, %v1994
    %v1996 = vsub.f32 1.0, %v1995
    %v1997 = vmul.f32 %v1994, %v1996
    %v1998 = vadd.f32 %v1994, %v1997
    %vm1999 = vweird.f32 %v1978
    %vm2000 = vweird.f32 %v1994
    %vm2001 = vmor %vm1999, %vm2000
    %v2002 = vsel %vm2001, %v1994, %v1998
    %v2003 = vand.u32 2147483647, %v1978
    %vm2004 = vcmp.eq.f32.partialorder %v2003, 8.507059e+37
    %v2005 = vand.u32 %v1978, 2147483648
    %v2006 = vor.u32 1.1754944e-38, %v2005
    %v2007 = vsel %vm2004, %v2006, %v2002
    %v2008 = vmul.f32 %v1972, %v2007
    %2009 = vrot.lane.b32.xlu0 %v1885, 96
    %v2010 = vpop.permute.xlu0 %2009
    %2011 = vrot.lane.b32.xlu0 %v1888, 96
    %v2012 = vpop.permute.xlu0 %2011
    %v2016 = vsel %vm312, %v1993, 0
    %2018 = vmatpush.msra.mxu0 0.0
    %2019 = vmatpush.msra.mxu0 0.0
    %2020 = vmatpush.msra.mxu0 0.0
    %2021 = vmatpush.msra.mxu0 0.0
    %2022 = vmatpush.msra.mxu0 0.0
    %2023 = vmatpush.msra.mxu0 0.0
    %2024 = vmatpush.msra.mxu0 0.0
    %2025 = vmatpush.msra.mxu0 0.0
    %2026 = vmatpush.msra.mxu0 0.0
    %2027 = vmatpush.msra.mxu0 0.0
    %2028 = vmatpush.msra.mxu0 0.0
    %2029 = vmatpush.msra.mxu0 0.0
    %2030 = vmatpush.msra.mxu0 0.0
    %2031 = vmatpush.msra.mxu0 0.0
    %2032 = vmatpush.msra.mxu0 %v2012
    %2033 = vmatpush.msra.mxu0 %v2010
    %2034 = vmatmul.f32.gmra.mxu0 %v2016
    %v2035 = vpop.f32.mrf.mxu0
    %v2036 = vadd.f32 0.0, %v2035
    %2037 = vdwg.mxu0
    %2038 = vrot.lane.b32.xlu0 %v1891, 96
    %v2039 = vpop.permute.xlu0 %2038
    %2040 = vrot.lane.b32.xlu0 %v1894, 96
    %v2041 = vpop.permute.xlu0 %2040
    %v2045 = vsel %vm312, %v2008, 0
    %2047 = vmatpush.msra.mxu0 0.0
    %2048 = vmatpush.msra.mxu0 0.0
    %2049 = vmatpush.msra.mxu0 0.0
    %2050 = vmatpush.msra.mxu0 0.0
    %2051 = vmatpush.msra.mxu0 0.0
    %2052 = vmatpush.msra.mxu0 0.0
    %2053 = vmatpush.msra.mxu0 0.0
    %2054 = vmatpush.msra.mxu0 0.0
    %2055 = vmatpush.msra.mxu0 0.0
    %2056 = vmatpush.msra.mxu0 0.0
    %2057 = vmatpush.msra.mxu0 0.0
    %2058 = vmatpush.msra.mxu0 0.0
    %2059 = vmatpush.msra.mxu0 0.0
    %2060 = vmatpush.msra.mxu0 0.0
    %2061 = vmatpush.msra.mxu0 %v2041
    %2062 = vmatpush.msra.mxu0 %v2039
    %2063 = vmatmul.f32.gmra.mxu0 %v2045
    %v2064 = vpop.f32.mrf.mxu0
    %v2065 = vadd.f32 0.0, %v2064
    %2066 = vdwg.mxu0
    %2067 = vrot.lane.b32.xlu0 %v1846, 120
    %v2068 = vpop.permute.xlu0 %2067
    %2069 = vrot.lane.b32.xlu0 %v1885, 120
    %v2070 = vpop.permute.xlu0 %2069
    %2071 = vrot.lane.b32.xlu0 %v1888, 120
    %v2072 = vpop.permute.xlu0 %2071
    %v2073 = vsel %vm1006, %v2068, 0
    %v2075 = vsel %vm1006, %v2070, 0
    %v2077 = vsel %vm1006, %v2072, 0
    %2079 = vmatpush.xpose.msra.mxu0 0.0
    %2080 = vmatpush.xpose.msra.mxu0 0.0
    %2081 = vmatpush.xpose.msra.mxu0 0.0
    %2082 = vmatpush.xpose.msra.mxu0 0.0
    %2083 = vmatpush.xpose.msra.mxu0 0.0
    %2084 = vmatpush.xpose.msra.mxu0 0.0
    %2085 = vmatpush.xpose.msra.mxu0 0.0
    %2086 = vmatpush.xpose.msra.mxu0 0.0
    %2087 = vmatpush.xpose.msra.mxu0 0.0
    %2088 = vmatpush.xpose.msra.mxu0 0.0
    %2089 = vmatpush.xpose.msra.mxu0 0.0
    %2090 = vmatpush.xpose.msra.mxu0 0.0
    %2091 = vmatpush.xpose.msra.mxu0 0.0
    %2092 = vmatpush.xpose.msra.mxu0 0.0
    %2093 = vmatpush.xpose.msra.mxu0 %v2077
    %2094 = vmatpush.xpose.msra.mxu0 %v2075
    %2095 = vmatmul.f32.gmra.mxu0 %v2073
    %v2096 = vpop.f32.mrf.mxu0
    %v2097 = vadd.f32 0.0, %v2096
    %2098 = vdwg.mxu0
    %2099 = vrot.lane.b32.xlu0 %v1849, 120
    %v2100 = vpop.permute.xlu0 %2099
    %2101 = vrot.lane.b32.xlu0 %v1891, 120
    %v2102 = vpop.permute.xlu0 %2101
    %2103 = vrot.lane.b32.xlu0 %v1894, 120
    %v2104 = vpop.permute.xlu0 %2103
    %v2105 = vsel %vm1006, %v2100, 0
    %v2107 = vsel %vm1006, %v2102, 0
    %v2109 = vsel %vm1006, %v2104, 0
    %2111 = vmatpush.xpose.msra.mxu0 0.0
    %2112 = vmatpush.xpose.msra.mxu0 0.0
    %2113 = vmatpush.xpose.msra.mxu0 0.0
    %2114 = vmatpush.xpose.msra.mxu0 0.0
    %2115 = vmatpush.xpose.msra.mxu0 0.0
    %2116 = vmatpush.xpose.msra.mxu0 0.0
    %2117 = vmatpush.xpose.msra.mxu0 0.0
    %2118 = vmatpush.xpose.msra.mxu0 0.0
    %2119 = vmatpush.xpose.msra.mxu0 0.0
    %2120 = vmatpush.xpose.msra.mxu0 0.0
    %2121 = vmatpush.xpose.msra.mxu0 0.0
    %2122 = vmatpush.xpose.msra.mxu0 0.0
    %2123 = vmatpush.xpose.msra.mxu0 0.0
    %2124 = vmatpush.xpose.msra.mxu0 0.0
    %2125 = vmatpush.xpose.msra.mxu0 %v2109
    %2126 = vmatpush.xpose.msra.mxu0 %v2107
    %2127 = vmatmul.f32.gmra.mxu0 %v2105
    %v2128 = vpop.f32.mrf.mxu0
    %v2129 = vadd.f32 0.0, %v2128
    %2130 = vdwg.mxu0
    %v2131 = vmul.f32 %v2097, 0.35355338
    %v2132 = vmul.f32 %v2129, 0.35355338
    %v2133 = vsel %vm312, %v2131, -inf
    %2134 = vmax.xlane.f32.xlu0 %v2133
    %v2135 = vpop.xlane.xlu0 %2134
    %v2136 = vsel %vm312, %v2132, -inf
    %2137 = vmax.xlane.f32.xlu0 %v2136
    %v2138 = vpop.xlane.xlu0 %2137
    %v2139 = vsub.f32 %v2131, %v2135
    %v2140 = vsub.f32 %v2132, %v2138
    %v2141 = vmul.f32 %v2139, 1.442695
    %v2142 = vpow.pop %v2141
    %v2143 = vmul.f32 %v2140, 1.442695
    %v2144 = vpow.pop %v2143
    %v2145 = vsel %vm312, %v2142, 0.0
    %2146 = vadd.xlane.f32.xlu0 %v2145
    %v2147 = vpop.xlane.xlu0 %2146
    %v2148 = vsel %vm312, %v2144, 0.0
    %2149 = vadd.xlane.f32.xlu0 %v2148
    %v2150 = vpop.xlane.xlu0 %2149
    %v2151 = vrcp.pop %v2147
    %v2152 = vmul.f32 %v2147, %v2151
    %v2153 = vsub.f32 1.0, %v2152
    %v2154 = vmul.f32 %v2151, %v2153
    %v2155 = vadd.f32 %v2151, %v2154
    %vm2156 = vweird.f32 %v2147
    %vm2157 = vweird.f32 %v2151
    %vm2158 = vmor %vm2156, %vm2157
    %v2159 = vsel %vm2158, %v2151, %v2155
    %v2160 = vand.u32 2147483647, %v2147
    %vm2161 = vcmp.eq.f32.partialorder %v2160, 8.507059e+37
    %v2162 = vand.u32 %v2147, 2147483648
    %v2163 = vor.u32 1.1754944e-38, %v2162
    %v2164 = vsel %vm2161, %v2163, %v2159
    %v2165 = vmul.f32 %v2142, %v2164
    %v2166 = vrcp.pop %v2150
    %v2167 = vmul.f32 %v2150, %v2166
    %v2168 = vsub.f32 1.0, %v2167
    %v2169 = vmul.f32 %v2166, %v2168
    %v2170 = vadd.f32 %v2166, %v2169
    %vm2171 = vweird.f32 %v2150
    %vm2172 = vweird.f32 %v2166
    %vm2173 = vmor %vm2171, %vm2172
    %v2174 = vsel %vm2173, %v2166, %v2170
    %v2175 = vand.u32 2147483647, %v2150
    %vm2176 = vcmp.eq.f32.partialorder %v2175, 8.507059e+37
    %v2177 = vand.u32 %v2150, 2147483648
    %v2178 = vor.u32 1.1754944e-38, %v2177
    %v2179 = vsel %vm2176, %v2178, %v2174
    %v2180 = vmul.f32 %v2144, %v2179
    %2181 = vrot.lane.b32.xlu0 %v1885, 88
    %v2182 = vpop.permute.xlu0 %2181
    %2183 = vrot.lane.b32.xlu0 %v1888, 88
    %v2184 = vpop.permute.xlu0 %2183
    %v2188 = vsel %vm312, %v2165, 0
    %2190 = vmatpush.msra.mxu0 0.0
    %2191 = vmatpush.msra.mxu0 0.0
    %2192 = vmatpush.msra.mxu0 0.0
    %2193 = vmatpush.msra.mxu0 0.0
    %2194 = vmatpush.msra.mxu0 0.0
    %2195 = vmatpush.msra.mxu0 0.0
    %2196 = vmatpush.msra.mxu0 0.0
    %2197 = vmatpush.msra.mxu0 0.0
    %2198 = vmatpush.msra.mxu0 0.0
    %2199 = vmatpush.msra.mxu0 0.0
    %2200 = vmatpush.msra.mxu0 0.0
    %2201 = vmatpush.msra.mxu0 0.0
    %2202 = vmatpush.msra.mxu0 0.0
    %2203 = vmatpush.msra.mxu0 0.0
    %2204 = vmatpush.msra.mxu0 %v2184
    %2205 = vmatpush.msra.mxu0 %v2182
    %2206 = vmatmul.f32.gmra.mxu0 %v2188
    %v2207 = vpop.f32.mrf.mxu0
    %v2208 = vadd.f32 0.0, %v2207
    %2209 = vdwg.mxu0
    %2210 = vrot.lane.b32.xlu0 %v1891, 88
    %v2211 = vpop.permute.xlu0 %2210
    %2212 = vrot.lane.b32.xlu0 %v1894, 88
    %v2213 = vpop.permute.xlu0 %2212
    %v2217 = vsel %vm312, %v2180, 0
    %2219 = vmatpush.msra.mxu0 0.0
    %2220 = vmatpush.msra.mxu0 0.0
    %2221 = vmatpush.msra.mxu0 0.0
    %2222 = vmatpush.msra.mxu0 0.0
    %2223 = vmatpush.msra.mxu0 0.0
    %2224 = vmatpush.msra.mxu0 0.0
    %2225 = vmatpush.msra.mxu0 0.0
    %2226 = vmatpush.msra.mxu0 0.0
    %2227 = vmatpush.msra.mxu0 0.0
    %2228 = vmatpush.msra.mxu0 0.0
    %2229 = vmatpush.msra.mxu0 0.0
    %2230 = vmatpush.msra.mxu0 0.0
    %2231 = vmatpush.msra.mxu0 0.0
    %2232 = vmatpush.msra.mxu0 0.0
    %2233 = vmatpush.msra.mxu0 %v2213
    %2234 = vmatpush.msra.mxu0 %v2211
    %2235 = vmatmul.f32.gmra.mxu0 %v2217
    %v2236 = vpop.f32.mrf.mxu0
    %v2237 = vadd.f32 0.0, %v2236
    %2238 = vdwg.mxu0
    %v2240 = vsel %vm1006, %v2208, 0
    %v2243 = vsel %vm1006, %v2237, 0
    %2245 = vmatpush.msra.mxu0 0.0
    %2246 = vmatpush.msra.mxu0 0.0
    %2247 = vmatpush.msra.mxu0 0.0
    %2248 = vmatpush.msra.mxu0 0.0
    %2249 = vmatpush.msra.mxu0 0.0
    %2250 = vmatpush.msra.mxu0 0.0
    %2251 = vmatpush.msra.mxu0 0.0
    %2252 = vmatpush.msra.mxu0 0.0
    %2253 = vmatpush.msra.mxu0 0.0
    %2254 = vmatpush.msra.mxu0 0.0
    %2255 = vmatpush.msra.mxu0 0.0
    %2256 = vmatpush.msra.mxu0 0.0
    %2257 = vmatpush.msra.mxu0 0.0
    %2258 = vmatpush.msra.mxu0 0.0
    %2259 = vmatpush.msra.mxu0 0.0
    %2260 = vmatpush.msra.mxu0 %v1897
    %2261 = vmatmul.f32.gmra.mxu0 %v2240
    %v2262 = vpop.f32.mrf.mxu0
    %v2263 = vadd.f32 0.0, %v2262
    %2264 = vmatmul.f32.gmra.mxu0 %v2243
    %v2265 = vpop.f32.mrf.mxu0
    %v2266 = vadd.f32 0.0, %v2265
    %2267 = vdwg.mxu0
    %v2269 = vsel %vm1006, %v2036, 0
    %v2272 = vsel %vm1006, %v2065, 0
    %2274 = vmatpush.msra.mxu0 0.0
    %2275 = vmatpush.msra.mxu0 0.0
    %2276 = vmatpush.msra.mxu0 0.0
    %2277 = vmatpush.msra.mxu0 0.0
    %2278 = vmatpush.msra.mxu0 0.0
    %2279 = vmatpush.msra.mxu0 0.0
    %2280 = vmatpush.msra.mxu0 0.0
    %2281 = vmatpush.msra.mxu0 0.0
    %2282 = vmatpush.msra.mxu0 0.0
    %2283 = vmatpush.msra.mxu0 0.0
    %2284 = vmatpush.msra.mxu0 0.0
    %2285 = vmatpush.msra.mxu0 0.0
    %2286 = vmatpush.msra.mxu0 0.0
    %2287 = vmatpush.msra.mxu0 0.0
    %2288 = vmatpush.msra.mxu0 0.0
    %2289 = vmatpush.msra.mxu0 %v1896
    %2290 = vmatmul.f32.gmra.mxu0 %v2269
    %v2291 = vpop.f32.mrf.mxu0
    %v2292 = vadd.f32 %v2263, %v2291
    %2293 = vmatmul.f32.gmra.mxu0 %v2272
    %v2294 = vpop.f32.mrf.mxu0
    %v2295 = vadd.f32 %v2266, %v2294
    %2296 = vdwg.mxu0
    %2297 = vrot.lane.b32.xlu0 %v1846, 112
    %v2298 = vpop.permute.xlu0 %2297
    %2299 = vrot.lane.b32.xlu0 %v1885, 112
    %v2300 = vpop.permute.xlu0 %2299
    %2301 = vrot.lane.b32.xlu0 %v1888, 112
    %v2302 = vpop.permute.xlu0 %2301
    %v2303 = vsel %vm1006, %v2298, 0
    %v2305 = vsel %vm1006, %v2300, 0
    %v2307 = vsel %vm1006, %v2302, 0
    %2309 = vmatpush.xpose.msra.mxu0 0.0
    %2310 = vmatpush.xpose.msra.mxu0 0.0
    %2311 = vmatpush.xpose.msra.mxu0 0.0
    %2312 = vmatpush.xpose.msra.mxu0 0.0
    %2313 = vmatpush.xpose.msra.mxu0 0.0
    %2314 = vmatpush.xpose.msra.mxu0 0.0
    %2315 = vmatpush.xpose.msra.mxu0 0.0
    %2316 = vmatpush.xpose.msra.mxu0 0.0
    %2317 = vmatpush.xpose.msra.mxu0 0.0
    %2318 = vmatpush.xpose.msra.mxu0 0.0
    %2319 = vmatpush.xpose.msra.mxu0 0.0
    %2320 = vmatpush.xpose.msra.mxu0 0.0
    %2321 = vmatpush.xpose.msra.mxu0 0.0
    %2322 = vmatpush.xpose.msra.mxu0 0.0
    %2323 = vmatpush.xpose.msra.mxu0 %v2307
    %2324 = vmatpush.xpose.msra.mxu0 %v2305
    %2325 = vmatmul.f32.gmra.mxu0 %v2303
    %v2326 = vpop.f32.mrf.mxu0
    %v2327 = vadd.f32 0.0, %v2326
    %2328 = vdwg.mxu0
    %2329 = vrot.lane.b32.xlu0 %v1849, 112
    %v2330 = vpop.permute.xlu0 %2329
    %2331 = vrot.lane.b32.xlu0 %v1891, 112
    %v2332 = vpop.permute.xlu0 %2331
    %2333 = vrot.lane.b32.xlu0 %v1894, 112
    %v2334 = vpop.permute.xlu0 %2333
    %v2335 = vsel %vm1006, %v2330, 0
    %v2337 = vsel %vm1006, %v2332, 0
    %v2339 = vsel %vm1006, %v2334, 0
    %2341 = vmatpush.xpose.msra.mxu0 0.0
    %2342 = vmatpush.xpose.msra.mxu0 0.0
    %2343 = vmatpush.xpose.msra.mxu0 0.0
    %2344 = vmatpush.xpose.msra.mxu0 0.0
    %2345 = vmatpush.xpose.msra.mxu0 0.0
    %2346 = vmatpush.xpose.msra.mxu0 0.0
    %2347 = vmatpush.xpose.msra.mxu0 0.0
    %2348 = vmatpush.xpose.msra.mxu0 0.0
    %2349 = vmatpush.xpose.msra.mxu0 0.0
    %2350 = vmatpush.xpose.msra.mxu0 0.0
    %2351 = vmatpush.xpose.msra.mxu0 0.0
    %2352 = vmatpush.xpose.msra.mxu0 0.0
    %2353 = vmatpush.xpose.msra.mxu0 0.0
    %2354 = vmatpush.xpose.msra.mxu0 0.0
    %2355 = vmatpush.xpose.msra.mxu0 %v2339
    %2356 = vmatpush.xpose.msra.mxu0 %v2337
    %2357 = vmatmul.f32.gmra.mxu0 %v2335
    %v2358 = vpop.f32.mrf.mxu0
    %v2359 = vadd.f32 0.0, %v2358
    %2360 = vdwg.mxu0
    %v2361 = vmul.f32 %v2327, 0.35355338
    %v2362 = vmul.f32 %v2359, 0.35355338
    %v2363 = vsel %vm312, %v2361, -inf
    %2364 = vmax.xlane.f32.xlu0 %v2363
    %v2365 = vpop.xlane.xlu0 %2364
    %v2366 = vsel %vm312, %v2362, -inf
    %2367 = vmax.xlane.f32.xlu0 %v2366
    %v2368 = vpop.xlane.xlu0 %2367
    %v2369 = vsub.f32 %v2361, %v2365
    %v2370 = vsub.f32 %v2362, %v2368
    %v2371 = vmul.f32 %v2369, 1.442695
    %v2372 = vpow.pop %v2371
    %v2373 = vmul.f32 %v2370, 1.442695
    %v2374 = vpow.pop %v2373
    %v2375 = vsel %vm312, %v2372, 0.0
    %2376 = vadd.xlane.f32.xlu0 %v2375
    %v2377 = vpop.xlane.xlu0 %2376
    %v2378 = vsel %vm312, %v2374, 0.0
    %2379 = vadd.xlane.f32.xlu0 %v2378
    %v2380 = vpop.xlane.xlu0 %2379
    %v2381 = vrcp.pop %v2377
    %v2382 = vmul.f32 %v2377, %v2381
    %v2383 = vsub.f32 1.0, %v2382
    %v2384 = vmul.f32 %v2381, %v2383
    %v2385 = vadd.f32 %v2381, %v2384
    %vm2386 = vweird.f32 %v2377
    %vm2387 = vweird.f32 %v2381
    %vm2388 = vmor %vm2386, %vm2387
    %v2389 = vsel %vm2388, %v2381, %v2385
    %v2390 = vand.u32 2147483647, %v2377
    %vm2391 = vcmp.eq.f32.partialorder %v2390, 8.507059e+37
    %v2392 = vand.u32 %v2377, 2147483648
    %v2393 = vor.u32 1.1754944e-38, %v2392
    %v2394 = vsel %vm2391, %v2393, %v2389
    %v2395 = vmul.f32 %v2372, %v2394
    %v2396 = vrcp.pop %v2380
    %v2397 = vmul.f32 %v2380, %v2396
    %v2398 = vsub.f32 1.0, %v2397
    %v2399 = vmul.f32 %v2396, %v2398
    %v2400 = vadd.f32 %v2396, %v2399
    %vm2401 = vweird.f32 %v2380
    %vm2402 = vweird.f32 %v2396
    %vm2403 = vmor %vm2401, %vm2402
    %v2404 = vsel %vm2403, %v2396, %v2400
    %v2405 = vand.u32 2147483647, %v2380
    %vm2406 = vcmp.eq.f32.partialorder %v2405, 8.507059e+37
    %v2407 = vand.u32 %v2380, 2147483648
    %v2408 = vor.u32 1.1754944e-38, %v2407
    %v2409 = vsel %vm2406, %v2408, %v2404
    %v2410 = vmul.f32 %v2374, %v2409
    %2411 = vrot.lane.b32.xlu0 %v1885, 80
    %v2412 = vpop.permute.xlu0 %2411
    %2413 = vrot.lane.b32.xlu0 %v1888, 80
    %v2414 = vpop.permute.xlu0 %2413
    %v2418 = vsel %vm312, %v2395, 0
    %2420 = vmatpush.msra.mxu0 0.0
    %2421 = vmatpush.msra.mxu0 0.0
    %2422 = vmatpush.msra.mxu0 0.0
    %2423 = vmatpush.msra.mxu0 0.0
    %2424 = vmatpush.msra.mxu0 0.0
    %2425 = vmatpush.msra.mxu0 0.0
    %2426 = vmatpush.msra.mxu0 0.0
    %2427 = vmatpush.msra.mxu0 0.0
    %2428 = vmatpush.msra.mxu0 0.0
    %2429 = vmatpush.msra.mxu0 0.0
    %2430 = vmatpush.msra.mxu0 0.0
    %2431 = vmatpush.msra.mxu0 0.0
    %2432 = vmatpush.msra.mxu0 0.0
    %2433 = vmatpush.msra.mxu0 0.0
    %2434 = vmatpush.msra.mxu0 %v2414
    %2435 = vmatpush.msra.mxu0 %v2412
    %2436 = vmatmul.f32.gmra.mxu0 %v2418
    %v2437 = vpop.f32.mrf.mxu0
    %v2438 = vadd.f32 0.0, %v2437
    %2439 = vdwg.mxu0
    %2440 = vrot.lane.b32.xlu0 %v1891, 80
    %v2441 = vpop.permute.xlu0 %2440
    %2442 = vrot.lane.b32.xlu0 %v1894, 80
    %v2443 = vpop.permute.xlu0 %2442
    %v2447 = vsel %vm312, %v2410, 0
    %2449 = vmatpush.msra.mxu0 0.0
    %2450 = vmatpush.msra.mxu0 0.0
    %2451 = vmatpush.msra.mxu0 0.0
    %2452 = vmatpush.msra.mxu0 0.0
    %2453 = vmatpush.msra.mxu0 0.0
    %2454 = vmatpush.msra.mxu0 0.0
    %2455 = vmatpush.msra.mxu0 0.0
    %2456 = vmatpush.msra.mxu0 0.0
    %2457 = vmatpush.msra.mxu0 0.0
    %2458 = vmatpush.msra.mxu0 0.0
    %2459 = vmatpush.msra.mxu0 0.0
    %2460 = vmatpush.msra.mxu0 0.0
    %2461 = vmatpush.msra.mxu0 0.0
    %2462 = vmatpush.msra.mxu0 0.0
    %2463 = vmatpush.msra.mxu0 %v2443
    %2464 = vmatpush.msra.mxu0 %v2441
    %2465 = vmatmul.f32.gmra.mxu0 %v2447
    %v2466 = vpop.f32.mrf.mxu0
    %v2467 = vadd.f32 0.0, %v2466
    %2468 = vdwg.mxu0
    %v2470 = vsel %vm1006, %v2438, 0
    %v2473 = vsel %vm1006, %v2467, 0
    %2475 = vmatpush.msra.mxu0 0.0
    %2476 = vmatpush.msra.mxu0 0.0
    %2477 = vmatpush.msra.mxu0 0.0
    %2478 = vmatpush.msra.mxu0 0.0
    %2479 = vmatpush.msra.mxu0 0.0
    %2480 = vmatpush.msra.mxu0 0.0
    %2481 = vmatpush.msra.mxu0 0.0
    %2482 = vmatpush.msra.mxu0 0.0
    %2483 = vmatpush.msra.mxu0 0.0
    %2484 = vmatpush.msra.mxu0 0.0
    %2485 = vmatpush.msra.mxu0 0.0
    %2486 = vmatpush.msra.mxu0 0.0
    %2487 = vmatpush.msra.mxu0 0.0
    %2488 = vmatpush.msra.mxu0 0.0
    %2489 = vmatpush.msra.mxu0 0.0
    %2490 = vmatpush.msra.mxu0 %v1898
    %2491 = vmatmul.f32.gmra.mxu0 %v2470
    %v2492 = vpop.f32.mrf.mxu0
    %v2493 = vadd.f32 0.0, %v2492
    %2494 = vmatmul.f32.gmra.mxu0 %v2473
    %v2495 = vpop.f32.mrf.mxu0
    %v2496 = vadd.f32 0.0, %v2495
    %2497 = vdwg.mxu0
    %v2498 = vadd.f32 %v2292, %v2493
    %v2499 = vadd.f32 %v2295, %v2496
    %2500 = vrot.lane.b32.xlu0 %v1846, 104
    %v2501 = vpop.permute.xlu0 %2500
    %2502 = vrot.lane.b32.xlu0 %v1885, 104
    %v2503 = vpop.permute.xlu0 %2502
    %2504 = vrot.lane.b32.xlu0 %v1888, 104
    %v2505 = vpop.permute.xlu0 %2504
    %v2506 = vsel %vm1006, %v2501, 0
    %v2508 = vsel %vm1006, %v2503, 0
    %v2510 = vsel %vm1006, %v2505, 0
    %2512 = vmatpush.xpose.msra.mxu0 0.0
    %2513 = vmatpush.xpose.msra.mxu0 0.0
    %2514 = vmatpush.xpose.msra.mxu0 0.0
    %2515 = vmatpush.xpose.msra.mxu0 0.0
    %2516 = vmatpush.xpose.msra.mxu0 0.0
    %2517 = vmatpush.xpose.msra.mxu0 0.0
    %2518 = vmatpush.xpose.msra.mxu0 0.0
    %2519 = vmatpush.xpose.msra.mxu0 0.0
    %2520 = vmatpush.xpose.msra.mxu0 0.0
    %2521 = vmatpush.xpose.msra.mxu0 0.0
    %2522 = vmatpush.xpose.msra.mxu0 0.0
    %2523 = vmatpush.xpose.msra.mxu0 0.0
    %2524 = vmatpush.xpose.msra.mxu0 0.0
    %2525 = vmatpush.xpose.msra.mxu0 0.0
    %2526 = vmatpush.xpose.msra.mxu0 %v2510
    %2527 = vmatpush.xpose.msra.mxu0 %v2508
    %2528 = vmatmul.f32.gmra.mxu0 %v2506
    %v2529 = vpop.f32.mrf.mxu0
    %v2530 = vadd.f32 0.0, %v2529
    %2531 = vdwg.mxu0
    %2532 = vrot.lane.b32.xlu0 %v1849, 104
    %v2533 = vpop.permute.xlu0 %2532
    %2534 = vrot.lane.b32.xlu0 %v1891, 104
    %v2535 = vpop.permute.xlu0 %2534
    %2536 = vrot.lane.b32.xlu0 %v1894, 104
    %v2537 = vpop.permute.xlu0 %2536
    %v2538 = vsel %vm1006, %v2533, 0
    %v2540 = vsel %vm1006, %v2535, 0
    %v2542 = vsel %vm1006, %v2537, 0
    %2544 = vmatpush.xpose.msra.mxu0 0.0
    %2545 = vmatpush.xpose.msra.mxu0 0.0
    %2546 = vmatpush.xpose.msra.mxu0 0.0
    %2547 = vmatpush.xpose.msra.mxu0 0.0
    %2548 = vmatpush.xpose.msra.mxu0 0.0
    %2549 = vmatpush.xpose.msra.mxu0 0.0
    %2550 = vmatpush.xpose.msra.mxu0 0.0
    %2551 = vmatpush.xpose.msra.mxu0 0.0
    %2552 = vmatpush.xpose.msra.mxu0 0.0
    %2553 = vmatpush.xpose.msra.mxu0 0.0
    %2554 = vmatpush.xpose.msra.mxu0 0.0
    %2555 = vmatpush.xpose.msra.mxu0 0.0
    %2556 = vmatpush.xpose.msra.mxu0 0.0
    %2557 = vmatpush.xpose.msra.mxu0 0.0
    %2558 = vmatpush.xpose.msra.mxu0 %v2542
    %2559 = vmatpush.xpose.msra.mxu0 %v2540
    %2560 = vmatmul.f32.gmra.mxu0 %v2538
    %v2561 = vpop.f32.mrf.mxu0
    %v2562 = vadd.f32 0.0, %v2561
    %2563 = vdwg.mxu0
    %v2564 = vmul.f32 %v2530, 0.35355338
    %v2565 = vmul.f32 %v2562, 0.35355338
    %v2566 = vsel %vm312, %v2564, -inf
    %2567 = vmax.xlane.f32.xlu0 %v2566
    %v2568 = vpop.xlane.xlu0 %2567
    %v2569 = vsel %vm312, %v2565, -inf
    %2570 = vmax.xlane.f32.xlu0 %v2569
    %v2571 = vpop.xlane.xlu0 %2570
    %v2572 = vsub.f32 %v2564, %v2568
    %v2573 = vsub.f32 %v2565, %v2571
    %v2574 = vmul.f32 %v2572, 1.442695
    %v2575 = vpow.pop %v2574
    %v2576 = vmul.f32 %v2573, 1.442695
    %v2577 = vpow.pop %v2576
    %v2578 = vsel %vm312, %v2575, 0.0
    %2579 = vadd.xlane.f32.xlu0 %v2578
    %v2580 = vpop.xlane.xlu0 %2579
    %v2581 = vsel %vm312, %v2577, 0.0
    %2582 = vadd.xlane.f32.xlu0 %v2581
    %v2583 = vpop.xlane.xlu0 %2582
    %v2584 = vrcp.pop %v2580
    %v2585 = vmul.f32 %v2580, %v2584
    %v2586 = vsub.f32 1.0, %v2585
    %v2587 = vmul.f32 %v2584, %v2586
    %v2588 = vadd.f32 %v2584, %v2587
    %vm2589 = vweird.f32 %v2580
    %vm2590 = vweird.f32 %v2584
    %vm2591 = vmor %vm2589, %vm2590
    %v2592 = vsel %vm2591, %v2584, %v2588
    %v2593 = vand.u32 2147483647, %v2580
    %vm2594 = vcmp.eq.f32.partialorder %v2593, 8.507059e+37
    %v2595 = vand.u32 %v2580, 2147483648
    %v2596 = vor.u32 1.1754944e-38, %v2595
    %v2597 = vsel %vm2594, %v2596, %v2592
    %v2598 = vmul.f32 %v2575, %v2597
    %v2599 = vrcp.pop %v2583
    %v2600 = vmul.f32 %v2583, %v2599
    %v2601 = vsub.f32 1.0, %v2600
    %v2602 = vmul.f32 %v2599, %v2601
    %v2603 = vadd.f32 %v2599, %v2602
    %vm2604 = vweird.f32 %v2583
    %vm2605 = vweird.f32 %v2599
    %vm2606 = vmor %vm2604, %vm2605
    %v2607 = vsel %vm2606, %v2599, %v2603
    %v2608 = vand.u32 2147483647, %v2583
    %vm2609 = vcmp.eq.f32.partialorder %v2608, 8.507059e+37
    %v2610 = vand.u32 %v2583, 2147483648
    %v2611 = vor.u32 1.1754944e-38, %v2610
    %v2612 = vsel %vm2609, %v2611, %v2607
    %v2613 = vmul.f32 %v2577, %v2612
    %2614 = vrot.lane.b32.xlu0 %v1885, 72
    %v2615 = vpop.permute.xlu0 %2614
    %2616 = vrot.lane.b32.xlu0 %v1888, 72
    %v2617 = vpop.permute.xlu0 %2616
    %v2621 = vsel %vm312, %v2598, 0
    %2623 = vmatpush.msra.mxu0 0.0
    %2624 = vmatpush.msra.mxu0 0.0
    %2625 = vmatpush.msra.mxu0 0.0
    %2626 = vmatpush.msra.mxu0 0.0
    %2627 = vmatpush.msra.mxu0 0.0
    %2628 = vmatpush.msra.mxu0 0.0
    %2629 = vmatpush.msra.mxu0 0.0
    %2630 = vmatpush.msra.mxu0 0.0
    %2631 = vmatpush.msra.mxu0 0.0
    %2632 = vmatpush.msra.mxu0 0.0
    %2633 = vmatpush.msra.mxu0 0.0
    %2634 = vmatpush.msra.mxu0 0.0
    %2635 = vmatpush.msra.mxu0 0.0
    %2636 = vmatpush.msra.mxu0 0.0
    %2637 = vmatpush.msra.mxu0 %v2617
    %2638 = vmatpush.msra.mxu0 %v2615
    %2639 = vmatmul.f32.gmra.mxu0 %v2621
    %v2640 = vpop.f32.mrf.mxu0
    %v2641 = vadd.f32 0.0, %v2640
    %2642 = vdwg.mxu0
    %2643 = vrot.lane.b32.xlu0 %v1891, 72
    %v2644 = vpop.permute.xlu0 %2643
    %2645 = vrot.lane.b32.xlu0 %v1894, 72
    %v2646 = vpop.permute.xlu0 %2645
    %v2650 = vsel %vm312, %v2613, 0
    %2652 = vmatpush.msra.mxu0 0.0
    %2653 = vmatpush.msra.mxu0 0.0
    %2654 = vmatpush.msra.mxu0 0.0
    %2655 = vmatpush.msra.mxu0 0.0
    %2656 = vmatpush.msra.mxu0 0.0
    %2657 = vmatpush.msra.mxu0 0.0
    %2658 = vmatpush.msra.mxu0 0.0
    %2659 = vmatpush.msra.mxu0 0.0
    %2660 = vmatpush.msra.mxu0 0.0
    %2661 = vmatpush.msra.mxu0 0.0
    %2662 = vmatpush.msra.mxu0 0.0
    %2663 = vmatpush.msra.mxu0 0.0
    %2664 = vmatpush.msra.mxu0 0.0
    %2665 = vmatpush.msra.mxu0 0.0
    %2666 = vmatpush.msra.mxu0 %v2646
    %2667 = vmatpush.msra.mxu0 %v2644
    %2668 = vmatmul.f32.gmra.mxu0 %v2650
    %v2669 = vpop.f32.mrf.mxu0
    %v2670 = vadd.f32 0.0, %v2669
    %2671 = vdwg.mxu0
    %v2673 = vsel %vm1006, %v2641, 0
    %v2676 = vsel %vm1006, %v2670, 0
    %2678 = vmatpush.msra.mxu0 0.0
    %2679 = vmatpush.msra.mxu0 0.0
    %2680 = vmatpush.msra.mxu0 0.0
    %2681 = vmatpush.msra.mxu0 0.0
    %2682 = vmatpush.msra.mxu0 0.0
    %2683 = vmatpush.msra.mxu0 0.0
    %2684 = vmatpush.msra.mxu0 0.0
    %2685 = vmatpush.msra.mxu0 0.0
    %2686 = vmatpush.msra.mxu0 0.0
    %2687 = vmatpush.msra.mxu0 0.0
    %2688 = vmatpush.msra.mxu0 0.0
    %2689 = vmatpush.msra.mxu0 0.0
    %2690 = vmatpush.msra.mxu0 0.0
    %2691 = vmatpush.msra.mxu0 0.0
    %2692 = vmatpush.msra.mxu0 0.0
    %2693 = vmatpush.msra.mxu0 %v1899
    %2694 = vmatmul.f32.gmra.mxu0 %v2673
    %v2695 = vpop.f32.mrf.mxu0
    %v2696 = vadd.f32 0.0, %v2695
    %2697 = vmatmul.f32.gmra.mxu0 %v2676
    %v2698 = vpop.f32.mrf.mxu0
    %v2699 = vadd.f32 0.0, %v2698
    %2700 = vdwg.mxu0
    %v2701 = vadd.f32 %v2498, %v2696
    %v2702 = vadd.f32 %v2499, %v2699
    %v2704 = vperm.slane %v1900, 0
    %v2706 = vadd.f32 %v2701, %v2704
    %v2707 = vadd.f32 %v2702, %v2704
    %v2708 = vadd.f32 %v2706, %v1816
    %v2709 = vadd.f32 %v2707, %v1817
    %v2710 = vsel %vm960, %v2708, 0.0
    %2711 = vadd.xlane.f32.xlu0 %v2710
    %v2712 = vpop.xlane.xlu0 %2711
    %v2713 = vsel %vm960, %v2709, 0.0
    %2714 = vadd.xlane.f32.xlu0 %v2713
    %v2715 = vpop.xlane.xlu0 %2714
    %v2716 = vmul.f32 %v2712, %v1773
    %v2717 = vmul.f32 %v2715, %v1773
    %v2718 = vsub.f32 %v2708, %v2716
    %v2719 = vsub.f32 %v2709, %v2717
    %v2720 = vmul.f32 %v2718, %v2718
    %v2721 = vmul.f32 %v2719, %v2719
    %v2722 = vsel %vm960, %v2720, 0.0
    %2723 = vadd.xlane.f32.xlu0 %v2722
    %v2724 = vpop.xlane.xlu0 %2723
    %v2725 = vsel %vm960, %v2721, 0.0
    %2726 = vadd.xlane.f32.xlu0 %v2725
    %v2727 = vpop.xlane.xlu0 %2726
    %v2728 = vmul.f32 %v2724, %v1773
    %v2729 = vmul.f32 %v2727, %v1773
    %v2730 = vadd.f32 %v2728, 1e-05
    %v2731 = vadd.f32 %v2729, 1e-05
    %v2732 = vrsqrt.pop %v2730
    %v2733 = vmul.f32 %v2732, %v2730
    %v2734 = vmul.f32 %v2733, %v2732
    %v2735 = vmul.f32 0.5, %v2734
    %v2736 = vsub.f32 1.5, %v2735
    %v2737 = vmul.f32 %v2732, %v2736
    %vm2738 = vweird.f32 %v2730
    %vm2739 = vweird.f32 %v2732
    %vm2740 = vmor %vm2738, %vm2739
    %v2741 = vsel %vm2740, %v2732, %v2737
    %v2742 = vrsqrt.pop %v2731
    %v2743 = vmul.f32 %v2742, %v2731
    %v2744 = vmul.f32 %v2743, %v2742
    %v2745 = vmul.f32 0.5, %v2744
    %v2746 = vsub.f32 1.5, %v2745
    %v2747 = vmul.f32 %v2742, %v2746
    %vm2748 = vweird.f32 %v2731
    %vm2749 = vweird.f32 %v2742
    %vm2750 = vmor %vm2748, %vm2749
    %v2751 = vsel %vm2750, %v2742, %v2747
    %v2752 = vmul.f32 %v2718, %v2741
    %v2753 = vmul.f32 %v2719, %v2751
    %v2754 = vperm.slane %v966, 1
    %v2755 = vmul.f32 %v2752, %v2754
    %v2756 = vmul.f32 %v2753, %v2754
    %v2757 = vperm.slane %v967, 1
    %v2758 = vadd.f32 %v2755, %v2757
    %v2759 = vadd.f32 %v2756, %v2757
    %v2760 = vld [vmem:[%s14] sm:$0xff]
    %v2761 = vld [vmem:[%s14 + $0x8] sm:$0xff]
    %v2762 = vld [vmem:[%s14 + $0x10] sm:$0xff]
    %v2763 = vld [vmem:[%s14 + $0x18] sm:$0xff]
    %v2764 = vld [vmem:[%s15] sm:$0x1]
    %v2766 = vperm.slane %v2764, 0
    %v2769 = vsel %vm960, %v2758, 0
    %v2772 = vsel %vm960, %v2759, 0
    %2774 = vmatpush.msra.mxu0 0.0
    %2775 = vmatpush.msra.mxu0 0.0
    %2776 = vmatpush.msra.mxu0 0.0
    %2777 = vmatpush.msra.mxu0 0.0
    %2778 = vmatpush.msra.mxu0 0.0
    %2779 = vmatpush.msra.mxu0 0.0
    %2780 = vmatpush.msra.mxu0 0.0
    %2781 = vmatpush.msra.mxu0 0.0
    %2782 = vmatpush.msra.mxu0 0.0
    %2783 = vmatpush.msra.mxu0 0.0
    %2784 = vmatpush.msra.mxu0 0.0
    %2785 = vmatpush.msra.mxu0 0.0
    %2786 = vmatpush.msra.mxu0 %v2763
    %2787 = vmatpush.msra.mxu0 %v2762
    %2788 = vmatpush.msra.mxu0 %v2761
    %2789 = vmatpush.msra.mxu0 %v2760
    %2790 = vmatmul.f32.gmra.mxu0 %v2769
    %v2791 = vpop.f32.mrf.mxu0
    %v2792 = vadd.f32 %v2766, %v2791
    %2793 = vmatmul.f32.gmra.mxu0 %v2772
    %v2794 = vpop.f32.mrf.mxu0
    %v2795 = vadd.f32 %v2766, %v2794
    %2796 = vdwg.mxu0
    %v2797 = vmax.f32 %v2792, 0.0
    %v2798 = vmax.f32 %v2795, 0.0
    %v2799 = vld [vmem:[%s16] sm:$0xff]
    %v2800 = vld [vmem:[%s16 + $0x8] sm:$0xff]
    %v2801 = vld [vmem:[%s16 + $0x10] sm:$0xff]
    %v2802 = vld [vmem:[%s16 + $0x18] sm:$0xff]
    %v2803 = vld [vmem:[%s16 + $0x20] sm:$0xff]
    %v2804 = vld [vmem:[%s16 + $0x28] sm:$0xff]
    %v2805 = vld [vmem:[%s16 + $0x30] sm:$0xff]
    %v2806 = vld [vmem:[%s16 + $0x38] sm:$0xff]
    %v2807 = vld [vmem:[%s17] sm:$0x1]
    %v2809 = vperm.slane %v2807, 0
    %vm2811 = vcmask 523264
    %v2813 = vsel %vm2811, %v2797, 0
    %v2816 = vsel %vm2811, %v2798, 0
    %2818 = vmatpush.msra.mxu0 0.0
    %2819 = vmatpush.msra.mxu0 0.0
    %2820 = vmatpush.msra.mxu0 0.0
    %2821 = vmatpush.msra.mxu0 0.0
    %2822 = vmatpush.msra.mxu0 0.0
    %2823 = vmatpush.msra.mxu0 0.0
    %2824 = vmatpush.msra.mxu0 0.0
    %2825 = vmatpush.msra.mxu0 0.0
    %2826 = vmatpush.msra.mxu0 %v2806
    %2827 = vmatpush.msra.mxu0 %v2805
    %2828 = vmatpush.msra.mxu0 %v2804
    %2829 = vmatpush.msra.mxu0 %v2803
    %2830 = vmatpush.msra.mxu0 %v2802
    %2831 = vmatpush.msra.mxu0 %v2801
    %2832 = vmatpush.msra.mxu0 %v2800
    %2833 = vmatpush.msra.mxu0 %v2799
    %2834 = vmatmul.f32.gmra.mxu0 %v2813
    %v2835 = vpop.f32.mrf.mxu0
    %v2836 = vadd.f32 %v2809, %v2835
    %2837 = vmatmul.f32.gmra.mxu0 %v2816
    %v2838 = vpop.f32.mrf.mxu0
    %v2839 = vadd.f32 %v2809, %v2838
    %2840 = vdwg.mxu0
    %v2841 = vadd.f32 %v2836, %v2758
    %v2842 = vadd.f32 %v2839, %v2759
    %v2843 = vsel %vm960, %v2841, 0.0
    %2844 = vadd.xlane.f32.xlu0 %v2843
    %v2845 = vpop.xlane.xlu0 %2844
    %v2846 = vsel %vm960, %v2842, 0.0
    %2847 = vadd.xlane.f32.xlu0 %v2846
    %v2848 = vpop.xlane.xlu0 %2847
    %v2849 = vmul.f32 %v2845, %v1773
    %v2850 = vmul.f32 %v2848, %v1773
    %v2851 = vsub.f32 %v2841, %v2849
    %v2852 = vsub.f32 %v2842, %v2850
    %v2853 = vmul.f32 %v2851, %v2851
    %v2854 = vmul.f32 %v2852, %v2852
    %v2855 = vsel %vm960, %v2853, 0.0
    %2856 = vadd.xlane.f32.xlu0 %v2855
    %v2857 = vpop.xlane.xlu0 %2856
    %v2858 = vsel %vm960, %v2854, 0.0
    %2859 = vadd.xlane.f32.xlu0 %v2858
    %v2860 = vpop.xlane.xlu0 %2859
    %v2861 = vmul.f32 %v2857, %v1773
    %v2862 = vmul.f32 %v2860, %v1773
    %v2863 = vadd.f32 %v2861, 1e-05
    %v2864 = vadd.f32 %v2862, 1e-05
    %v2865 = vrsqrt.pop %v2863
    %v2866 = vmul.f32 %v2865, %v2863
    %v2867 = vmul.f32 %v2866, %v2865
    %v2868 = vmul.f32 0.5, %v2867
    %v2869 = vsub.f32 1.5, %v2868
    %v2870 = vmul.f32 %v2865, %v2869
    %vm2871 = vweird.f32 %v2863
    %vm2872 = vweird.f32 %v2865
    %vm2873 = vmor %vm2871, %vm2872
    %v2874 = vsel %vm2873, %v2865, %v2870
    %v2875 = vrsqrt.pop %v2864
    %v2876 = vmul.f32 %v2875, %v2864
    %v2877 = vmul.f32 %v2876, %v2875
    %v2878 = vmul.f32 0.5, %v2877
    %v2879 = vsub.f32 1.5, %v2878
    %v2880 = vmul.f32 %v2875, %v2879
    %vm2881 = vweird.f32 %v2864
    %vm2882 = vweird.f32 %v2875
    %vm2883 = vmor %vm2881, %vm2882
    %v2884 = vsel %vm2883, %v2875, %v2880
    %v2885 = vmul.f32 %v2851, %v2874
    %v2886 = vmul.f32 %v2852, %v2884
    %v2887 = vperm.slane %v966, 2
    %v2888 = vmul.f32 %v2885, %v2887
    %v2889 = vmul.f32 %v2886, %v2887
    %v2890 = vperm.slane %v967, 2
    %v2891 = vadd.f32 %v2888, %v2890
    %v2892 = vadd.f32 %v2889, %v2890
    %s2893 = scalar_lea.vmem %s18, 4
    %v2894 = vld [vmem:[%s2893] sm:$0x7]
    %s2895 = scalar_lea.vmem %s19, 4
    %v2896 = vld [vmem:[%s2895] sm:$0x7]
    %s2897 = scalar_lea.vmem %s7, 32
    %v2898 = vld [vmem:[%s2897] sm:$0xff]
    %v2899 = vld [vmem:[%s2897 + $0x8] sm:$0xff]
    %v2900 = vld [vmem:[%s2897 + $0x10] sm:$0xff]
    %v2901 = vld [vmem:[%s2897 + $0x18] sm:$0xff]
    %v2903 = vsel %vm960, %v2891, 0
    %v2906 = vsel %vm960, %v2892, 0
    %2908 = vmatpush.msra.mxu0 0.0
    %2909 = vmatpush.msra.mxu0 0.0
    %2910 = vmatpush.msra.mxu0 0.0
    %2911 = vmatpush.msra.mxu0 0.0
    %2912 = vmatpush.msra.mxu0 0.0
    %2913 = vmatpush.msra.mxu0 0.0
    %2914 = vmatpush.msra.mxu0 0.0
    %2915 = vmatpush.msra.mxu0 0.0
    %2916 = vmatpush.msra.mxu0 0.0
    %2917 = vmatpush.msra.mxu0 0.0
    %2918 = vmatpush.msra.mxu0 0.0
    %2919 = vmatpush.msra.mxu0 0.0
    %2920 = vmatpush.msra.mxu0 %v2901
    %2921 = vmatpush.msra.mxu0 %v2900
    %2922 = vmatpush.msra.mxu0 %v2899
    %2923 = vmatpush.msra.mxu0 %v2898
    %2924 = vmatmul.f32.gmra.mxu0 %v2903
    %v2925 = vpop.f32.mrf.mxu0
    %v2926 = vadd.f32 0.0, %v2925
    %2927 = vmatmul.f32.gmra.mxu0 %v2906
    %v2928 = vpop.f32.mrf.mxu0
    %v2929 = vadd.f32 0.0, %v2928
    %2930 = vdwg.mxu0
    %s2931 = scalar_lea.vmem %s8, 32
    %v2932 = vld [vmem:[%s2931] sm:$0xff]
    %v2933 = vld [vmem:[%s2931 + $0x8] sm:$0xff]
    %v2934 = vld [vmem:[%s2931 + $0x10] sm:$0xff]
    %v2935 = vld [vmem:[%s2931 + $0x18] sm:$0xff]
    %s2936 = scalar_lea.vmem %s9, 1
    %v2937 = vld [vmem:[%s2936] sm:$0x1]
    %2939 = vrot.lane.b32.xlu0 %v2926, 96
    %v2940 = vpop.permute.xlu0 %2939
    %v2941 = vsel %vm1006, %v2926, 0
    %v2943 = vsel %vm1006, %v2940, 0
    %2945 = vmatpush.xpose.msra.mxu0 0.0
    %2946 = vmatpush.xpose.msra.mxu0 0.0
    %2947 = vmatpush.xpose.msra.mxu0 0.0
    %2948 = vmatpush.xpose.msra.mxu0 0.0
    %2949 = vmatpush.xpose.msra.mxu0 0.0
    %2950 = vmatpush.xpose.msra.mxu0 0.0
    %2951 = vmatpush.xpose.msra.mxu0 0.0
    %2952 = vmatpush.xpose.msra.mxu0 0.0
    %2953 = vmatpush.xpose.msra.mxu0 0.0
    %2954 = vmatpush.xpose.msra.mxu0 0.0
    %2955 = vmatpush.xpose.msra.mxu0 0.0
    %2956 = vmatpush.xpose.msra.mxu0 0.0
    %2957 = vmatpush.xpose.msra.mxu0 0.0
    %2958 = vmatpush.xpose.msra.mxu0 0.0
    %2959 = vmatpush.xpose.msra.mxu0 0.0
    %2960 = vmatpush.xpose.msra.mxu0 %v2943
    %2961 = vmatmul.f32.gmra.mxu0 %v2941
    %v2962 = vpop.f32.mrf.mxu0
    %v2963 = vadd.f32 0.0, %v2962
    %2964 = vdwg.mxu0
    %2966 = vrot.lane.b32.xlu0 %v2929, 96
    %v2967 = vpop.permute.xlu0 %2966
    %v2968 = vsel %vm1006, %v2929, 0
    %v2970 = vsel %vm1006, %v2967, 0
    %2972 = vmatpush.xpose.msra.mxu0 0.0
    %2973 = vmatpush.xpose.msra.mxu0 0.0
    %2974 = vmatpush.xpose.msra.mxu0 0.0
    %2975 = vmatpush.xpose.msra.mxu0 0.0
    %2976 = vmatpush.xpose.msra.mxu0 0.0
    %2977 = vmatpush.xpose.msra.mxu0 0.0
    %2978 = vmatpush.xpose.msra.mxu0 0.0
    %2979 = vmatpush.xpose.msra.mxu0 0.0
    %2980 = vmatpush.xpose.msra.mxu0 0.0
    %2981 = vmatpush.xpose.msra.mxu0 0.0
    %2982 = vmatpush.xpose.msra.mxu0 0.0
    %2983 = vmatpush.xpose.msra.mxu0 0.0
    %2984 = vmatpush.xpose.msra.mxu0 0.0
    %2985 = vmatpush.xpose.msra.mxu0 0.0
    %2986 = vmatpush.xpose.msra.mxu0 0.0
    %2987 = vmatpush.xpose.msra.mxu0 %v2970
    %2988 = vmatmul.f32.gmra.mxu0 %v2968
    %v2989 = vpop.f32.mrf.mxu0
    %v2990 = vadd.f32 0.0, %v2989
    %2991 = vdwg.mxu0
    %v2992 = vmul.f32 %v2963, 0.35355338
    %v2993 = vmul.f32 %v2990, 0.35355338
    %v2994 = vsel %vm1006, %v2992, -inf
    %2995 = vmax.xlane.f32.xlu0 %v2994
    %v2996 = vpop.xlane.xlu0 %2995
    %v2997 = vsel %vm1006, %v2993, -inf
    %2998 = vmax.xlane.f32.xlu0 %v2997
    %v2999 = vpop.xlane.xlu0 %2998
    %v3000 = vsub.f32 %v2992, %v2996
    %v3001 = vsub.f32 %v2993, %v2999
    %v3002 = vmul.f32 %v3000, 1.442695
    %v3003 = vpow.pop %v3002
    %v3004 = vmul.f32 %v3001, 1.442695
    %v3005 = vpow.pop %v3004
    %v3006 = vsel %vm1006, %v3003, 0.0
    %3007 = vadd.xlane.f32.xlu0 %v3006
    %v3008 = vpop.xlane.xlu0 %3007
    %v3009 = vsel %vm1006, %v3005, 0.0
    %3010 = vadd.xlane.f32.xlu0 %v3009
    %v3011 = vpop.xlane.xlu0 %3010
    %v3012 = vrcp.pop %v3008
    %v3013 = vmul.f32 %v3008, %v3012
    %v3014 = vsub.f32 1.0, %v3013
    %v3015 = vmul.f32 %v3012, %v3014
    %v3016 = vadd.f32 %v3012, %v3015
    %vm3017 = vweird.f32 %v3008
    %vm3018 = vweird.f32 %v3012
    %vm3019 = vmor %vm3017, %vm3018
    %v3020 = vsel %vm3019, %v3012, %v3016
    %v3021 = vand.u32 2147483647, %v3008
    %vm3022 = vcmp.eq.f32.partialorder %v3021, 8.507059e+37
    %v3023 = vand.u32 %v3008, 2147483648
    %v3024 = vor.u32 1.1754944e-38, %v3023
    %v3025 = vsel %vm3022, %v3024, %v3020
    %v3026 = vmul.f32 %v3003, %v3025
    %v3027 = vrcp.pop %v3011
    %v3028 = vmul.f32 %v3011, %v3027
    %v3029 = vsub.f32 1.0, %v3028
    %v3030 = vmul.f32 %v3027, %v3029
    %v3031 = vadd.f32 %v3027, %v3030
    %vm3032 = vweird.f32 %v3011
    %vm3033 = vweird.f32 %v3027
    %vm3034 = vmor %vm3032, %vm3033
    %v3035 = vsel %vm3034, %v3027, %v3031
    %v3036 = vand.u32 2147483647, %v3011
    %vm3037 = vcmp.eq.f32.partialorder %v3036, 8.507059e+37
    %v3038 = vand.u32 %v3011, 2147483648
    %v3039 = vor.u32 1.1754944e-38, %v3038
    %v3040 = vsel %vm3037, %v3039, %v3035
    %v3041 = vmul.f32 %v3005, %v3040
    %3042 = vrot.lane.b32.xlu0 %v2926, 64
    %v3043 = vpop.permute.xlu0 %3042
    %v3046 = vsel %vm1006, %v3026, 0
    %3048 = vmatpush.msra.mxu0 0.0
    %3049 = vmatpush.msra.mxu0 0.0
    %3050 = vmatpush.msra.mxu0 0.0
    %3051 = vmatpush.msra.mxu0 0.0
    %3052 = vmatpush.msra.mxu0 0.0
    %3053 = vmatpush.msra.mxu0 0.0
    %3054 = vmatpush.msra.mxu0 0.0
    %3055 = vmatpush.msra.mxu0 0.0
    %3056 = vmatpush.msra.mxu0 0.0
    %3057 = vmatpush.msra.mxu0 0.0
    %3058 = vmatpush.msra.mxu0 0.0
    %3059 = vmatpush.msra.mxu0 0.0
    %3060 = vmatpush.msra.mxu0 0.0
    %3061 = vmatpush.msra.mxu0 0.0
    %3062 = vmatpush.msra.mxu0 0.0
    %3063 = vmatpush.msra.mxu0 %v3043
    %3064 = vmatmul.f32.gmra.mxu0 %v3046
    %v3065 = vpop.f32.mrf.mxu0
    %v3066 = vadd.f32 0.0, %v3065
    %3067 = vdwg.mxu0
    %3068 = vrot.lane.b32.xlu0 %v2929, 64
    %v3069 = vpop.permute.xlu0 %3068
    %v3072 = vsel %vm1006, %v3041, 0
    %3074 = vmatpush.msra.mxu0 0.0
    %3075 = vmatpush.msra.mxu0 0.0
    %3076 = vmatpush.msra.mxu0 0.0
    %3077 = vmatpush.msra.mxu0 0.0
    %3078 = vmatpush.msra.mxu0 0.0
    %3079 = vmatpush.msra.mxu0 0.0
    %3080 = vmatpush.msra.mxu0 0.0
    %3081 = vmatpush.msra.mxu0 0.0
    %3082 = vmatpush.msra.mxu0 0.0
    %3083 = vmatpush.msra.mxu0 0.0
    %3084 = vmatpush.msra.mxu0 0.0
    %3085 = vmatpush.msra.mxu0 0.0
    %3086 = vmatpush.msra.mxu0 0.0
    %3087 = vmatpush.msra.mxu0 0.0
    %3088 = vmatpush.msra.mxu0 0.0
    %3089 = vmatpush.msra.mxu0 %v3069
    %3090 = vmatmul.f32.gmra.mxu0 %v3072
    %v3091 = vpop.f32.mrf.mxu0
    %v3092 = vadd.f32 0.0, %v3091
    %3093 = vdwg.mxu0
    %3094 = vrot.lane.b32.xlu0 %v2926, 120
    %v3095 = vpop.permute.xlu0 %3094
    %3096 = vrot.lane.b32.xlu0 %v2926, 88
    %v3097 = vpop.permute.xlu0 %3096
    %v3098 = vsel %vm1006, %v3095, 0
    %v3100 = vsel %vm1006, %v3097, 0
    %3102 = vmatpush.xpose.msra.mxu0 0.0
    %3103 = vmatpush.xpose.msra.mxu0 0.0
    %3104 = vmatpush.xpose.msra.mxu0 0.0
    %3105 = vmatpush.xpose.msra.mxu0 0.0
    %3106 = vmatpush.xpose.msra.mxu0 0.0
    %3107 = vmatpush.xpose.msra.mxu0 0.0
    %3108 = vmatpush.xpose.msra.mxu0 0.0
    %3109 = vmatpush.xpose.msra.mxu0 0.0
    %3110 = vmatpush.xpose.msra.mxu0 0.0
    %3111 = vmatpush.xpose.msra.mxu0 0.0
    %3112 = vmatpush.xpose.msra.mxu0 0.0
    %3113 = vmatpush.xpose.msra.mxu0 0.0
    %3114 = vmatpush.xpose.msra.mxu0 0.0
    %3115 = vmatpush.xpose.msra.mxu0 0.0
    %3116 = vmatpush.xpose.msra.mxu0 0.0
    %3117 = vmatpush.xpose.msra.mxu0 %v3100
    %3118 = vmatmul.f32.gmra.mxu0 %v3098
    %v3119 = vpop.f32.mrf.mxu0
    %v3120 = vadd.f32 0.0, %v3119
    %3121 = vdwg.mxu0
    %3122 = vrot.lane.b32.xlu0 %v2929, 120
    %v3123 = vpop.permute.xlu0 %3122
    %3124 = vrot.lane.b32.xlu0 %v2929, 88
    %v3125 = vpop.permute.xlu0 %3124
    %v3126 = vsel %vm1006, %v3123, 0
    %v3128 = vsel %vm1006, %v3125, 0
    %3130 = vmatpush.xpose.msra.mxu0 0.0
    %3131 = vmatpush.xpose.msra.mxu0 0.0
    %3132 = vmatpush.xpose.msra.mxu0 0.0
    %3133 = vmatpush.xpose.msra.mxu0 0.0
    %3134 = vmatpush.xpose.msra.mxu0 0.0
    %3135 = vmatpush.xpose.msra.mxu0 0.0
    %3136 = vmatpush.xpose.msra.mxu0 0.0
    %3137 = vmatpush.xpose.msra.mxu0 0.0
    %3138 = vmatpush.xpose.msra.mxu0 0.0
    %3139 = vmatpush.xpose.msra.mxu0 0.0
    %3140 = vmatpush.xpose.msra.mxu0 0.0
    %3141 = vmatpush.xpose.msra.mxu0 0.0
    %3142 = vmatpush.xpose.msra.mxu0 0.0
    %3143 = vmatpush.xpose.msra.mxu0 0.0
    %3144 = vmatpush.xpose.msra.mxu0 0.0
    %3145 = vmatpush.xpose.msra.mxu0 %v3128
    %3146 = vmatmul.f32.gmra.mxu0 %v3126
    %v3147 = vpop.f32.mrf.mxu0
    %v3148 = vadd.f32 0.0, %v3147
    %3149 = vdwg.mxu0
    %v3150 = vmul.f32 %v3120, 0.35355338
    %v3151 = vmul.f32 %v3148, 0.35355338
    %v3152 = vsel %vm1006, %v3150, -inf
    %3153 = vmax.xlane.f32.xlu0 %v3152
    %v3154 = vpop.xlane.xlu0 %3153
    %v3155 = vsel %vm1006, %v3151, -inf
    %3156 = vmax.xlane.f32.xlu0 %v3155
    %v3157 = vpop.xlane.xlu0 %3156
    %v3158 = vsub.f32 %v3150, %v3154
    %v3159 = vsub.f32 %v3151, %v3157
    %v3160 = vmul.f32 %v3158, 1.442695
    %v3161 = vpow.pop %v3160
    %v3162 = vmul.f32 %v3159, 1.442695
    %v3163 = vpow.pop %v3162
    %v3164 = vsel %vm1006, %v3161, 0.0
    %3165 = vadd.xlane.f32.xlu0 %v3164
    %v3166 = vpop.xlane.xlu0 %3165
    %v3167 = vsel %vm1006, %v3163, 0.0
    %3168 = vadd.xlane.f32.xlu0 %v3167
    %v3169 = vpop.xlane.xlu0 %3168
    %v3170 = vrcp.pop %v3166
    %v3171 = vmul.f32 %v3166, %v3170
    %v3172 = vsub.f32 1.0, %v3171
    %v3173 = vmul.f32 %v3170, %v3172
    %v3174 = vadd.f32 %v3170, %v3173
    %vm3175 = vweird.f32 %v3166
    %vm3176 = vweird.f32 %v3170
    %vm3177 = vmor %vm3175, %vm3176
    %v3178 = vsel %vm3177, %v3170, %v3174
    %v3179 = vand.u32 2147483647, %v3166
    %vm3180 = vcmp.eq.f32.partialorder %v3179, 8.507059e+37
    %v3181 = vand.u32 %v3166, 2147483648
    %v3182 = vor.u32 1.1754944e-38, %v3181
    %v3183 = vsel %vm3180, %v3182, %v3178
    %v3184 = vmul.f32 %v3161, %v3183
    %v3185 = vrcp.pop %v3169
    %v3186 = vmul.f32 %v3169, %v3185
    %v3187 = vsub.f32 1.0, %v3186
    %v3188 = vmul.f32 %v3185, %v3187
    %v3189 = vadd.f32 %v3185, %v3188
    %vm3190 = vweird.f32 %v3169
    %vm3191 = vweird.f32 %v3185
    %vm3192 = vmor %vm3190, %vm3191
    %v3193 = vsel %vm3192, %v3185, %v3189
    %v3194 = vand.u32 2147483647, %v3169
    %vm3195 = vcmp.eq.f32.partialorder %v3194, 8.507059e+37
    %v3196 = vand.u32 %v3169, 2147483648
    %v3197 = vor.u32 1.1754944e-38, %v3196
    %v3198 = vsel %vm3195, %v3197, %v3193
    %v3199 = vmul.f32 %v3163, %v3198
    %3200 = vrot.lane.b32.xlu0 %v2926, 56
    %v3201 = vpop.permute.xlu0 %3200
    %v3204 = vsel %vm1006, %v3184, 0
    %3206 = vmatpush.msra.mxu0 0.0
    %3207 = vmatpush.msra.mxu0 0.0
    %3208 = vmatpush.msra.mxu0 0.0
    %3209 = vmatpush.msra.mxu0 0.0
    %3210 = vmatpush.msra.mxu0 0.0
    %3211 = vmatpush.msra.mxu0 0.0
    %3212 = vmatpush.msra.mxu0 0.0
    %3213 = vmatpush.msra.mxu0 0.0
    %3214 = vmatpush.msra.mxu0 0.0
    %3215 = vmatpush.msra.mxu0 0.0
    %3216 = vmatpush.msra.mxu0 0.0
    %3217 = vmatpush.msra.mxu0 0.0
    %3218 = vmatpush.msra.mxu0 0.0
    %3219 = vmatpush.msra.mxu0 0.0
    %3220 = vmatpush.msra.mxu0 0.0
    %3221 = vmatpush.msra.mxu0 %v3201
    %3222 = vmatmul.f32.gmra.mxu0 %v3204
    %v3223 = vpop.f32.mrf.mxu0
    %v3224 = vadd.f32 0.0, %v3223
    %3225 = vdwg.mxu0
    %3226 = vrot.lane.b32.xlu0 %v2929, 56
    %v3227 = vpop.permute.xlu0 %3226
    %v3230 = vsel %vm1006, %v3199, 0
    %3232 = vmatpush.msra.mxu0 0.0
    %3233 = vmatpush.msra.mxu0 0.0
    %3234 = vmatpush.msra.mxu0 0.0
    %3235 = vmatpush.msra.mxu0 0.0
    %3236 = vmatpush.msra.mxu0 0.0
    %3237 = vmatpush.msra.mxu0 0.0
    %3238 = vmatpush.msra.mxu0 0.0
    %3239 = vmatpush.msra.mxu0 0.0
    %3240 = vmatpush.msra.mxu0 0.0
    %3241 = vmatpush.msra.mxu0 0.0
    %3242 = vmatpush.msra.mxu0 0.0
    %3243 = vmatpush.msra.mxu0 0.0
    %3244 = vmatpush.msra.mxu0 0.0
    %3245 = vmatpush.msra.mxu0 0.0
    %3246 = vmatpush.msra.mxu0 0.0
    %3247 = vmatpush.msra.mxu0 %v3227
    %3248 = vmatmul.f32.gmra.mxu0 %v3230
    %v3249 = vpop.f32.mrf.mxu0
    %v3250 = vadd.f32 0.0, %v3249
    %3251 = vdwg.mxu0
    %v3253 = vsel %vm1006, %v3224, 0
    %v3256 = vsel %vm1006, %v3250, 0
    %3258 = vmatpush.msra.mxu0 0.0
    %3259 = vmatpush.msra.mxu0 0.0
    %3260 = vmatpush.msra.mxu0 0.0
    %3261 = vmatpush.msra.mxu0 0.0
    %3262 = vmatpush.msra.mxu0 0.0
    %3263 = vmatpush.msra.mxu0 0.0
    %3264 = vmatpush.msra.mxu0 0.0
    %3265 = vmatpush.msra.mxu0 0.0
    %3266 = vmatpush.msra.mxu0 0.0
    %3267 = vmatpush.msra.mxu0 0.0
    %3268 = vmatpush.msra.mxu0 0.0
    %3269 = vmatpush.msra.mxu0 0.0
    %3270 = vmatpush.msra.mxu0 0.0
    %3271 = vmatpush.msra.mxu0 0.0
    %3272 = vmatpush.msra.mxu0 0.0
    %3273 = vmatpush.msra.mxu0 %v2933
    %3274 = vmatmul.f32.gmra.mxu0 %v3253
    %v3275 = vpop.f32.mrf.mxu0
    %v3276 = vadd.f32 0.0, %v3275
    %3277 = vmatmul.f32.gmra.mxu0 %v3256
    %v3278 = vpop.f32.mrf.mxu0
    %v3279 = vadd.f32 0.0, %v3278
    %3280 = vdwg.mxu0
    %v3282 = vsel %vm1006, %v3066, 0
    %v3285 = vsel %vm1006, %v3092, 0
    %3287 = vmatpush.msra.mxu0 0.0
    %3288 = vmatpush.msra.mxu0 0.0
    %3289 = vmatpush.msra.mxu0 0.0
    %3290 = vmatpush.msra.mxu0 0.0
    %3291 = vmatpush.msra.mxu0 0.0
    %3292 = vmatpush.msra.mxu0 0.0
    %3293 = vmatpush.msra.mxu0 0.0
    %3294 = vmatpush.msra.mxu0 0.0
    %3295 = vmatpush.msra.mxu0 0.0
    %3296 = vmatpush.msra.mxu0 0.0
    %3297 = vmatpush.msra.mxu0 0.0
    %3298 = vmatpush.msra.mxu0 0.0
    %3299 = vmatpush.msra.mxu0 0.0
    %3300 = vmatpush.msra.mxu0 0.0
    %3301 = vmatpush.msra.mxu0 0.0
    %3302 = vmatpush.msra.mxu0 %v2932
    %3303 = vmatmul.f32.gmra.mxu0 %v3282
    %v3304 = vpop.f32.mrf.mxu0
    %v3305 = vadd.f32 %v3276, %v3304
    %3306 = vmatmul.f32.gmra.mxu0 %v3285
    %v3307 = vpop.f32.mrf.mxu0
    %v3308 = vadd.f32 %v3279, %v3307
    %3309 = vdwg.mxu0
    %3310 = vrot.lane.b32.xlu0 %v2926, 112
    %v3311 = vpop.permute.xlu0 %3310
    %3312 = vrot.lane.b32.xlu0 %v2926, 80
    %v3313 = vpop.permute.xlu0 %3312
    %v3314 = vsel %vm1006, %v3311, 0
    %v3316 = vsel %vm1006, %v3313, 0
    %3318 = vmatpush.xpose.msra.mxu0 0.0
    %3319 = vmatpush.xpose.msra.mxu0 0.0
    %3320 = vmatpush.xpose.msra.mxu0 0.0
    %3321 = vmatpush.xpose.msra.mxu0 0.0
    %3322 = vmatpush.xpose.msra.mxu0 0.0
    %3323 = vmatpush.xpose.msra.mxu0 0.0
    %3324 = vmatpush.xpose.msra.mxu0 0.0
    %3325 = vmatpush.xpose.msra.mxu0 0.0
    %3326 = vmatpush.xpose.msra.mxu0 0.0
    %3327 = vmatpush.xpose.msra.mxu0 0.0
    %3328 = vmatpush.xpose.msra.mxu0 0.0
    %3329 = vmatpush.xpose.msra.mxu0 0.0
    %3330 = vmatpush.xpose.msra.mxu0 0.0
    %3331 = vmatpush.xpose.msra.mxu0 0.0
    %3332 = vmatpush.xpose.msra.mxu0 0.0
    %3333 = vmatpush.xpose.msra.mxu0 %v3316
    %3334 = vmatmul.f32.gmra.mxu0 %v3314
    %v3335 = vpop.f32.mrf.mxu0
    %v3336 = vadd.f32 0.0, %v3335
    %3337 = vdwg.mxu0
    %3338 = vrot.lane.b32.xlu0 %v2929, 112
    %v3339 = vpop.permute.xlu0 %3338
    %3340 = vrot.lane.b32.xlu0 %v2929, 80
    %v3341 = vpop.permute.xlu0 %3340
    %v3342 = vsel %vm1006, %v3339, 0
    %v3344 = vsel %vm1006, %v3341, 0
    %3346 = vmatpush.xpose.msra.mxu0 0.0
    %3347 = vmatpush.xpose.msra.mxu0 0.0
    %3348 = vmatpush.xpose.msra.mxu0 0.0
    %3349 = vmatpush.xpose.msra.mxu0 0.0
    %3350 = vmatpush.xpose.msra.mxu0 0.0
    %3351 = vmatpush.xpose.msra.mxu0 0.0
    %3352 = vmatpush.xpose.msra.mxu0 0.0
    %3353 = vmatpush.xpose.msra.mxu0 0.0
    %3354 = vmatpush.xpose.msra.mxu0 0.0
    %3355 = vmatpush.xpose.msra.mxu0 0.0
    %3356 = vmatpush.xpose.msra.mxu0 0.0
    %3357 = vmatpush.xpose.msra.mxu0 0.0
    %3358 = vmatpush.xpose.msra.mxu0 0.0
    %3359 = vmatpush.xpose.msra.mxu0 0.0
    %3360 = vmatpush.xpose.msra.mxu0 0.0
    %3361 = vmatpush.xpose.msra.mxu0 %v3344
    %3362 = vmatmul.f32.gmra.mxu0 %v3342
    %v3363 = vpop.f32.mrf.mxu0
    %v3364 = vadd.f32 0.0, %v3363
    %3365 = vdwg.mxu0
    %v3366 = vmul.f32 %v3336, 0.35355338
    %v3367 = vmul.f32 %v3364, 0.35355338
    %v3368 = vsel %vm1006, %v3366, -inf
    %3369 = vmax.xlane.f32.xlu0 %v3368
    %v3370 = vpop.xlane.xlu0 %3369
    %v3371 = vsel %vm1006, %v3367, -inf
    %3372 = vmax.xlane.f32.xlu0 %v3371
    %v3373 = vpop.xlane.xlu0 %3372
    %v3374 = vsub.f32 %v3366, %v3370
    %v3375 = vsub.f32 %v3367, %v3373
    %v3376 = vmul.f32 %v3374, 1.442695
    %v3377 = vpow.pop %v3376
    %v3378 = vmul.f32 %v3375, 1.442695
    %v3379 = vpow.pop %v3378
    %v3380 = vsel %vm1006, %v3377, 0.0
    %3381 = vadd.xlane.f32.xlu0 %v3380
    %v3382 = vpop.xlane.xlu0 %3381
    %v3383 = vsel %vm1006, %v3379, 0.0
    %3384 = vadd.xlane.f32.xlu0 %v3383
    %v3385 = vpop.xlane.xlu0 %3384
    %v3386 = vrcp.pop %v3382
    %v3387 = vmul.f32 %v3382, %v3386
    %v3388 = vsub.f32 1.0, %v3387
    %v3389 = vmul.f32 %v3386, %v3388
    %v3390 = vadd.f32 %v3386, %v3389
    %vm3391 = vweird.f32 %v3382
    %vm3392 = vweird.f32 %v3386
    %vm3393 = vmor %vm3391, %vm3392
    %v3394 = vsel %vm3393, %v3386, %v3390
    %v3395 = vand.u32 2147483647, %v3382
    %vm3396 = vcmp.eq.f32.partialorder %v3395, 8.507059e+37
    %v3397 = vand.u32 %v3382, 2147483648
    %v3398 = vor.u32 1.1754944e-38, %v3397
    %v3399 = vsel %vm3396, %v3398, %v3394
    %v3400 = vmul.f32 %v3377, %v3399
    %v3401 = vrcp.pop %v3385
    %v3402 = vmul.f32 %v3385, %v3401
    %v3403 = vsub.f32 1.0, %v3402
    %v3404 = vmul.f32 %v3401, %v3403
    %v3405 = vadd.f32 %v3401, %v3404
    %vm3406 = vweird.f32 %v3385
    %vm3407 = vweird.f32 %v3401
    %vm3408 = vmor %vm3406, %vm3407
    %v3409 = vsel %vm3408, %v3401, %v3405
    %v3410 = vand.u32 2147483647, %v3385
    %vm3411 = vcmp.eq.f32.partialorder %v3410, 8.507059e+37
    %v3412 = vand.u32 %v3385, 2147483648
    %v3413 = vor.u32 1.1754944e-38, %v3412
    %v3414 = vsel %vm3411, %v3413, %v3409
    %v3415 = vmul.f32 %v3379, %v3414
    %3416 = vrot.lane.b32.xlu0 %v2926, 48
    %v3417 = vpop.permute.xlu0 %3416
    %v3420 = vsel %vm1006, %v3400, 0
    %3422 = vmatpush.msra.mxu0 0.0
    %3423 = vmatpush.msra.mxu0 0.0
    %3424 = vmatpush.msra.mxu0 0.0
    %3425 = vmatpush.msra.mxu0 0.0
    %3426 = vmatpush.msra.mxu0 0.0
    %3427 = vmatpush.msra.mxu0 0.0
    %3428 = vmatpush.msra.mxu0 0.0
    %3429 = vmatpush.msra.mxu0 0.0
    %3430 = vmatpush.msra.mxu0 0.0
    %3431 = vmatpush.msra.mxu0 0.0
    %3432 = vmatpush.msra.mxu0 0.0
    %3433 = vmatpush.msra.mxu0 0.0
    %3434 = vmatpush.msra.mxu0 0.0
    %3435 = vmatpush.msra.mxu0 0.0
    %3436 = vmatpush.msra.mxu0 0.0
    %3437 = vmatpush.msra.mxu0 %v3417
    %3438 = vmatmul.f32.gmra.mxu0 %v3420
    %v3439 = vpop.f32.mrf.mxu0
    %v3440 = vadd.f32 0.0, %v3439
    %3441 = vdwg.mxu0
    %3442 = vrot.lane.b32.xlu0 %v2929, 48
    %v3443 = vpop.permute.xlu0 %3442
    %v3446 = vsel %vm1006, %v3415, 0
    %3448 = vmatpush.msra.mxu0 0.0
    %3449 = vmatpush.msra.mxu0 0.0
    %3450 = vmatpush.msra.mxu0 0.0
    %3451 = vmatpush.msra.mxu0 0.0
    %3452 = vmatpush.msra.mxu0 0.0
    %3453 = vmatpush.msra.mxu0 0.0
    %3454 = vmatpush.msra.mxu0 0.0
    %3455 = vmatpush.msra.mxu0 0.0
    %3456 = vmatpush.msra.mxu0 0.0
    %3457 = vmatpush.msra.mxu0 0.0
    %3458 = vmatpush.msra.mxu0 0.0
    %3459 = vmatpush.msra.mxu0 0.0
    %3460 = vmatpush.msra.mxu0 0.0
    %3461 = vmatpush.msra.mxu0 0.0
    %3462 = vmatpush.msra.mxu0 0.0
    %3463 = vmatpush.msra.mxu0 %v3443
    %3464 = vmatmul.f32.gmra.mxu0 %v3446
    %v3465 = vpop.f32.mrf.mxu0
    %v3466 = vadd.f32 0.0, %v3465
    %3467 = vdwg.mxu0
    %v3469 = vsel %vm1006, %v3440, 0
    %v3472 = vsel %vm1006, %v3466, 0
    %3474 = vmatpush.msra.mxu0 0.0
    %3475 = vmatpush.msra.mxu0 0.0
    %3476 = vmatpush.msra.mxu0 0.0
    %3477 = vmatpush.msra.mxu0 0.0
    %3478 = vmatpush.msra.mxu0 0.0
    %3479 = vmatpush.msra.mxu0 0.0
    %3480 = vmatpush.msra.mxu0 0.0
    %3481 = vmatpush.msra.mxu0 0.0
    %3482 = vmatpush.msra.mxu0 0.0
    %3483 = vmatpush.msra.mxu0 0.0
    %3484 = vmatpush.msra.mxu0 0.0
    %3485 = vmatpush.msra.mxu0 0.0
    %3486 = vmatpush.msra.mxu0 0.0
    %3487 = vmatpush.msra.mxu0 0.0
    %3488 = vmatpush.msra.mxu0 0.0
    %3489 = vmatpush.msra.mxu0 %v2934
    %3490 = vmatmul.f32.gmra.mxu0 %v3469
    %v3491 = vpop.f32.mrf.mxu0
    %v3492 = vadd.f32 0.0, %v3491
    %3493 = vmatmul.f32.gmra.mxu0 %v3472
    %v3494 = vpop.f32.mrf.mxu0
    %v3495 = vadd.f32 0.0, %v3494
    %3496 = vdwg.mxu0
    %v3497 = vadd.f32 %v3305, %v3492
    %v3498 = vadd.f32 %v3308, %v3495
    %3499 = vrot.lane.b32.xlu0 %v2926, 104
    %v3500 = vpop.permute.xlu0 %3499
    %3501 = vrot.lane.b32.xlu0 %v2926, 72
    %v3502 = vpop.permute.xlu0 %3501
    %v3503 = vsel %vm1006, %v3500, 0
    %v3505 = vsel %vm1006, %v3502, 0
    %3507 = vmatpush.xpose.msra.mxu0 0.0
    %3508 = vmatpush.xpose.msra.mxu0 0.0
    %3509 = vmatpush.xpose.msra.mxu0 0.0
    %3510 = vmatpush.xpose.msra.mxu0 0.0
    %3511 = vmatpush.xpose.msra.mxu0 0.0
    %3512 = vmatpush.xpose.msra.mxu0 0.0
    %3513 = vmatpush.xpose.msra.mxu0 0.0
    %3514 = vmatpush.xpose.msra.mxu0 0.0
    %3515 = vmatpush.xpose.msra.mxu0 0.0
    %3516 = vmatpush.xpose.msra.mxu0 0.0
    %3517 = vmatpush.xpose.msra.mxu0 0.0
    %3518 = vmatpush.xpose.msra.mxu0 0.0
    %3519 = vmatpush.xpose.msra.mxu0 0.0
    %3520 = vmatpush.xpose.msra.mxu0 0.0
    %3521 = vmatpush.xpose.msra.mxu0 0.0
    %3522 = vmatpush.xpose.msra.mxu0 %v3505
    %3523 = vmatmul.f32.gmra.mxu0 %v3503
    %v3524 = vpop.f32.mrf.mxu0
    %v3525 = vadd.f32 0.0, %v3524
    %3526 = vdwg.mxu0
    %3527 = vrot.lane.b32.xlu0 %v2929, 104
    %v3528 = vpop.permute.xlu0 %3527
    %3529 = vrot.lane.b32.xlu0 %v2929, 72
    %v3530 = vpop.permute.xlu0 %3529
    %v3531 = vsel %vm1006, %v3528, 0
    %v3533 = vsel %vm1006, %v3530, 0
    %3535 = vmatpush.xpose.msra.mxu0 0.0
    %3536 = vmatpush.xpose.msra.mxu0 0.0
    %3537 = vmatpush.xpose.msra.mxu0 0.0
    %3538 = vmatpush.xpose.msra.mxu0 0.0
    %3539 = vmatpush.xpose.msra.mxu0 0.0
    %3540 = vmatpush.xpose.msra.mxu0 0.0
    %3541 = vmatpush.xpose.msra.mxu0 0.0
    %3542 = vmatpush.xpose.msra.mxu0 0.0
    %3543 = vmatpush.xpose.msra.mxu0 0.0
    %3544 = vmatpush.xpose.msra.mxu0 0.0
    %3545 = vmatpush.xpose.msra.mxu0 0.0
    %3546 = vmatpush.xpose.msra.mxu0 0.0
    %3547 = vmatpush.xpose.msra.mxu0 0.0
    %3548 = vmatpush.xpose.msra.mxu0 0.0
    %3549 = vmatpush.xpose.msra.mxu0 0.0
    %3550 = vmatpush.xpose.msra.mxu0 %v3533
    %3551 = vmatmul.f32.gmra.mxu0 %v3531
    %v3552 = vpop.f32.mrf.mxu0
    %v3553 = vadd.f32 0.0, %v3552
    %3554 = vdwg.mxu0
    %v3555 = vmul.f32 %v3525, 0.35355338
    %v3556 = vmul.f32 %v3553, 0.35355338
    %v3557 = vsel %vm1006, %v3555, -inf
    %3558 = vmax.xlane.f32.xlu0 %v3557
    %v3559 = vpop.xlane.xlu0 %3558
    %v3560 = vsel %vm1006, %v3556, -inf
    %3561 = vmax.xlane.f32.xlu0 %v3560
    %v3562 = vpop.xlane.xlu0 %3561
    %v3563 = vsub.f32 %v3555, %v3559
    %v3564 = vsub.f32 %v3556, %v3562
    %v3565 = vmul.f32 %v3563, 1.442695
    %v3566 = vpow.pop %v3565
    %v3567 = vmul.f32 %v3564, 1.442695
    %v3568 = vpow.pop %v3567
    %v3569 = vsel %vm1006, %v3566, 0.0
    %3570 = vadd.xlane.f32.xlu0 %v3569
    %v3571 = vpop.xlane.xlu0 %3570
    %v3572 = vsel %vm1006, %v3568, 0.0
    %3573 = vadd.xlane.f32.xlu0 %v3572
    %v3574 = vpop.xlane.xlu0 %3573
    %v3575 = vrcp.pop %v3571
    %v3576 = vmul.f32 %v3571, %v3575
    %v3577 = vsub.f32 1.0, %v3576
    %v3578 = vmul.f32 %v3575, %v3577
    %v3579 = vadd.f32 %v3575, %v3578
    %vm3580 = vweird.f32 %v3571
    %vm3581 = vweird.f32 %v3575
    %vm3582 = vmor %vm3580, %vm3581
    %v3583 = vsel %vm3582, %v3575, %v3579
    %v3584 = vand.u32 2147483647, %v3571
    %vm3585 = vcmp.eq.f32.partialorder %v3584, 8.507059e+37
    %v3586 = vand.u32 %v3571, 2147483648
    %v3587 = vor.u32 1.1754944e-38, %v3586
    %v3588 = vsel %vm3585, %v3587, %v3583
    %v3589 = vmul.f32 %v3566, %v3588
    %v3590 = vrcp.pop %v3574
    %v3591 = vmul.f32 %v3574, %v3590
    %v3592 = vsub.f32 1.0, %v3591
    %v3593 = vmul.f32 %v3590, %v3592
    %v3594 = vadd.f32 %v3590, %v3593
    %vm3595 = vweird.f32 %v3574
    %vm3596 = vweird.f32 %v3590
    %vm3597 = vmor %vm3595, %vm3596
    %v3598 = vsel %vm3597, %v3590, %v3594
    %v3599 = vand.u32 2147483647, %v3574
    %vm3600 = vcmp.eq.f32.partialorder %v3599, 8.507059e+37
    %v3601 = vand.u32 %v3574, 2147483648
    %v3602 = vor.u32 1.1754944e-38, %v3601
    %v3603 = vsel %vm3600, %v3602, %v3598
    %v3604 = vmul.f32 %v3568, %v3603
    %3605 = vrot.lane.b32.xlu0 %v2926, 40
    %v3606 = vpop.permute.xlu0 %3605
    %v3609 = vsel %vm1006, %v3589, 0
    %3611 = vmatpush.msra.mxu0 0.0
    %3612 = vmatpush.msra.mxu0 0.0
    %3613 = vmatpush.msra.mxu0 0.0
    %3614 = vmatpush.msra.mxu0 0.0
    %3615 = vmatpush.msra.mxu0 0.0
    %3616 = vmatpush.msra.mxu0 0.0
    %3617 = vmatpush.msra.mxu0 0.0
    %3618 = vmatpush.msra.mxu0 0.0
    %3619 = vmatpush.msra.mxu0 0.0
    %3620 = vmatpush.msra.mxu0 0.0
    %3621 = vmatpush.msra.mxu0 0.0
    %3622 = vmatpush.msra.mxu0 0.0
    %3623 = vmatpush.msra.mxu0 0.0
    %3624 = vmatpush.msra.mxu0 0.0
    %3625 = vmatpush.msra.mxu0 0.0
    %3626 = vmatpush.msra.mxu0 %v3606
    %3627 = vmatmul.f32.gmra.mxu0 %v3609
    %v3628 = vpop.f32.mrf.mxu0
    %v3629 = vadd.f32 0.0, %v3628
    %3630 = vdwg.mxu0
    %3631 = vrot.lane.b32.xlu0 %v2929, 40
    %v3632 = vpop.permute.xlu0 %3631
    %v3635 = vsel %vm1006, %v3604, 0
    %3637 = vmatpush.msra.mxu0 0.0
    %3638 = vmatpush.msra.mxu0 0.0
    %3639 = vmatpush.msra.mxu0 0.0
    %3640 = vmatpush.msra.mxu0 0.0
    %3641 = vmatpush.msra.mxu0 0.0
    %3642 = vmatpush.msra.mxu0 0.0
    %3643 = vmatpush.msra.mxu0 0.0
    %3644 = vmatpush.msra.mxu0 0.0
    %3645 = vmatpush.msra.mxu0 0.0
    %3646 = vmatpush.msra.mxu0 0.0
    %3647 = vmatpush.msra.mxu0 0.0
    %3648 = vmatpush.msra.mxu0 0.0
    %3649 = vmatpush.msra.mxu0 0.0
    %3650 = vmatpush.msra.mxu0 0.0
    %3651 = vmatpush.msra.mxu0 0.0
    %3652 = vmatpush.msra.mxu0 %v3632
    %3653 = vmatmul.f32.gmra.mxu0 %v3635
    %v3654 = vpop.f32.mrf.mxu0
    %v3655 = vadd.f32 0.0, %v3654
    %3656 = vdwg.mxu0
    %v3658 = vsel %vm1006, %v3629, 0
    %v3661 = vsel %vm1006, %v3655, 0
    %3663 = vmatpush.msra.mxu0 0.0
    %3664 = vmatpush.msra.mxu0 0.0
    %3665 = vmatpush.msra.mxu0 0.0
    %3666 = vmatpush.msra.mxu0 0.0
    %3667 = vmatpush.msra.mxu0 0.0
    %3668 = vmatpush.msra.mxu0 0.0
    %3669 = vmatpush.msra.mxu0 0.0
    %3670 = vmatpush.msra.mxu0 0.0
    %3671 = vmatpush.msra.mxu0 0.0
    %3672 = vmatpush.msra.mxu0 0.0
    %3673 = vmatpush.msra.mxu0 0.0
    %3674 = vmatpush.msra.mxu0 0.0
    %3675 = vmatpush.msra.mxu0 0.0
    %3676 = vmatpush.msra.mxu0 0.0
    %3677 = vmatpush.msra.mxu0 0.0
    %3678 = vmatpush.msra.mxu0 %v2935
    %3679 = vmatmul.f32.gmra.mxu0 %v3658
    %v3680 = vpop.f32.mrf.mxu0
    %v3681 = vadd.f32 0.0, %v3680
    %3682 = vmatmul.f32.gmra.mxu0 %v3661
    %v3683 = vpop.f32.mrf.mxu0
    %v3684 = vadd.f32 0.0, %v3683
    %3685 = vdwg.mxu0
    %v3686 = vadd.f32 %v3497, %v3681
    %v3687 = vadd.f32 %v3498, %v3684
    %v3689 = vperm.slane %v2937, 0
    %v3691 = vadd.f32 %v3686, %v3689
    %v3692 = vadd.f32 %v3687, %v3689
    %v3693 = vadd.f32 %v3691, %v2891
    %v3694 = vadd.f32 %v3692, %v2892
    %v3695 = vsel %vm960, %v3693, 0.0
    %3696 = vadd.xlane.f32.xlu0 %v3695
    %v3697 = vpop.xlane.xlu0 %3696
    %v3698 = vsel %vm960, %v3694, 0.0
    %3699 = vadd.xlane.f32.xlu0 %v3698
    %v3700 = vpop.xlane.xlu0 %3699
    %v3701 = vmul.f32 %v3697, %v1773
    %v3702 = vmul.f32 %v3700, %v1773
    %v3703 = vsub.f32 %v3693, %v3701
    %v3704 = vsub.f32 %v3694, %v3702
    %v3705 = vmul.f32 %v3703, %v3703
    %v3706 = vmul.f32 %v3704, %v3704
    %v3707 = vsel %vm960, %v3705, 0.0
    %3708 = vadd.xlane.f32.xlu0 %v3707
    %v3709 = vpop.xlane.xlu0 %3708
    %v3710 = vsel %vm960, %v3706, 0.0
    %3711 = vadd.xlane.f32.xlu0 %v3710
    %v3712 = vpop.xlane.xlu0 %3711
    %v3713 = vmul.f32 %v3709, %v1773
    %v3714 = vmul.f32 %v3712, %v1773
    %v3715 = vadd.f32 %v3713, 1e-05
    %v3716 = vadd.f32 %v3714, 1e-05
    %v3717 = vrsqrt.pop %v3715
    %v3718 = vmul.f32 %v3717, %v3715
    %v3719 = vmul.f32 %v3718, %v3717
    %v3720 = vmul.f32 0.5, %v3719
    %v3721 = vsub.f32 1.5, %v3720
    %v3722 = vmul.f32 %v3717, %v3721
    %vm3723 = vweird.f32 %v3715
    %vm3724 = vweird.f32 %v3717
    %vm3725 = vmor %vm3723, %vm3724
    %v3726 = vsel %vm3725, %v3717, %v3722
    %v3727 = vrsqrt.pop %v3716
    %v3728 = vmul.f32 %v3727, %v3716
    %v3729 = vmul.f32 %v3728, %v3727
    %v3730 = vmul.f32 0.5, %v3729
    %v3731 = vsub.f32 1.5, %v3730
    %v3732 = vmul.f32 %v3727, %v3731
    %vm3733 = vweird.f32 %v3716
    %vm3734 = vweird.f32 %v3727
    %vm3735 = vmor %vm3733, %vm3734
    %v3736 = vsel %vm3735, %v3727, %v3732
    %v3737 = vmul.f32 %v3703, %v3726
    %v3738 = vmul.f32 %v3704, %v3736
    %v3739 = vperm.slane %v2894, 0
    %v3740 = vmul.f32 %v3737, %v3739
    %v3741 = vmul.f32 %v3738, %v3739
    %v3742 = vperm.slane %v2896, 0
    %v3743 = vadd.f32 %v3740, %v3742
    %v3744 = vadd.f32 %v3741, %v3742
    %s3745 = scalar_lea.vmem %s10, 32
    %v3746 = vld [vmem:[%s3745] sm:$0xff]
    %v3747 = vld [vmem:[%s3745 + $0x8] sm:$0xff]
    %v3748 = vld [vmem:[%s3745 + $0x10] sm:$0xff]
    %v3749 = vld [vmem:[%s3745 + $0x18] sm:$0xff]
    %v3751 = vsel %vm960, %v3743, 0
    %v3754 = vsel %vm960, %v3744, 0
    %3756 = vmatpush.msra.mxu0 0.0
    %3757 = vmatpush.msra.mxu0 0.0
    %3758 = vmatpush.msra.mxu0 0.0
    %3759 = vmatpush.msra.mxu0 0.0
    %3760 = vmatpush.msra.mxu0 0.0
    %3761 = vmatpush.msra.mxu0 0.0
    %3762 = vmatpush.msra.mxu0 0.0
    %3763 = vmatpush.msra.mxu0 0.0
    %3764 = vmatpush.msra.mxu0 0.0
    %3765 = vmatpush.msra.mxu0 0.0
    %3766 = vmatpush.msra.mxu0 0.0
    %3767 = vmatpush.msra.mxu0 0.0
    %3768 = vmatpush.msra.mxu0 %v3749
    %3769 = vmatpush.msra.mxu0 %v3748
    %3770 = vmatpush.msra.mxu0 %v3747
    %3771 = vmatpush.msra.mxu0 %v3746
    %3772 = vmatmul.f32.gmra.mxu0 %v3751
    %v3773 = vpop.f32.mrf.mxu0
    %v3774 = vadd.f32 0.0, %v3773
    %3775 = vmatmul.f32.gmra.mxu0 %v3754
    %v3776 = vpop.f32.mrf.mxu0
    %v3777 = vadd.f32 0.0, %v3776
    %3778 = vdwg.mxu0
    %s3779 = scalar_lea.vmem %s11, 32
    %v3780 = vld [vmem:[%s3779] sm:$0xff]
    %v3781 = vld [vmem:[%s3779 + $0x8] sm:$0xff]
    %v3782 = vld [vmem:[%s3779 + $0x10] sm:$0xff]
    %v3783 = vld [vmem:[%s3779 + $0x18] sm:$0xff]
    %3784 = vmatpush.msra.mxu0 0.0
    %3785 = vmatpush.msra.mxu0 0.0
    %3786 = vmatpush.msra.mxu0 0.0
    %3787 = vmatpush.msra.mxu0 0.0
    %3788 = vmatpush.msra.mxu0 0.0
    %3789 = vmatpush.msra.mxu0 0.0
    %3790 = vmatpush.msra.mxu0 0.0
    %3791 = vmatpush.msra.mxu0 0.0
    %3792 = vmatpush.msra.mxu0 0.0
    %3793 = vmatpush.msra.mxu0 0.0
    %3794 = vmatpush.msra.mxu0 0.0
    %3795 = vmatpush.msra.mxu0 0.0
    %3796 = vmatpush.msra.mxu0 %v3783
    %3797 = vmatpush.msra.mxu0 %v3782
    %3798 = vmatpush.msra.mxu0 %v3781
    %3799 = vmatpush.msra.mxu0 %v3780
    %3800 = vmatmul.f32.gmra.mxu0 %v1856
    %v3801 = vpop.f32.mrf.mxu0
    %v3802 = vadd.f32 0.0, %v3801
    %3803 = vmatmul.f32.gmra.mxu0 %v1859
    %v3804 = vpop.f32.mrf.mxu0
    %v3805 = vadd.f32 0.0, %v3804
    %3806 = vmatmul.f32.gmra.mxu0 %v1862
    %v3807 = vpop.f32.mrf.mxu0
    %v3808 = vadd.f32 0.0, %v3807
    %3809 = vmatmul.f32.gmra.mxu0 %v1865
    %v3810 = vpop.f32.mrf.mxu0
    %v3811 = vadd.f32 0.0, %v3810
    %3812 = vdwg.mxu0
    %s3813 = scalar_lea.vmem %s12, 32
    %v3814 = vld [vmem:[%s3813] sm:$0xff]
    %v3815 = vld [vmem:[%s3813 + $0x8] sm:$0xff]
    %v3816 = vld [vmem:[%s3813 + $0x10] sm:$0xff]
    %v3817 = vld [vmem:[%s3813 + $0x18] sm:$0xff]
    %s3818 = scalar_lea.vmem %s13, 1
    %v3819 = vld [vmem:[%s3818] sm:$0x1]
    %v3821 = vsel %vm1006, %v3774, 0
    %v3824 = vsel %vm1006, %v3802, 0
    %v3827 = vsel %vm1006, %v3805, 0
    %3829 = vmatpush.xpose.msra.mxu0 0.0
    %3830 = vmatpush.xpose.msra.mxu0 0.0
    %3831 = vmatpush.xpose.msra.mxu0 0.0
    %3832 = vmatpush.xpose.msra.mxu0 0.0
    %3833 = vmatpush.xpose.msra.mxu0 0.0
    %3834 = vmatpush.xpose.msra.mxu0 0.0
    %3835 = vmatpush.xpose.msra.mxu0 0.0
    %3836 = vmatpush.xpose.msra.mxu0 0.0
    %3837 = vmatpush.xpose.msra.mxu0 0.0
    %3838 = vmatpush.xpose.msra.mxu0 0.0
    %3839 = vmatpush.xpose.msra.mxu0 0.0
    %3840 = vmatpush.xpose.msra.mxu0 0.0
    %3841 = vmatpush.xpose.msra.mxu0 0.0
    %3842 = vmatpush.xpose.msra.mxu0 0.0
    %3843 = vmatpush.xpose.msra.mxu0 %v3827
    %3844 = vmatpush.xpose.msra.mxu0 %v3824
    %3845 = vmatmul.f32.gmra.mxu0 %v3821
    %v3846 = vpop.f32.mrf.mxu0
    %v3847 = vadd.f32 0.0, %v3846
    %3848 = vdwg.mxu0
    %v3850 = vsel %vm1006, %v3777, 0
    %v3853 = vsel %vm1006, %v3808, 0
    %v3856 = vsel %vm1006, %v3811, 0
    %3858 = vmatpush.xpose.msra.mxu0 0.0
    %3859 = vmatpush.xpose.msra.mxu0 0.0
    %3860 = vmatpush.xpose.msra.mxu0 0.0
    %3861 = vmatpush.xpose.msra.mxu0 0.0
    %3862 = vmatpush.xpose.msra.mxu0 0.0
    %3863 = vmatpush.xpose.msra.mxu0 0.0
    %3864 = vmatpush.xpose.msra.mxu0 0.0
    %3865 = vmatpush.xpose.msra.mxu0 0.0
    %3866 = vmatpush.xpose.msra.mxu0 0.0
    %3867 = vmatpush.xpose.msra.mxu0 0.0
    %3868 = vmatpush.xpose.msra.mxu0 0.0
    %3869 = vmatpush.xpose.msra.mxu0 0.0
    %3870 = vmatpush.xpose.msra.mxu0 0.0
    %3871 = vmatpush.xpose.msra.mxu0 0.0
    %3872 = vmatpush.xpose.msra.mxu0 %v3856
    %3873 = vmatpush.xpose.msra.mxu0 %v3853
    %3874 = vmatmul.f32.gmra.mxu0 %v3850
    %v3875 = vpop.f32.mrf.mxu0
    %v3876 = vadd.f32 0.0, %v3875
    %3877 = vdwg.mxu0
    %v3878 = vmul.f32 %v3847, 0.35355338
    %v3879 = vmul.f32 %v3876, 0.35355338
    %v3880 = vsel %vm312, %v3878, -inf
    %3881 = vmax.xlane.f32.xlu0 %v3880
    %v3882 = vpop.xlane.xlu0 %3881
    %v3883 = vsel %vm312, %v3879, -inf
    %3884 = vmax.xlane.f32.xlu0 %v3883
    %v3885 = vpop.xlane.xlu0 %3884
    %v3886 = vsub.f32 %v3878, %v3882
    %v3887 = vsub.f32 %v3879, %v3885
    %v3888 = vmul.f32 %v3886, 1.442695
    %v3889 = vpow.pop %v3888
    %v3890 = vmul.f32 %v3887, 1.442695
    %v3891 = vpow.pop %v3890
    %v3892 = vsel %vm312, %v3889, 0.0
    %3893 = vadd.xlane.f32.xlu0 %v3892
    %v3894 = vpop.xlane.xlu0 %3893
    %v3895 = vsel %vm312, %v3891, 0.0
    %3896 = vadd.xlane.f32.xlu0 %v3895
    %v3897 = vpop.xlane.xlu0 %3896
    %v3898 = vrcp.pop %v3894
    %v3899 = vmul.f32 %v3894, %v3898
    %v3900 = vsub.f32 1.0, %v3899
    %v3901 = vmul.f32 %v3898, %v3900
    %v3902 = vadd.f32 %v3898, %v3901
    %vm3903 = vweird.f32 %v3894
    %vm3904 = vweird.f32 %v3898
    %vm3905 = vmor %vm3903, %vm3904
    %v3906 = vsel %vm3905, %v3898, %v3902
    %v3907 = vand.u32 2147483647, %v3894
    %vm3908 = vcmp.eq.f32.partialorder %v3907, 8.507059e+37
    %v3909 = vand.u32 %v3894, 2147483648
    %v3910 = vor.u32 1.1754944e-38, %v3909
    %v3911 = vsel %vm3908, %v3910, %v3906
    %v3912 = vmul.f32 %v3889, %v3911
    %v3913 = vrcp.pop %v3897
    %v3914 = vmul.f32 %v3897, %v3913
    %v3915 = vsub.f32 1.0, %v3914
    %v3916 = vmul.f32 %v3913, %v3915
    %v3917 = vadd.f32 %v3913, %v3916
    %vm3918 = vweird.f32 %v3897
    %vm3919 = vweird.f32 %v3913
    %vm3920 = vmor %vm3918, %vm3919
    %v3921 = vsel %vm3920, %v3913, %v3917
    %v3922 = vand.u32 2147483647, %v3897
    %vm3923 = vcmp.eq.f32.partialorder %v3922, 8.507059e+37
    %v3924 = vand.u32 %v3897, 2147483648
    %v3925 = vor.u32 1.1754944e-38, %v3924
    %v3926 = vsel %vm3923, %v3925, %v3921
    %v3927 = vmul.f32 %v3891, %v3926
    %3928 = vrot.lane.b32.xlu0 %v3802, 96
    %v3929 = vpop.permute.xlu0 %3928
    %3930 = vrot.lane.b32.xlu0 %v3805, 96
    %v3931 = vpop.permute.xlu0 %3930
    %v3935 = vsel %vm312, %v3912, 0
    %3937 = vmatpush.msra.mxu0 0.0
    %3938 = vmatpush.msra.mxu0 0.0
    %3939 = vmatpush.msra.mxu0 0.0
    %3940 = vmatpush.msra.mxu0 0.0
    %3941 = vmatpush.msra.mxu0 0.0
    %3942 = vmatpush.msra.mxu0 0.0
    %3943 = vmatpush.msra.mxu0 0.0
    %3944 = vmatpush.msra.mxu0 0.0
    %3945 = vmatpush.msra.mxu0 0.0
    %3946 = vmatpush.msra.mxu0 0.0
    %3947 = vmatpush.msra.mxu0 0.0
    %3948 = vmatpush.msra.mxu0 0.0
    %3949 = vmatpush.msra.mxu0 0.0
    %3950 = vmatpush.msra.mxu0 0.0
    %3951 = vmatpush.msra.mxu0 %v3931
    %3952 = vmatpush.msra.mxu0 %v3929
    %3953 = vmatmul.f32.gmra.mxu0 %v3935
    %v3954 = vpop.f32.mrf.mxu0
    %v3955 = vadd.f32 0.0, %v3954
    %3956 = vdwg.mxu0
    %3957 = vrot.lane.b32.xlu0 %v3808, 96
    %v3958 = vpop.permute.xlu0 %3957
    %3959 = vrot.lane.b32.xlu0 %v3811, 96
    %v3960 = vpop.permute.xlu0 %3959
    %v3964 = vsel %vm312, %v3927, 0
    %3966 = vmatpush.msra.mxu0 0.0
    %3967 = vmatpush.msra.mxu0 0.0
    %3968 = vmatpush.msra.mxu0 0.0
    %3969 = vmatpush.msra.mxu0 0.0
    %3970 = vmatpush.msra.mxu0 0.0
    %3971 = vmatpush.msra.mxu0 0.0
    %3972 = vmatpush.msra.mxu0 0.0
    %3973 = vmatpush.msra.mxu0 0.0
    %3974 = vmatpush.msra.mxu0 0.0
    %3975 = vmatpush.msra.mxu0 0.0
    %3976 = vmatpush.msra.mxu0 0.0
    %3977 = vmatpush.msra.mxu0 0.0
    %3978 = vmatpush.msra.mxu0 0.0
    %3979 = vmatpush.msra.mxu0 0.0
    %3980 = vmatpush.msra.mxu0 %v3960
    %3981 = vmatpush.msra.mxu0 %v3958
    %3982 = vmatmul.f32.gmra.mxu0 %v3964
    %v3983 = vpop.f32.mrf.mxu0
    %v3984 = vadd.f32 0.0, %v3983
    %3985 = vdwg.mxu0
    %3986 = vrot.lane.b32.xlu0 %v3774, 120
    %v3987 = vpop.permute.xlu0 %3986
    %3988 = vrot.lane.b32.xlu0 %v3802, 120
    %v3989 = vpop.permute.xlu0 %3988
    %3990 = vrot.lane.b32.xlu0 %v3805, 120
    %v3991 = vpop.permute.xlu0 %3990
    %v3992 = vsel %vm1006, %v3987, 0
    %v3994 = vsel %vm1006, %v3989, 0
    %v3996 = vsel %vm1006, %v3991, 0
    %3998 = vmatpush.xpose.msra.mxu0 0.0
    %3999 = vmatpush.xpose.msra.mxu0 0.0
    %4000 = vmatpush.xpose.msra.mxu0 0.0
    %4001 = vmatpush.xpose.msra.mxu0 0.0
    %4002 = vmatpush.xpose.msra.mxu0 0.0
    %4003 = vmatpush.xpose.msra.mxu0 0.0
    %4004 = vmatpush.xpose.msra.mxu0 0.0
    %4005 = vmatpush.xpose.msra.mxu0 0.0
    %4006 = vmatpush.xpose.msra.mxu0 0.0
    %4007 = vmatpush.xpose.msra.mxu0 0.0
    %4008 = vmatpush.xpose.msra.mxu0 0.0
    %4009 = vmatpush.xpose.msra.mxu0 0.0
    %4010 = vmatpush.xpose.msra.mxu0 0.0
    %4011 = vmatpush.xpose.msra.mxu0 0.0
    %4012 = vmatpush.xpose.msra.mxu0 %v3996
    %4013 = vmatpush.xpose.msra.mxu0 %v3994
    %4014 = vmatmul.f32.gmra.mxu0 %v3992
    %v4015 = vpop.f32.mrf.mxu0
    %v4016 = vadd.f32 0.0, %v4015
    %4017 = vdwg.mxu0
    %4018 = vrot.lane.b32.xlu0 %v3777, 120
    %v4019 = vpop.permute.xlu0 %4018
    %4020 = vrot.lane.b32.xlu0 %v3808, 120
    %v4021 = vpop.permute.xlu0 %4020
    %4022 = vrot.lane.b32.xlu0 %v3811, 120
    %v4023 = vpop.permute.xlu0 %4022
    %v4024 = vsel %vm1006, %v4019, 0
    %v4026 = vsel %vm1006, %v4021, 0
    %v4028 = vsel %vm1006, %v4023, 0
    %4030 = vmatpush.xpose.msra.mxu0 0.0
    %4031 = vmatpush.xpose.msra.mxu0 0.0
    %4032 = vmatpush.xpose.msra.mxu0 0.0
    %4033 = vmatpush.xpose.msra.mxu0 0.0
    %4034 = vmatpush.xpose.msra.mxu0 0.0
    %4035 = vmatpush.xpose.msra.mxu0 0.0
    %4036 = vmatpush.xpose.msra.mxu0 0.0
    %4037 = vmatpush.xpose.msra.mxu0 0.0
    %4038 = vmatpush.xpose.msra.mxu0 0.0
    %4039 = vmatpush.xpose.msra.mxu0 0.0
    %4040 = vmatpush.xpose.msra.mxu0 0.0
    %4041 = vmatpush.xpose.msra.mxu0 0.0
    %4042 = vmatpush.xpose.msra.mxu0 0.0
    %4043 = vmatpush.xpose.msra.mxu0 0.0
    %4044 = vmatpush.xpose.msra.mxu0 %v4028
    %4045 = vmatpush.xpose.msra.mxu0 %v4026
    %4046 = vmatmul.f32.gmra.mxu0 %v4024
    %v4047 = vpop.f32.mrf.mxu0
    %v4048 = vadd.f32 0.0, %v4047
    %4049 = vdwg.mxu0
    %v4050 = vmul.f32 %v4016, 0.35355338
    %v4051 = vmul.f32 %v4048, 0.35355338
    %v4052 = vsel %vm312, %v4050, -inf
    %4053 = vmax.xlane.f32.xlu0 %v4052
    %v4054 = vpop.xlane.xlu0 %4053
    %v4055 = vsel %vm312, %v4051, -inf
    %4056 = vmax.xlane.f32.xlu0 %v4055
    %v4057 = vpop.xlane.xlu0 %4056
    %v4058 = vsub.f32 %v4050, %v4054
    %v4059 = vsub.f32 %v4051, %v4057
    %v4060 = vmul.f32 %v4058, 1.442695
    %v4061 = vpow.pop %v4060
    %v4062 = vmul.f32 %v4059, 1.442695
    %v4063 = vpow.pop %v4062
    %v4064 = vsel %vm312, %v4061, 0.0
    %4065 = vadd.xlane.f32.xlu0 %v4064
    %v4066 = vpop.xlane.xlu0 %4065
    %v4067 = vsel %vm312, %v4063, 0.0
    %4068 = vadd.xlane.f32.xlu0 %v4067
    %v4069 = vpop.xlane.xlu0 %4068
    %v4070 = vrcp.pop %v4066
    %v4071 = vmul.f32 %v4066, %v4070
    %v4072 = vsub.f32 1.0, %v4071
    %v4073 = vmul.f32 %v4070, %v4072
    %v4074 = vadd.f32 %v4070, %v4073
    %vm4075 = vweird.f32 %v4066
    %vm4076 = vweird.f32 %v4070
    %vm4077 = vmor %vm4075, %vm4076
    %v4078 = vsel %vm4077, %v4070, %v4074
    %v4079 = vand.u32 2147483647, %v4066
    %vm4080 = vcmp.eq.f32.partialorder %v4079, 8.507059e+37
    %v4081 = vand.u32 %v4066, 2147483648
    %v4082 = vor.u32 1.1754944e-38, %v4081
    %v4083 = vsel %vm4080, %v4082, %v4078
    %v4084 = vmul.f32 %v4061, %v4083
    %v4085 = vrcp.pop %v4069
    %v4086 = vmul.f32 %v4069, %v4085
    %v4087 = vsub.f32 1.0, %v4086
    %v4088 = vmul.f32 %v4085, %v4087
    %v4089 = vadd.f32 %v4085, %v4088
    %vm4090 = vweird.f32 %v4069
    %vm4091 = vweird.f32 %v4085
    %vm4092 = vmor %vm4090, %vm4091
    %v4093 = vsel %vm4092, %v4085, %v4089
    %v4094 = vand.u32 2147483647, %v4069
    %vm4095 = vcmp.eq.f32.partialorder %v4094, 8.507059e+37
    %v4096 = vand.u32 %v4069, 2147483648
    %v4097 = vor.u32 1.1754944e-38, %v4096
    %v4098 = vsel %vm4095, %v4097, %v4093
    %v4099 = vmul.f32 %v4063, %v4098
    %4100 = vrot.lane.b32.xlu0 %v3802, 88
    %v4101 = vpop.permute.xlu0 %4100
    %4102 = vrot.lane.b32.xlu0 %v3805, 88
    %v4103 = vpop.permute.xlu0 %4102
    %v4107 = vsel %vm312, %v4084, 0
    %4109 = vmatpush.msra.mxu0 0.0
    %4110 = vmatpush.msra.mxu0 0.0
    %4111 = vmatpush.msra.mxu0 0.0
    %4112 = vmatpush.msra.mxu0 0.0
    %4113 = vmatpush.msra.mxu0 0.0
    %4114 = vmatpush.msra.mxu0 0.0
    %4115 = vmatpush.msra.mxu0 0.0
    %4116 = vmatpush.msra.mxu0 0.0
    %4117 = vmatpush.msra.mxu0 0.0
    %4118 = vmatpush.msra.mxu0 0.0
    %4119 = vmatpush.msra.mxu0 0.0
    %4120 = vmatpush.msra.mxu0 0.0
    %4121 = vmatpush.msra.mxu0 0.0
    %4122 = vmatpush.msra.mxu0 0.0
    %4123 = vmatpush.msra.mxu0 %v4103
    %4124 = vmatpush.msra.mxu0 %v4101
    %4125 = vmatmul.f32.gmra.mxu0 %v4107
    %v4126 = vpop.f32.mrf.mxu0
    %v4127 = vadd.f32 0.0, %v4126
    %4128 = vdwg.mxu0
    %4129 = vrot.lane.b32.xlu0 %v3808, 88
    %v4130 = vpop.permute.xlu0 %4129
    %4131 = vrot.lane.b32.xlu0 %v3811, 88
    %v4132 = vpop.permute.xlu0 %4131
    %v4136 = vsel %vm312, %v4099, 0
    %4138 = vmatpush.msra.mxu0 0.0
    %4139 = vmatpush.msra.mxu0 0.0
    %4140 = vmatpush.msra.mxu0 0.0
    %4141 = vmatpush.msra.mxu0 0.0
    %4142 = vmatpush.msra.mxu0 0.0
    %4143 = vmatpush.msra.mxu0 0.0
    %4144 = vmatpush.msra.mxu0 0.0
    %4145 = vmatpush.msra.mxu0 0.0
    %4146 = vmatpush.msra.mxu0 0.0
    %4147 = vmatpush.msra.mxu0 0.0
    %4148 = vmatpush.msra.mxu0 0.0
    %4149 = vmatpush.msra.mxu0 0.0
    %4150 = vmatpush.msra.mxu0 0.0
    %4151 = vmatpush.msra.mxu0 0.0
    %4152 = vmatpush.msra.mxu0 %v4132
    %4153 = vmatpush.msra.mxu0 %v4130
    %4154 = vmatmul.f32.gmra.mxu0 %v4136
    %v4155 = vpop.f32.mrf.mxu0
    %v4156 = vadd.f32 0.0, %v4155
    %4157 = vdwg.mxu0
    %v4159 = vsel %vm1006, %v4127, 0
    %v4162 = vsel %vm1006, %v4156, 0
    %4164 = vmatpush.msra.mxu0 0.0
    %4165 = vmatpush.msra.mxu0 0.0
    %4166 = vmatpush.msra.mxu0 0.0
    %4167 = vmatpush.msra.mxu0 0.0
    %4168 = vmatpush.msra.mxu0 0.0
    %4169 = vmatpush.msra.mxu0 0.0
    %4170 = vmatpush.msra.mxu0 0.0
    %4171 = vmatpush.msra.mxu0 0.0
    %4172 = vmatpush.msra.mxu0 0.0
    %4173 = vmatpush.msra.mxu0 0.0
    %4174 = vmatpush.msra.mxu0 0.0
    %4175 = vmatpush.msra.mxu0 0.0
    %4176 = vmatpush.msra.mxu0 0.0
    %4177 = vmatpush.msra.mxu0 0.0
    %4178 = vmatpush.msra.mxu0 0.0
    %4179 = vmatpush.msra.mxu0 %v3815
    %4180 = vmatmul.f32.gmra.mxu0 %v4159
    %v4181 = vpop.f32.mrf.mxu0
    %v4182 = vadd.f32 0.0, %v4181
    %4183 = vmatmul.f32.gmra.mxu0 %v4162
    %v4184 = vpop.f32.mrf.mxu0
    %v4185 = vadd.f32 0.0, %v4184
    %4186 = vdwg.mxu0
    %v4188 = vsel %vm1006, %v3955, 0
    %v4191 = vsel %vm1006, %v3984, 0
    %4193 = vmatpush.msra.mxu0 0.0
    %4194 = vmatpush.msra.mxu0 0.0
    %4195 = vmatpush.msra.mxu0 0.0
    %4196 = vmatpush.msra.mxu0 0.0
    %4197 = vmatpush.msra.mxu0 0.0
    %4198 = vmatpush.msra.mxu0 0.0
    %4199 = vmatpush.msra.mxu0 0.0
    %4200 = vmatpush.msra.mxu0 0.0
    %4201 = vmatpush.msra.mxu0 0.0
    %4202 = vmatpush.msra.mxu0 0.0
    %4203 = vmatpush.msra.mxu0 0.0
    %4204 = vmatpush.msra.mxu0 0.0
    %4205 = vmatpush.msra.mxu0 0.0
    %4206 = vmatpush.msra.mxu0 0.0
    %4207 = vmatpush.msra.mxu0 0.0
    %4208 = vmatpush.msra.mxu0 %v3814
    %4209 = vmatmul.f32.gmra.mxu0 %v4188
    %v4210 = vpop.f32.mrf.mxu0
    %v4211 = vadd.f32 %v4182, %v4210
    %4212 = vmatmul.f32.gmra.mxu0 %v4191
    %v4213 = vpop.f32.mrf.mxu0
    %v4214 = vadd.f32 %v4185, %v4213
    %4215 = vdwg.mxu0
    %4216 = vrot.lane.b32.xlu0 %v3774, 112
    %v4217 = vpop.permute.xlu0 %4216
    %4218 = vrot.lane.b32.xlu0 %v3802, 112
    %v4219 = vpop.permute.xlu0 %4218
    %4220 = vrot.lane.b32.xlu0 %v3805, 112
    %v4221 = vpop.permute.xlu0 %4220
    %v4222 = vsel %vm1006, %v4217, 0
    %v4224 = vsel %vm1006, %v4219, 0
    %v4226 = vsel %vm1006, %v4221, 0
    %4228 = vmatpush.xpose.msra.mxu0 0.0
    %4229 = vmatpush.xpose.msra.mxu0 0.0
    %4230 = vmatpush.xpose.msra.mxu0 0.0
    %4231 = vmatpush.xpose.msra.mxu0 0.0
    %4232 = vmatpush.xpose.msra.mxu0 0.0
    %4233 = vmatpush.xpose.msra.mxu0 0.0
    %4234 = vmatpush.xpose.msra.mxu0 0.0
    %4235 = vmatpush.xpose.msra.mxu0 0.0
    %4236 = vmatpush.xpose.msra.mxu0 0.0
    %4237 = vmatpush.xpose.msra.mxu0 0.0
    %4238 = vmatpush.xpose.msra.mxu0 0.0
    %4239 = vmatpush.xpose.msra.mxu0 0.0
    %4240 = vmatpush.xpose.msra.mxu0 0.0
    %4241 = vmatpush.xpose.msra.mxu0 0.0
    %4242 = vmatpush.xpose.msra.mxu0 %v4226
    %4243 = vmatpush.xpose.msra.mxu0 %v4224
    %4244 = vmatmul.f32.gmra.mxu0 %v4222
    %v4245 = vpop.f32.mrf.mxu0
    %v4246 = vadd.f32 0.0, %v4245
    %4247 = vdwg.mxu0
    %4248 = vrot.lane.b32.xlu0 %v3777, 112
    %v4249 = vpop.permute.xlu0 %4248
    %4250 = vrot.lane.b32.xlu0 %v3808, 112
    %v4251 = vpop.permute.xlu0 %4250
    %4252 = vrot.lane.b32.xlu0 %v3811, 112
    %v4253 = vpop.permute.xlu0 %4252
    %v4254 = vsel %vm1006, %v4249, 0
    %v4256 = vsel %vm1006, %v4251, 0
    %v4258 = vsel %vm1006, %v4253, 0
    %4260 = vmatpush.xpose.msra.mxu0 0.0
    %4261 = vmatpush.xpose.msra.mxu0 0.0
    %4262 = vmatpush.xpose.msra.mxu0 0.0
    %4263 = vmatpush.xpose.msra.mxu0 0.0
    %4264 = vmatpush.xpose.msra.mxu0 0.0
    %4265 = vmatpush.xpose.msra.mxu0 0.0
    %4266 = vmatpush.xpose.msra.mxu0 0.0
    %4267 = vmatpush.xpose.msra.mxu0 0.0
    %4268 = vmatpush.xpose.msra.mxu0 0.0
    %4269 = vmatpush.xpose.msra.mxu0 0.0
    %4270 = vmatpush.xpose.msra.mxu0 0.0
    %4271 = vmatpush.xpose.msra.mxu0 0.0
    %4272 = vmatpush.xpose.msra.mxu0 0.0
    %4273 = vmatpush.xpose.msra.mxu0 0.0
    %4274 = vmatpush.xpose.msra.mxu0 %v4258
    %4275 = vmatpush.xpose.msra.mxu0 %v4256
    %4276 = vmatmul.f32.gmra.mxu0 %v4254
    %v4277 = vpop.f32.mrf.mxu0
    %v4278 = vadd.f32 0.0, %v4277
    %4279 = vdwg.mxu0
    %v4280 = vmul.f32 %v4246, 0.35355338
    %v4281 = vmul.f32 %v4278, 0.35355338
    %v4282 = vsel %vm312, %v4280, -inf
    %4283 = vmax.xlane.f32.xlu0 %v4282
    %v4284 = vpop.xlane.xlu0 %4283
    %v4285 = vsel %vm312, %v4281, -inf
    %4286 = vmax.xlane.f32.xlu0 %v4285
    %v4287 = vpop.xlane.xlu0 %4286
    %v4288 = vsub.f32 %v4280, %v4284
    %v4289 = vsub.f32 %v4281, %v4287
    %v4290 = vmul.f32 %v4288, 1.442695
    %v4291 = vpow.pop %v4290
    %v4292 = vmul.f32 %v4289, 1.442695
    %v4293 = vpow.pop %v4292
    %v4294 = vsel %vm312, %v4291, 0.0
    %4295 = vadd.xlane.f32.xlu0 %v4294
    %v4296 = vpop.xlane.xlu0 %4295
    %v4297 = vsel %vm312, %v4293, 0.0
    %4298 = vadd.xlane.f32.xlu0 %v4297
    %v4299 = vpop.xlane.xlu0 %4298
    %v4300 = vrcp.pop %v4296
    %v4301 = vmul.f32 %v4296, %v4300
    %v4302 = vsub.f32 1.0, %v4301
    %v4303 = vmul.f32 %v4300, %v4302
    %v4304 = vadd.f32 %v4300, %v4303
    %vm4305 = vweird.f32 %v4296
    %vm4306 = vweird.f32 %v4300
    %vm4307 = vmor %vm4305, %vm4306
    %v4308 = vsel %vm4307, %v4300, %v4304
    %v4309 = vand.u32 2147483647, %v4296
    %vm4310 = vcmp.eq.f32.partialorder %v4309, 8.507059e+37
    %v4311 = vand.u32 %v4296, 2147483648
    %v4312 = vor.u32 1.1754944e-38, %v4311
    %v4313 = vsel %vm4310, %v4312, %v4308
    %v4314 = vmul.f32 %v4291, %v4313
    %v4315 = vrcp.pop %v4299
    %v4316 = vmul.f32 %v4299, %v4315
    %v4317 = vsub.f32 1.0, %v4316
    %v4318 = vmul.f32 %v4315, %v4317
    %v4319 = vadd.f32 %v4315, %v4318
    %vm4320 = vweird.f32 %v4299
    %vm4321 = vweird.f32 %v4315
    %vm4322 = vmor %vm4320, %vm4321
    %v4323 = vsel %vm4322, %v4315, %v4319
    %v4324 = vand.u32 2147483647, %v4299
    %vm4325 = vcmp.eq.f32.partialorder %v4324, 8.507059e+37
    %v4326 = vand.u32 %v4299, 2147483648
    %v4327 = vor.u32 1.1754944e-38, %v4326
    %v4328 = vsel %vm4325, %v4327, %v4323
    %v4329 = vmul.f32 %v4293, %v4328
    %4330 = vrot.lane.b32.xlu0 %v3802, 80
    %v4331 = vpop.permute.xlu0 %4330
    %4332 = vrot.lane.b32.xlu0 %v3805, 80
    %v4333 = vpop.permute.xlu0 %4332
    %v4337 = vsel %vm312, %v4314, 0
    %4339 = vmatpush.msra.mxu0 0.0
    %4340 = vmatpush.msra.mxu0 0.0
    %4341 = vmatpush.msra.mxu0 0.0
    %4342 = vmatpush.msra.mxu0 0.0
    %4343 = vmatpush.msra.mxu0 0.0
    %4344 = vmatpush.msra.mxu0 0.0
    %4345 = vmatpush.msra.mxu0 0.0
    %4346 = vmatpush.msra.mxu0 0.0
    %4347 = vmatpush.msra.mxu0 0.0
    %4348 = vmatpush.msra.mxu0 0.0
    %4349 = vmatpush.msra.mxu0 0.0
    %4350 = vmatpush.msra.mxu0 0.0
    %4351 = vmatpush.msra.mxu0 0.0
    %4352 = vmatpush.msra.mxu0 0.0
    %4353 = vmatpush.msra.mxu0 %v4333
    %4354 = vmatpush.msra.mxu0 %v4331
    %4355 = vmatmul.f32.gmra.mxu0 %v4337
    %v4356 = vpop.f32.mrf.mxu0
    %v4357 = vadd.f32 0.0, %v4356
    %4358 = vdwg.mxu0
    %4359 = vrot.lane.b32.xlu0 %v3808, 80
    %v4360 = vpop.permute.xlu0 %4359
    %4361 = vrot.lane.b32.xlu0 %v3811, 80
    %v4362 = vpop.permute.xlu0 %4361
    %v4366 = vsel %vm312, %v4329, 0
    %4368 = vmatpush.msra.mxu0 0.0
    %4369 = vmatpush.msra.mxu0 0.0
    %4370 = vmatpush.msra.mxu0 0.0
    %4371 = vmatpush.msra.mxu0 0.0
    %4372 = vmatpush.msra.mxu0 0.0
    %4373 = vmatpush.msra.mxu0 0.0
    %4374 = vmatpush.msra.mxu0 0.0
    %4375 = vmatpush.msra.mxu0 0.0
    %4376 = vmatpush.msra.mxu0 0.0
    %4377 = vmatpush.msra.mxu0 0.0
    %4378 = vmatpush.msra.mxu0 0.0
    %4379 = vmatpush.msra.mxu0 0.0
    %4380 = vmatpush.msra.mxu0 0.0
    %4381 = vmatpush.msra.mxu0 0.0
    %4382 = vmatpush.msra.mxu0 %v4362
    %4383 = vmatpush.msra.mxu0 %v4360
    %4384 = vmatmul.f32.gmra.mxu0 %v4366
    %v4385 = vpop.f32.mrf.mxu0
    %v4386 = vadd.f32 0.0, %v4385
    %4387 = vdwg.mxu0
    %v4389 = vsel %vm1006, %v4357, 0
    %v4392 = vsel %vm1006, %v4386, 0
    %4394 = vmatpush.msra.mxu0 0.0
    %4395 = vmatpush.msra.mxu0 0.0
    %4396 = vmatpush.msra.mxu0 0.0
    %4397 = vmatpush.msra.mxu0 0.0
    %4398 = vmatpush.msra.mxu0 0.0
    %4399 = vmatpush.msra.mxu0 0.0
    %4400 = vmatpush.msra.mxu0 0.0
    %4401 = vmatpush.msra.mxu0 0.0
    %4402 = vmatpush.msra.mxu0 0.0
    %4403 = vmatpush.msra.mxu0 0.0
    %4404 = vmatpush.msra.mxu0 0.0
    %4405 = vmatpush.msra.mxu0 0.0
    %4406 = vmatpush.msra.mxu0 0.0
    %4407 = vmatpush.msra.mxu0 0.0
    %4408 = vmatpush.msra.mxu0 0.0
    %4409 = vmatpush.msra.mxu0 %v3816
    %4410 = vmatmul.f32.gmra.mxu0 %v4389
    %v4411 = vpop.f32.mrf.mxu0
    %v4412 = vadd.f32 0.0, %v4411
    %4413 = vmatmul.f32.gmra.mxu0 %v4392
    %v4414 = vpop.f32.mrf.mxu0
    %v4415 = vadd.f32 0.0, %v4414
    %4416 = vdwg.mxu0
    %v4417 = vadd.f32 %v4211, %v4412
    %v4418 = vadd.f32 %v4214, %v4415
    %4419 = vrot.lane.b32.xlu0 %v3774, 104
    %v4420 = vpop.permute.xlu0 %4419
    %4421 = vrot.lane.b32.xlu0 %v3802, 104
    %v4422 = vpop.permute.xlu0 %4421
    %4423 = vrot.lane.b32.xlu0 %v3805, 104
    %v4424 = vpop.permute.xlu0 %4423
    %v4425 = vsel %vm1006, %v4420, 0
    %v4427 = vsel %vm1006, %v4422, 0
    %v4429 = vsel %vm1006, %v4424, 0
    %4431 = vmatpush.xpose.msra.mxu0 0.0
    %4432 = vmatpush.xpose.msra.mxu0 0.0
    %4433 = vmatpush.xpose.msra.mxu0 0.0
    %4434 = vmatpush.xpose.msra.mxu0 0.0
    %4435 = vmatpush.xpose.msra.mxu0 0.0
    %4436 = vmatpush.xpose.msra.mxu0 0.0
    %4437 = vmatpush.xpose.msra.mxu0 0.0
    %4438 = vmatpush.xpose.msra.mxu0 0.0
    %4439 = vmatpush.xpose.msra.mxu0 0.0
    %4440 = vmatpush.xpose.msra.mxu0 0.0
    %4441 = vmatpush.xpose.msra.mxu0 0.0
    %4442 = vmatpush.xpose.msra.mxu0 0.0
    %4443 = vmatpush.xpose.msra.mxu0 0.0
    %4444 = vmatpush.xpose.msra.mxu0 0.0
    %4445 = vmatpush.xpose.msra.mxu0 %v4429
    %4446 = vmatpush.xpose.msra.mxu0 %v4427
    %4447 = vmatmul.f32.gmra.mxu0 %v4425
    %v4448 = vpop.f32.mrf.mxu0
    %v4449 = vadd.f32 0.0, %v4448
    %4450 = vdwg.mxu0
    %4451 = vrot.lane.b32.xlu0 %v3777, 104
    %v4452 = vpop.permute.xlu0 %4451
    %4453 = vrot.lane.b32.xlu0 %v3808, 104
    %v4454 = vpop.permute.xlu0 %4453
    %4455 = vrot.lane.b32.xlu0 %v3811, 104
    %v4456 = vpop.permute.xlu0 %4455
    %v4457 = vsel %vm1006, %v4452, 0
    %v4459 = vsel %vm1006, %v4454, 0
    %v4461 = vsel %vm1006, %v4456, 0
    %4463 = vmatpush.xpose.msra.mxu0 0.0
    %4464 = vmatpush.xpose.msra.mxu0 0.0
    %4465 = vmatpush.xpose.msra.mxu0 0.0
    %4466 = vmatpush.xpose.msra.mxu0 0.0
    %4467 = vmatpush.xpose.msra.mxu0 0.0
    %4468 = vmatpush.xpose.msra.mxu0 0.0
    %4469 = vmatpush.xpose.msra.mxu0 0.0
    %4470 = vmatpush.xpose.msra.mxu0 0.0
    %4471 = vmatpush.xpose.msra.mxu0 0.0
    %4472 = vmatpush.xpose.msra.mxu0 0.0
    %4473 = vmatpush.xpose.msra.mxu0 0.0
    %4474 = vmatpush.xpose.msra.mxu0 0.0
    %4475 = vmatpush.xpose.msra.mxu0 0.0
    %4476 = vmatpush.xpose.msra.mxu0 0.0
    %4477 = vmatpush.xpose.msra.mxu0 %v4461
    %4478 = vmatpush.xpose.msra.mxu0 %v4459
    %4479 = vmatmul.f32.gmra.mxu0 %v4457
    %v4480 = vpop.f32.mrf.mxu0
    %v4481 = vadd.f32 0.0, %v4480
    %4482 = vdwg.mxu0
    %v4483 = vmul.f32 %v4449, 0.35355338
    %v4484 = vmul.f32 %v4481, 0.35355338
    %v4485 = vsel %vm312, %v4483, -inf
    %4486 = vmax.xlane.f32.xlu0 %v4485
    %v4487 = vpop.xlane.xlu0 %4486
    %v4488 = vsel %vm312, %v4484, -inf
    %4489 = vmax.xlane.f32.xlu0 %v4488
    %v4490 = vpop.xlane.xlu0 %4489
    %v4491 = vsub.f32 %v4483, %v4487
    %v4492 = vsub.f32 %v4484, %v4490
    %v4493 = vmul.f32 %v4491, 1.442695
    %v4494 = vpow.pop %v4493
    %v4495 = vmul.f32 %v4492, 1.442695
    %v4496 = vpow.pop %v4495
    %v4497 = vsel %vm312, %v4494, 0.0
    %4498 = vadd.xlane.f32.xlu0 %v4497
    %v4499 = vpop.xlane.xlu0 %4498
    %v4500 = vsel %vm312, %v4496, 0.0
    %4501 = vadd.xlane.f32.xlu0 %v4500
    %v4502 = vpop.xlane.xlu0 %4501
    %v4503 = vrcp.pop %v4499
    %v4504 = vmul.f32 %v4499, %v4503
    %v4505 = vsub.f32 1.0, %v4504
    %v4506 = vmul.f32 %v4503, %v4505
    %v4507 = vadd.f32 %v4503, %v4506
    %vm4508 = vweird.f32 %v4499
    %vm4509 = vweird.f32 %v4503
    %vm4510 = vmor %vm4508, %vm4509
    %v4511 = vsel %vm4510, %v4503, %v4507
    %v4512 = vand.u32 2147483647, %v4499
    %vm4513 = vcmp.eq.f32.partialorder %v4512, 8.507059e+37
    %v4514 = vand.u32 %v4499, 2147483648
    %v4515 = vor.u32 1.1754944e-38, %v4514
    %v4516 = vsel %vm4513, %v4515, %v4511
    %v4517 = vmul.f32 %v4494, %v4516
    %v4518 = vrcp.pop %v4502
    %v4519 = vmul.f32 %v4502, %v4518
    %v4520 = vsub.f32 1.0, %v4519
    %v4521 = vmul.f32 %v4518, %v4520
    %v4522 = vadd.f32 %v4518, %v4521
    %vm4523 = vweird.f32 %v4502
    %vm4524 = vweird.f32 %v4518
    %vm4525 = vmor %vm4523, %vm4524
    %v4526 = vsel %vm4525, %v4518, %v4522
    %v4527 = vand.u32 2147483647, %v4502
    %vm4528 = vcmp.eq.f32.partialorder %v4527, 8.507059e+37
    %v4529 = vand.u32 %v4502, 2147483648
    %v4530 = vor.u32 1.1754944e-38, %v4529
    %v4531 = vsel %vm4528, %v4530, %v4526
    %v4532 = vmul.f32 %v4496, %v4531
    %4533 = vrot.lane.b32.xlu0 %v3802, 72
    %v4534 = vpop.permute.xlu0 %4533
    %4535 = vrot.lane.b32.xlu0 %v3805, 72
    %v4536 = vpop.permute.xlu0 %4535
    %v4540 = vsel %vm312, %v4517, 0
    %4542 = vmatpush.msra.mxu0 0.0
    %4543 = vmatpush.msra.mxu0 0.0
    %4544 = vmatpush.msra.mxu0 0.0
    %4545 = vmatpush.msra.mxu0 0.0
    %4546 = vmatpush.msra.mxu0 0.0
    %4547 = vmatpush.msra.mxu0 0.0
    %4548 = vmatpush.msra.mxu0 0.0
    %4549 = vmatpush.msra.mxu0 0.0
    %4550 = vmatpush.msra.mxu0 0.0
    %4551 = vmatpush.msra.mxu0 0.0
    %4552 = vmatpush.msra.mxu0 0.0
    %4553 = vmatpush.msra.mxu0 0.0
    %4554 = vmatpush.msra.mxu0 0.0
    %4555 = vmatpush.msra.mxu0 0.0
    %4556 = vmatpush.msra.mxu0 %v4536
    %4557 = vmatpush.msra.mxu0 %v4534
    %4558 = vmatmul.f32.gmra.mxu0 %v4540
    %v4559 = vpop.f32.mrf.mxu0
    %v4560 = vadd.f32 0.0, %v4559
    %4561 = vdwg.mxu0
    %4562 = vrot.lane.b32.xlu0 %v3808, 72
    %v4563 = vpop.permute.xlu0 %4562
    %4564 = vrot.lane.b32.xlu0 %v3811, 72
    %v4565 = vpop.permute.xlu0 %4564
    %v4569 = vsel %vm312, %v4532, 0
    %4571 = vmatpush.msra.mxu0 0.0
    %4572 = vmatpush.msra.mxu0 0.0
    %4573 = vmatpush.msra.mxu0 0.0
    %4574 = vmatpush.msra.mxu0 0.0
    %4575 = vmatpush.msra.mxu0 0.0
    %4576 = vmatpush.msra.mxu0 0.0
    %4577 = vmatpush.msra.mxu0 0.0
    %4578 = vmatpush.msra.mxu0 0.0
    %4579 = vmatpush.msra.mxu0 0.0
    %4580 = vmatpush.msra.mxu0 0.0
    %4581 = vmatpush.msra.mxu0 0.0
    %4582 = vmatpush.msra.mxu0 0.0
    %4583 = vmatpush.msra.mxu0 0.0
    %4584 = vmatpush.msra.mxu0 0.0
    %4585 = vmatpush.msra.mxu0 %v4565
    %4586 = vmatpush.msra.mxu0 %v4563
    %4587 = vmatmul.f32.gmra.mxu0 %v4569
    %v4588 = vpop.f32.mrf.mxu0
    %v4589 = vadd.f32 0.0, %v4588
    %4590 = vdwg.mxu0
    %v4592 = vsel %vm1006, %v4560, 0
    %v4595 = vsel %vm1006, %v4589, 0
    %4597 = vmatpush.msra.mxu0 0.0
    %4598 = vmatpush.msra.mxu0 0.0
    %4599 = vmatpush.msra.mxu0 0.0
    %4600 = vmatpush.msra.mxu0 0.0
    %4601 = vmatpush.msra.mxu0 0.0
    %4602 = vmatpush.msra.mxu0 0.0
    %4603 = vmatpush.msra.mxu0 0.0
    %4604 = vmatpush.msra.mxu0 0.0
    %4605 = vmatpush.msra.mxu0 0.0
    %4606 = vmatpush.msra.mxu0 0.0
    %4607 = vmatpush.msra.mxu0 0.0
    %4608 = vmatpush.msra.mxu0 0.0
    %4609 = vmatpush.msra.mxu0 0.0
    %4610 = vmatpush.msra.mxu0 0.0
    %4611 = vmatpush.msra.mxu0 0.0
    %4612 = vmatpush.msra.mxu0 %v3817
    %4613 = vmatmul.f32.gmra.mxu0 %v4592
    %v4614 = vpop.f32.mrf.mxu0
    %v4615 = vadd.f32 0.0, %v4614
    %4616 = vmatmul.f32.gmra.mxu0 %v4595
    %v4617 = vpop.f32.mrf.mxu0
    %v4618 = vadd.f32 0.0, %v4617
    %4619 = vdwg.mxu0
    %v4620 = vadd.f32 %v4417, %v4615
    %v4621 = vadd.f32 %v4418, %v4618
    %v4623 = vperm.slane %v3819, 0
    %v4625 = vadd.f32 %v4620, %v4623
    %v4626 = vadd.f32 %v4621, %v4623
    %v4627 = vadd.f32 %v4625, %v3743
    %v4628 = vadd.f32 %v4626, %v3744
    %v4629 = vsel %vm960, %v4627, 0.0
    %4630 = vadd.xlane.f32.xlu0 %v4629
    %v4631 = vpop.xlane.xlu0 %4630
    %v4632 = vsel %vm960, %v4628, 0.0
    %4633 = vadd.xlane.f32.xlu0 %v4632
    %v4634 = vpop.xlane.xlu0 %4633
    %v4635 = vmul.f32 %v4631, %v1773
    %v4636 = vmul.f32 %v4634, %v1773
    %v4637 = vsub.f32 %v4627, %v4635
    %v4638 = vsub.f32 %v4628, %v4636
    %v4639 = vmul.f32 %v4637, %v4637
    %v4640 = vmul.f32 %v4638, %v4638
    %v4641 = vsel %vm960, %v4639, 0.0
    %4642 = vadd.xlane.f32.xlu0 %v4641
    %v4643 = vpop.xlane.xlu0 %4642
    %v4644 = vsel %vm960, %v4640, 0.0
    %4645 = vadd.xlane.f32.xlu0 %v4644
    %v4646 = vpop.xlane.xlu0 %4645
    %v4647 = vmul.f32 %v4643, %v1773
    %v4648 = vmul.f32 %v4646, %v1773
    %v4649 = vadd.f32 %v4647, 1e-05
    %v4650 = vadd.f32 %v4648, 1e-05
    %v4651 = vrsqrt.pop %v4649
    %v4652 = vmul.f32 %v4651, %v4649
    %v4653 = vmul.f32 %v4652, %v4651
    %v4654 = vmul.f32 0.5, %v4653
    %v4655 = vsub.f32 1.5, %v4654
    %v4656 = vmul.f32 %v4651, %v4655
    %vm4657 = vweird.f32 %v4649
    %vm4658 = vweird.f32 %v4651
    %vm4659 = vmor %vm4657, %vm4658
    %v4660 = vsel %vm4659, %v4651, %v4656
    %v4661 = vrsqrt.pop %v4650
    %v4662 = vmul.f32 %v4661, %v4650
    %v4663 = vmul.f32 %v4662, %v4661
    %v4664 = vmul.f32 0.5, %v4663
    %v4665 = vsub.f32 1.5, %v4664
    %v4666 = vmul.f32 %v4661, %v4665
    %vm4667 = vweird.f32 %v4650
    %vm4668 = vweird.f32 %v4661
    %vm4669 = vmor %vm4667, %vm4668
    %v4670 = vsel %vm4669, %v4661, %v4666
    %v4671 = vmul.f32 %v4637, %v4660
    %v4672 = vmul.f32 %v4638, %v4670
    %v4673 = vperm.slane %v2894, 1
    %v4674 = vmul.f32 %v4671, %v4673
    %v4675 = vmul.f32 %v4672, %v4673
    %v4676 = vperm.slane %v2896, 1
    %v4677 = vadd.f32 %v4674, %v4676
    %v4678 = vadd.f32 %v4675, %v4676
    %s4679 = scalar_lea.vmem %s14, 32
    %v4680 = vld [vmem:[%s4679] sm:$0xff]
    %v4681 = vld [vmem:[%s4679 + $0x8] sm:$0xff]
    %v4682 = vld [vmem:[%s4679 + $0x10] sm:$0xff]
    %v4683 = vld [vmem:[%s4679 + $0x18] sm:$0xff]
    %s4684 = scalar_lea.vmem %s15, 1
    %v4685 = vld [vmem:[%s4684] sm:$0x1]
    %v4687 = vperm.slane %v4685, 0
    %v4690 = vsel %vm960, %v4677, 0
    %v4693 = vsel %vm960, %v4678, 0
    %4695 = vmatpush.msra.mxu0 0.0
    %4696 = vmatpush.msra.mxu0 0.0
    %4697 = vmatpush.msra.mxu0 0.0
    %4698 = vmatpush.msra.mxu0 0.0
    %4699 = vmatpush.msra.mxu0 0.0
    %4700 = vmatpush.msra.mxu0 0.0
    %4701 = vmatpush.msra.mxu0 0.0
    %4702 = vmatpush.msra.mxu0 0.0
    %4703 = vmatpush.msra.mxu0 0.0
    %4704 = vmatpush.msra.mxu0 0.0
    %4705 = vmatpush.msra.mxu0 0.0
    %4706 = vmatpush.msra.mxu0 0.0
    %4707 = vmatpush.msra.mxu0 %v4683
    %4708 = vmatpush.msra.mxu0 %v4682
    %4709 = vmatpush.msra.mxu0 %v4681
    %4710 = vmatpush.msra.mxu0 %v4680
    %4711 = vmatmul.f32.gmra.mxu0 %v4690
    %v4712 = vpop.f32.mrf.mxu0
    %v4713 = vadd.f32 %v4687, %v4712
    %4714 = vmatmul.f32.gmra.mxu0 %v4693
    %v4715 = vpop.f32.mrf.mxu0
    %v4716 = vadd.f32 %v4687, %v4715
    %4717 = vdwg.mxu0
    %v4718 = vmax.f32 %v4713, 0.0
    %v4719 = vmax.f32 %v4716, 0.0
    %s4720 = scalar_lea.vmem %s16, 64
    %v4721 = vld [vmem:[%s4720] sm:$0xff]
    %v4722 = vld [vmem:[%s4720 + $0x8] sm:$0xff]
    %v4723 = vld [vmem:[%s4720 + $0x10] sm:$0xff]
    %v4724 = vld [vmem:[%s4720 + $0x18] sm:$0xff]
    %v4725 = vld [vmem:[%s4720 + $0x20] sm:$0xff]
    %v4726 = vld [vmem:[%s4720 + $0x28] sm:$0xff]
    %v4727 = vld [vmem:[%s4720 + $0x30] sm:$0xff]
    %v4728 = vld [vmem:[%s4720 + $0x38] sm:$0xff]
    %s4729 = scalar_lea.vmem %s17, 1
    %v4730 = vld [vmem:[%s4729] sm:$0x1]
    %v4732 = vperm.slane %v4730, 0
    %v4735 = vsel %vm2811, %v4718, 0
    %v4738 = vsel %vm2811, %v4719, 0
    %4740 = vmatpush.msra.mxu0 0.0
    %4741 = vmatpush.msra.mxu0 0.0
    %4742 = vmatpush.msra.mxu0 0.0
    %4743 = vmatpush.msra.mxu0 0.0
    %4744 = vmatpush.msra.mxu0 0.0
    %4745 = vmatpush.msra.mxu0 0.0
    %4746 = vmatpush.msra.mxu0 0.0
    %4747 = vmatpush.msra.mxu0 0.0
    %4748 = vmatpush.msra.mxu0 %v4728
    %4749 = vmatpush.msra.mxu0 %v4727
    %4750 = vmatpush.msra.mxu0 %v4726
    %4751 = vmatpush.msra.mxu0 %v4725
    %4752 = vmatpush.msra.mxu0 %v4724
    %4753 = vmatpush.msra.mxu0 %v4723
    %4754 = vmatpush.msra.mxu0 %v4722
    %4755 = vmatpush.msra.mxu0 %v4721
    %4756 = vmatmul.f32.gmra.mxu0 %v4735
    %v4757 = vpop.f32.mrf.mxu0
    %v4758 = vadd.f32 %v4732, %v4757
    %4759 = vmatmul.f32.gmra.mxu0 %v4738
    %v4760 = vpop.f32.mrf.mxu0
    %v4761 = vadd.f32 %v4732, %v4760
    %4762 = vdwg.mxu0
    %v4763 = vadd.f32 %v4758, %v4677
    %v4764 = vadd.f32 %v4761, %v4678
    %v4765 = vsel %vm960, %v4763, 0.0
    %4766 = vadd.xlane.f32.xlu0 %v4765
    %v4767 = vpop.xlane.xlu0 %4766
    %v4768 = vsel %vm960, %v4764, 0.0
    %4769 = vadd.xlane.f32.xlu0 %v4768
    %v4770 = vpop.xlane.xlu0 %4769
    %v4771 = vmul.f32 %v4767, %v1773
    %v4772 = vmul.f32 %v4770, %v1773
    %v4773 = vsub.f32 %v4763, %v4771
    %v4774 = vsub.f32 %v4764, %v4772
    %v4775 = vmul.f32 %v4773, %v4773
    %v4776 = vmul.f32 %v4774, %v4774
    %v4777 = vsel %vm960, %v4775, 0.0
    %4778 = vadd.xlane.f32.xlu0 %v4777
    %v4779 = vpop.xlane.xlu0 %4778
    %v4780 = vsel %vm960, %v4776, 0.0
    %4781 = vadd.xlane.f32.xlu0 %v4780
    %v4782 = vpop.xlane.xlu0 %4781
    %v4783 = vmul.f32 %v4779, %v1773
    %v4784 = vmul.f32 %v4782, %v1773
    %v4785 = vadd.f32 %v4783, 1e-05
    %v4786 = vadd.f32 %v4784, 1e-05
    %v4787 = vrsqrt.pop %v4785
    %v4788 = vmul.f32 %v4787, %v4785
    %v4789 = vmul.f32 %v4788, %v4787
    %v4790 = vmul.f32 0.5, %v4789
    %v4791 = vsub.f32 1.5, %v4790
    %v4792 = vmul.f32 %v4787, %v4791
    %vm4793 = vweird.f32 %v4785
    %vm4794 = vweird.f32 %v4787
    %vm4795 = vmor %vm4793, %vm4794
    %v4796 = vsel %vm4795, %v4787, %v4792
    %v4797 = vrsqrt.pop %v4786
    %v4798 = vmul.f32 %v4797, %v4786
    %v4799 = vmul.f32 %v4798, %v4797
    %v4800 = vmul.f32 0.5, %v4799
    %v4801 = vsub.f32 1.5, %v4800
    %v4802 = vmul.f32 %v4797, %v4801
    %vm4803 = vweird.f32 %v4786
    %vm4804 = vweird.f32 %v4797
    %vm4805 = vmor %vm4803, %vm4804
    %v4806 = vsel %vm4805, %v4797, %v4802
    %v4807 = vmul.f32 %v4773, %v4796
    %v4808 = vmul.f32 %v4774, %v4806
    %v4809 = vperm.slane %v2894, 2
    %v4810 = vmul.f32 %v4807, %v4809
    %v4811 = vmul.f32 %v4808, %v4809
    %v4812 = vperm.slane %v2896, 2
    %v4813 = vadd.f32 %v4810, %v4812
    %v4814 = vadd.f32 %v4811, %v4812
    %v4815 = vmul.f32 %v4813, %v965
    %v4816 = vmul.f32 %v4814, %v965
    %v4817 = vsel %vm960, %v4815, 0.0
    %4818 = vadd.xlane.f32.xlu0 %v4817
    %v4819 = vpop.xlane.xlu0 %4818
    %v4820 = vsel %vm960, %v4816, 0.0
    %4821 = vadd.xlane.f32.xlu0 %v4820
    %v4822 = vpop.xlane.xlu0 %4821
    %v4825 = vlaneseq
    %v4826 = vand.u32 %v4825, 127
    %v4827 = vperm.slane %v4819, %v4826
    %v4828 = vperm.slane %v4822, %v4826
    %vm4829 = vcmask 1041409
    %v4830 = vsel %vm4829, %v4828, %v4827
    %vm4832 = vcmask 58368
    %4833 = vst.msk [vmem:[#allocation4] sm:$0x3] %vm4832, %v4830
    // Predicated region
    $region82: #{lamp_forward.1} parent=1 // pred_check
      _
    $region83: #{lamp_forward.1} parent=1 // pred_check_branch
      %4835 = sbr.rel (0) target = $region85
    $region84: #{lamp_forward.1} parent=1 // pred_region
      %4837 = vsyncadd [#allocation3], 0
      %s4838 = sshll.u32 [#allocation2], 4
      %s4839 = int_to_ptr.vmem [resolvable:$true] %s4838
      %s4840 = sshll.u32 %s20, 4
      %s4841 = int_to_ptr.hbm [resolvable:$true] %s4840
      %4846 = dma.vmem_to_hbm [thread:$0]  %s4839, 512, %s4841, [#allocation3], 128, 128, 8
    $region85: #{lamp_forward.1} parent=1 // pred_fallthru
      _
    // Predicated region
    $region86: #{lamp_forward.1} parent=1 // pred_check
      _
    $region87: #{lamp_forward.1} parent=1 // pred_check_branch
      %4848 = sbr.rel (0) target = $region89
    $region88: #{lamp_forward.1} parent=1 // pred_region
      %4850 = vsyncadd [#allocation5], 0
      %s4852 = sshll.u32 [#allocation4], 4
      %s4853 = int_to_ptr.vmem [resolvable:$true] %s4852
      %s4854 = sshll.u32 %s21, 4
      %s4855 = int_to_ptr.hbm [resolvable:$true] %s4854
      %4857 = dma.vmem_to_hbm [thread:$0]  %s4853, 32, %s4855, [#allocation5]
    $region89: #{lamp_forward.1} parent=1 // pred_fallthru
      _
    // Predicated region
    $region90: #{lamp_forward.1} parent=1 // pred_check
      _
    $region91: #{lamp_forward.1} parent=1 // pred_check_branch
      %4859 = sbr.rel (0) target = $region93
    $region92: #{lamp_forward.1} parent=1 // pred_region
      %4861 = dma.done [#allocation3], 512
    $region93: #{lamp_forward.1} parent=1 // pred_fallthru
      _
    // Predicated region
    $region94: #{lamp_forward.1} parent=1 // pred_check
      _
    $region95: #{lamp_forward.1} parent=1 // pred_check_branch
      %4863 = sbr.rel (0) target = $region97
    $region96: #{lamp_forward.1} parent=1 // pred_region
      %4865 = dma.done [#allocation5], 32
    $region97: #{lamp_forward.1} parent=1 // pred_fallthru
      _
    %4866 = vsyncpa [#allocation3], 1
    %4867 = vsyncpa [#allocation5], 1

</llo_original>
